<compile_context>
chip_gen: v7x
topology: tpu7x:2x2x1
jax: 0.10.0
libtpu: 0.0.40
codegen_flags: <defaults>
</compile_context>

<pallas_src>
import jax
import jax.numpy as jnp
from jax.experimental import pallas as pl
from jax.experimental.pallas import tpu as pltpu


def _up_fused_kernel(x1_ref, x2_ref, w1_ref, b1_ref, w2_ref, b2_ref, o_ref,
                     xpad_ref, ypad_ref):
    """Fused concat + pad + (conv3x3 -> BN -> LeakyReLU) x 2 for one batch elem.

    x1_ref  : (1, C1, H*W)     bf16  upsampled deep features (NCHW, lane-dense)
    x2_ref  : (1, C2, H*W)     bf16  skip connection (NCHW, lane-dense)
    w1_ref  : (9*Cin, Cmid)    bf16  layer-1 weights, taps flattened, BN folded
    b1_ref  : (1, Cmid)        f32   layer-1 folded bias
    w2_ref  : (9*Cmid, Co8)    bf16  layer-2 weights, out chans padded to 8k
    b2_ref  : (1, Co8)         f32
    o_ref   : (1, Cout, H*W)   f32   lane-dense, NCHW-contiguous output
    xpad_ref: (H+2, W+2, Cin)  bf16  scratch (padded concatenated input)
    ypad_ref: (H+2, W+2, Cmid) bf16  scratch (padded layer-1 output)
    """
    H = xpad_ref.shape[0] - 2
    W = xpad_ref.shape[1] - 2
    Cin = xpad_ref.shape[-1]
    Cmid = ypad_ref.shape[-1]
    Cout = o_ref.shape[1]

    # ---- zero only the 1-px halo (the interior is fully overwritten below).
    # NOTE: the halo must never be written by any other path; keep this
    # invariant if spatial tiling is added later.
    def zero_halo(ref, c):
        row = jnp.zeros((1, W + 2, c), ref.dtype)
        col = jnp.zeros((H, 1, c), ref.dtype)
        ref[0:1, :, :] = row
        ref[H + 1:H + 2, :, :] = row
        ref[1:H + 1, 0:1, :] = col
        ref[1:H + 1, W + 1:W + 2, :] = col

    zero_halo(xpad_ref, Cin)
    zero_halo(ypad_ref, Cmid)

    # ---- fused glue: torch.cat along channels + 1px zero padding (VMEM only).
    # Inputs arrive lane-dense (C, H*W); the small on-chip transposes replace
    # the former XLA NCHW->NHWC HBM round trips.
    x1t = x1_ref[0].astype(jnp.float32).T                  # (H*W, C1)
    x2t = x2_ref[0].astype(jnp.float32).T                  # (H*W, C2)
    xcat = jnp.concatenate([x1t, x2t], axis=-1)            # (H*W, Cin)
    xpad_ref[1:H + 1, 1:W + 1, :] = (
        xcat.reshape(H, W, Cin).astype(xpad_ref.dtype))

    def conv3x3_bn_lrelu(src_ref, cin, w_ref, b_ref):
        # im2col: fold the 3x3 taps into the contraction axis -> ONE MXU
        # matmul with K = 9*cin.  Load each dy row-band once and derive the
        # three dx windows from it (3 ref loads instead of 9).
        taps = []
        for dy in range(3):
            band = src_ref[dy:dy + H, :, :]                # (H, W+2, cin) bf16
            for dx in range(3):
                taps.append(band[:, dx:dx + W, :])         # (H, W, cin)
        cols = jnp.concatenate(taps, axis=-1)              # (H, W, 9*cin)
        cols = cols.reshape(H * W, 9 * cin)                # W % 8 == 0 -> cheap
        acc = jnp.dot(cols, w_ref[...],
                      preferred_element_type=jnp.float32)  # (H*W, cout) f32
        y = acc + b_ref[0, :]                              # BN scale folded in w
        return jnp.where(y > 0, y, 0.2 * y)                # LeakyReLU(0.2)

    # ---- layer 1: intermediate never leaves VMEM (stored bf16). -------------
    y1 = conv3x3_bn_lrelu(xpad_ref, Cin, w1_ref, b1_ref)   # (H*W, Cmid) f32
    ypad_ref[1:H + 1, 1:W + 1, :] = (
        y1.reshape(H, W, Cmid).astype(ypad_ref.dtype))

    # ---- layer 2: only Co8 (not 128) output lanes computed / transposed. ----
    y2 = conv3x3_bn_lrelu(ypad_ref, Cmid, w2_ref, b2_ref)  # (H*W, Co8) f32
    # Small (H*W, Co8) -> (Co8, H*W) transpose; the store is lane-dense and
    # NCHW-contiguous so the wrapper reshape is free.
    o_ref[0] = y2.T[0:Cout, :].astype(o_ref.dtype)


def _fold_bn(conv_bias, gamma, beta, rmean, rvar, eps=1e-5):
    scale = gamma / jnp.sqrt(rvar + eps)
    bias = beta + (conv_bias - rmean) * scale
    return scale.reshape(1, -1), bias.reshape(1, -1)


def _pack_conv(w, scale, lane_pad=None):
    """Fold BN scale into HWIO conv weights and flatten the 3x3 taps into the
    contraction dim: (3,3,Cin,Cout) -> (9*Cin, Cout[->lane_pad]) in bf16."""
    kh, kw, cin, cout = w.shape
    wf = w * scale.reshape(1, 1, 1, cout)
    wf = wf.reshape(kh * kw * cin, cout).astype(jnp.bfloat16)
    if lane_pad is not None and lane_pad > cout:
        wf = jnp.pad(wf, ((0, 0), (0, lane_pad - cout)))
    return wf


def _up_fused_call(x1u, x2, w1p, b1, w2p, b2, cout, H, W):
    N, C1, S = x1u.shape
    C2 = x2.shape[1]
    Cin = C1 + C2
    Cmid = w1p.shape[-1]
    Co8 = w2p.shape[-1]
    assert S == H * W

    return pl.pallas_call(
        _up_fused_kernel,
        out_shape=jax.ShapeDtypeStruct((N, cout, S), jnp.float32),
        grid_spec=pltpu.PrefetchScalarGridSpec(
            num_scalar_prefetch=0,
            # TODO(synk): add a spatial (halo-overlap) row-band grid axis for
            # large resolutions so v7x's 64 MiB VMEM is respected and both of
            # its TensorCores get work even at batch 1-2 (size bands ~16 MiB
            # on v7x, ~2x larger on v6e/v5e).
            grid=(N,),
            in_specs=[
                pl.BlockSpec((1, C1, S), lambda n: (n, 0, 0)),
                pl.BlockSpec((1, C2, S), lambda n: (n, 0, 0)),
                # Constant index_map -> weights/biases are DMA'd only once.
                # TODO(synk): at production channel counts mark these with
                # pipeline_mode=pl.Buffered(1) to drop the double-buffer copy.
                pl.BlockSpec((9 * Cin, Cmid), lambda n: (0, 0)),
                pl.BlockSpec((1, Cmid), lambda n: (0, 0)),
                pl.BlockSpec((9 * Cmid, Co8), lambda n: (0, 0)),
                pl.BlockSpec((1, Co8), lambda n: (0, 0)),
            ],
            out_specs=pl.BlockSpec((1, cout, S), lambda n: (n, 0, 0)),
            scratch_shapes=[
                pltpu.VMEM((H + 2, W + 2, Cin), jnp.bfloat16),
                pltpu.VMEM((H + 2, W + 2, Cmid), jnp.bfloat16),
            ],
        ),
        compiler_params=pltpu.CompilerParams(
            dimension_semantics=("parallel",),
            vmem_limit_bytes=32 * 1024 * 1024,
        ),
    )(x1u, x2, w1p, b1, w2p, b2)


def up_forward(x1_nchw, x2_nchw, params, use_cat=True):
    """Equivalent of up.forward(x1, x2): nearest 2x upsample, channel concat,
    (conv3x3 + BatchNorm(inference) + LeakyReLU(0.2)) x 2.  NCHW in / out."""
    N, C1, h, w = x1_nchw.shape
    H, W = 2 * h, 2 * w

    # Nearest 2x upsample of the low-res map, kept in NCHW/bf16 so no XLA
    # transposes are needed anywhere (kernel I/O is lane-dense (N, C, H*W)).
    # TODO(synk): fold the nearest-2x replication into the kernel's xpad write
    # to drop this last HBM materialization of glue.
    x1u = x1_nchw.astype(jnp.bfloat16)
    x1u = jnp.repeat(jnp.repeat(x1u, 2, axis=2), 2, axis=3).reshape(N, C1, H * W)

    w1 = params["w1"]
    if use_cat:
        x2 = x2_nchw.astype(jnp.bfloat16).reshape(N, -1, H * W)
    else:
        # Reuse the same fused kernel with dummy zero channels (numerically
        # identical to skipping the concat).
        cdummy = 8
        x2 = jnp.zeros((N, cdummy, H * W), jnp.bfloat16)
        w1 = jnp.concatenate(
            [w1, jnp.zeros((3, 3, cdummy, w1.shape[-1]), w1.dtype)], axis=2)

    cout = params["w2"].shape[-1]
    co8 = max(8, -(-cout // 8) * 8)          # sublane-rounded output channels

    w1p = _pack_conv(w1, params["s1"])
    w2p = _pack_conv(params["w2"], params["s2"], lane_pad=co8)
    b1 = params["b1"].astype(jnp.float32)
    b2 = jnp.pad(params["b2"].astype(jnp.float32), ((0, 0), (0, co8 - cout)))

    out = _up_fused_call(x1u, x2, w1p, b1, w2p, b2, cout, H, W)
    # (N, Cout, H*W) is already NCHW-contiguous: the reshape is free.
    return out.reshape(N, cout, H, W)


def init_params(key, in_ch, out_ch):
    ks = jax.random.split(key, 12)

    def conv_w(k, cin, cout):
        fan_in = cin * 9
        return jax.random.uniform(k, (3, 3, cin, cout), jnp.float32,
                                  -1.0, 1.0) / jnp.sqrt(float(fan_in))

    def bn(k0, k1, k2, k3, c):
        gamma = 1.0 + 0.1 * jax.random.normal(k0, (c,), jnp.float32)
        beta = 0.1 * jax.random.normal(k1, (c,), jnp.float32)
        rmean = 0.1 * jax.random.normal(k2, (c,), jnp.float32)
        rvar = jnp.abs(1.0 + 0.1 * jax.random.normal(k3, (c,), jnp.float32))
        return gamma, beta, rmean, rvar

    w1 = conv_w(ks[0], in_ch, out_ch)
    cb1 = 0.1 * jax.random.normal(ks[1], (out_ch,), jnp.float32)
    s1, b1 = _fold_bn(cb1, *bn(ks[2], ks[3], ks[4], ks[5], out_ch))

    w2 = conv_w(ks[6], out_ch, out_ch)
    cb2 = 0.1 * jax.random.normal(ks[7], (out_ch,), jnp.float32)
    s2, b2 = _fold_bn(cb2, *bn(ks[8], ks[9], ks[10], ks[11], out_ch))

    return dict(w1=w1, s1=s1, b1=b1, w2=w2, s2=s2, b2=b2)


# ---- pure-JAX reference (mirrors the kernel's bf16 MXU inputs) --------------
def up_forward_ref(x1_nchw, x2_nchw, params):
    x1 = jnp.transpose(x1_nchw, (0, 2, 3, 1))
    x2 = jnp.transpose(x2_nchw, (0, 2, 3, 1))
    x1 = jnp.repeat(jnp.repeat(x1, 2, axis=1), 2, axis=2)
    x = jnp.concatenate([x1, x2], axis=-1).astype(jnp.bfloat16)

    def layer(x, w, s, b):
        wf = (w * s.reshape(1, 1, 1, -1)).astype(jnp.bfloat16)
        y = jax.lax.conv_general_dilated(
            x, wf, (1, 1), ((1, 1), (1, 1)),
            dimension_numbers=("NHWC", "HWIO", "NHWC"),
            preferred_element_type=jnp.float32)
        y = y + b[0]
        return jnp.where(y > 0, y, 0.2 * y)

    y = layer(x, params["w1"], params["s1"], params["b1"])
    y = layer(y.astype(jnp.bfloat16), params["w2"], params["s2"], params["b2"])
    return jnp.transpose(y, (0, 3, 1, 2))


if __name__ == "__main__":
    key = jax.random.PRNGKey(0)
    k1, k2, kp = jax.random.split(key, 3)

    # x1: deeper feature map (N, C1, H/2, W/2); x2: skip connection (N, C2, H, W)
    N, C1, C2, H, W = 2, 8, 8, 16, 16
    in_ch, out_ch = C1 + C2, 8

    x1 = jax.random.normal(k1, (N, C1, H // 2, W // 2), jnp.float32)
    x2 = jax.random.normal(k2, (N, C2, H, W), jnp.float32)
    params = init_params(kp, in_ch, out_ch)

    out = jax.block_until_ready(up_forward(x1, x2, params, use_cat=True))
    assert out.shape == (N, out_ch, H, W), out.shape

    ref = jax.block_until_ready(up_forward_ref(x1, x2, params))
    assert jnp.allclose(out, ref, rtol=2e-2, atol=2e-2), (
        float(jnp.max(jnp.abs(out - ref))))

    print("KERNEL_OK")
</pallas_src>

<mosaic_0001>
module attributes {stable_mosaic.version = 11 : i64} {
  func.func @_up_fused_kernel(%arg0: i32, %arg1: memref<1x8x256xbf16, #tpu.memory_space<vmem>>, %arg2: memref<1x8x256xbf16, #tpu.memory_space<vmem>>, %arg3: memref<144x8xbf16, #tpu.memory_space<vmem>>, %arg4: memref<1x8xf32, #tpu.memory_space<vmem>>, %arg5: memref<72x8xbf16, #tpu.memory_space<vmem>>, %arg6: memref<1x8xf32, #tpu.memory_space<vmem>>, %arg7: memref<1x8x256xf32, #tpu.memory_space<vmem>>, %arg8: memref<18x18x16xbf16, #tpu.memory_space<vmem>>, %arg9: memref<18x18x8xbf16, #tpu.memory_space<vmem>>) attributes {dimension_semantics = [#tpu.dimension_semantics<parallel>], iteration_bounds = array<i64: 2>, scalar_prefetch = 0 : i64, scratch_operands = 2 : i64, tpu.core_type = #tpu.core_type<tc>, window_params = [{transform_indices = @transform_0, window_bounds = array<i64: 1, 8, 256>}, {transform_indices = @transform_1, window_bounds = array<i64: 1, 8, 256>}, {pipeline_mode = #tpu.pipeline_mode<synchronous>, transform_indices = @transform_2, window_bounds = array<i64: 144, 8>}, {pipeline_mode = #tpu.pipeline_mode<synchronous>, transform_indices = @transform_3, window_bounds = array<i64: 1, 8>}, {pipeline_mode = #tpu.pipeline_mode<synchronous>, transform_indices = @transform_4, window_bounds = array<i64: 72, 8>}, {pipeline_mode = #tpu.pipeline_mode<synchronous>, transform_indices = @transform_5, window_bounds = array<i64: 1, 8>}, {transform_indices = @transform_6, window_bounds = array<i64: 1, 8, 256>}]} {
    %cst = arith.constant 0.000000e+00 : bf16
    %0 = vector.broadcast %cst : bf16 to vector<1x18x16xbf16>
    %cst_0 = arith.constant 0.000000e+00 : bf16
    %1 = vector.broadcast %cst_0 : bf16 to vector<16x1x16xbf16>
    %c0 = arith.constant 0 : index
    %c0_1 = arith.constant 0 : index
    %c0_2 = arith.constant 0 : index
    %2 = vector.load %arg8[%c0, %c0_1, %c0_2] : memref<18x18x16xbf16, #tpu.memory_space<vmem>>, vector<1x18x16xbf16>
    tpu.vector_store %arg8[%c0, %c0_1, %c0_2], %0 {strides = array<i32>} : memref<18x18x16xbf16, #tpu.memory_space<vmem>>, vector<1x18x16xbf16>,
    %c17 = arith.constant 17 : index
    %c0_3 = arith.constant 0 : index
    %c0_4 = arith.constant 0 : index
    %3 = vector.load %arg8[%c17, %c0_3, %c0_4] : memref<18x18x16xbf16, #tpu.memory_space<vmem>>, vector<1x18x16xbf16>
    tpu.vector_store %arg8[%c17, %c0_3, %c0_4], %0 {strides = array<i32>} : memref<18x18x16xbf16, #tpu.memory_space<vmem>>, vector<1x18x16xbf16>,
    %c1 = arith.constant 1 : index
    %c0_5 = arith.constant 0 : index
    %c0_6 = arith.constant 0 : index
    %4 = vector.load %arg8[%c1, %c0_5, %c0_6] : memref<18x18x16xbf16, #tpu.memory_space<vmem>>, vector<16x1x16xbf16>
    tpu.vector_store %arg8[%c1, %c0_5, %c0_6], %1 {strides = array<i32>} : memref<18x18x16xbf16, #tpu.memory_space<vmem>>, vector<16x1x16xbf16>,
    %c1_7 = arith.constant 1 : index
    %c17_8 = arith.constant 17 : index
    %c0_9 = arith.constant 0 : index
    %5 = vector.load %arg8[%c1_7, %c17_8, %c0_9] : memref<18x18x16xbf16, #tpu.memory_space<vmem>>, vector<16x1x16xbf16>
    tpu.vector_store %arg8[%c1_7, %c17_8, %c0_9], %1 {strides = array<i32>} : memref<18x18x16xbf16, #tpu.memory_space<vmem>>, vector<16x1x16xbf16>,
    %cst_10 = arith.constant 0.000000e+00 : bf16
    %6 = vector.broadcast %cst_10 : bf16 to vector<1x18x8xbf16>
    %cst_11 = arith.constant 0.000000e+00 : bf16
    %7 = vector.broadcast %cst_11 : bf16 to vector<16x1x8xbf16>
    %c0_12 = arith.constant 0 : index
    %c0_13 = arith.constant 0 : index
    %c0_14 = arith.constant 0 : index
    %8 = vector.load %arg9[%c0_12, %c0_13, %c0_14] : memref<18x18x8xbf16, #tpu.memory_space<vmem>>, vector<1x18x8xbf16>
    tpu.vector_store %arg9[%c0_12, %c0_13, %c0_14], %6 {strides = array<i32>} : memref<18x18x8xbf16, #tpu.memory_space<vmem>>, vector<1x18x8xbf16>,
    %c17_15 = arith.constant 17 : index
    %c0_16 = arith.constant 0 : index
    %c0_17 = arith.constant 0 : index
    %9 = vector.load %arg9[%c17_15, %c0_16, %c0_17] : memref<18x18x8xbf16, #tpu.memory_space<vmem>>, vector<1x18x8xbf16>
    tpu.vector_store %arg9[%c17_15, %c0_16, %c0_17], %6 {strides = array<i32>} : memref<18x18x8xbf16, #tpu.memory_space<vmem>>, vector<1x18x8xbf16>,
    %c1_18 = arith.constant 1 : index
    %c0_19 = arith.constant 0 : index
    %c0_20 = arith.constant 0 : index
    %10 = vector.load %arg9[%c1_18, %c0_19, %c0_20] : memref<18x18x8xbf16, #tpu.memory_space<vmem>>, vector<16x1x8xbf16>
    tpu.vector_store %arg9[%c1_18, %c0_19, %c0_20], %7 {strides = array<i32>} : memref<18x18x8xbf16, #tpu.memory_space<vmem>>, vector<16x1x8xbf16>,
    %c1_21 = arith.constant 1 : index
    %c17_22 = arith.constant 17 : index
    %c0_23 = arith.constant 0 : index
    %11 = vector.load %arg9[%c1_21, %c17_22, %c0_23] : memref<18x18x8xbf16, #tpu.memory_space<vmem>>, vector<16x1x8xbf16>
    tpu.vector_store %arg9[%c1_21, %c17_22, %c0_23], %7 {strides = array<i32>} : memref<18x18x8xbf16, #tpu.memory_space<vmem>>, vector<16x1x8xbf16>,
    %c0_24 = arith.constant 0 : index
    %c0_25 = arith.constant 0 : index
    %c0_26 = arith.constant 0 : index
    %12 = vector.load %arg1[%c0_24, %c0_25, %c0_26] : memref<1x8x256xbf16, #tpu.memory_space<vmem>>, vector<1x8x256xbf16>
    %13 = vector.shape_cast %12 : vector<1x8x256xbf16> to vector<8x256xbf16>
    %14 = arith.extf %13 : vector<8x256xbf16> to vector<8x256xf32>
    %15 = tpu.transpose %14, [1, 0] : vector<8x256xf32> -> vector<256x8xf32>
    %c0_27 = arith.constant 0 : index
    %c0_28 = arith.constant 0 : index
    %c0_29 = arith.constant 0 : index
    %16 = vector.load %arg2[%c0_27, %c0_28, %c0_29] : memref<1x8x256xbf16, #tpu.memory_space<vmem>>, vector<1x8x256xbf16>
    %17 = vector.shape_cast %16 : vector<1x8x256xbf16> to vector<8x256xbf16>
    %18 = arith.extf %17 : vector<8x256xbf16> to vector<8x256xf32>
    %19 = tpu.transpose %18, [1, 0] : vector<8x256xf32> -> vector<256x8xf32>
    %20 = tpu.concatenate %15, %19 in 1 : vector<256x8xf32>, vector<256x8xf32> -> vector<256x16xf32>
    %21 = vector.shape_cast %20 : vector<256x16xf32> to vector<16x16x16xf32>
    %22 = arith.truncf %21 : vector<16x16x16xf32> to vector<16x16x16xbf16>
    %c1_30 = arith.constant 1 : index
    %c1_31 = arith.constant 1 : index
    %c0_32 = arith.constant 0 : index
    %23 = vector.load %arg8[%c1_30, %c1_31, %c0_32] : memref<18x18x16xbf16, #tpu.memory_space<vmem>>, vector<16x16x16xbf16>
    tpu.vector_store %arg8[%c1_30, %c1_31, %c0_32], %22 {strides = array<i32>} : memref<18x18x16xbf16, #tpu.memory_space<vmem>>, vector<16x16x16xbf16>,
    %c0_33 = arith.constant 0 : index
    %c0_34 = arith.constant 0 : index
    %c0_35 = arith.constant 0 : index
    %24 = vector.load %arg8[%c0_33, %c0_34, %c0_35] : memref<18x18x16xbf16, #tpu.memory_space<vmem>>, vector<16x18x16xbf16>
    %25 = vector.extract_strided_slice %24 {offsets = [0, 0, 0], sizes = [16, 16, 16], strides = [1, 1, 1]} : vector<16x18x16xbf16> to vector<16x16x16xbf16>
    %26 = vector.extract_strided_slice %24 {offsets = [0, 1, 0], sizes = [16, 16, 16], strides = [1, 1, 1]} : vector<16x18x16xbf16> to vector<16x16x16xbf16>
    %27 = vector.extract_strided_slice %24 {offsets = [0, 2, 0], sizes = [16, 16, 16], strides = [1, 1, 1]} : vector<16x18x16xbf16> to vector<16x16x16xbf16>
    %c1_36 = arith.constant 1 : index
    %c0_37 = arith.constant 0 : index
    %c0_38 = arith.constant 0 : index
    %28 = vector.load %arg8[%c1_36, %c0_37, %c0_38] : memref<18x18x16xbf16, #tpu.memory_space<vmem>>, vector<16x18x16xbf16>
    %29 = vector.extract_strided_slice %28 {offsets = [0, 0, 0], sizes = [16, 16, 16], strides = [1, 1, 1]} : vector<16x18x16xbf16> to vector<16x16x16xbf16>
    %30 = vector.extract_strided_slice %28 {offsets = [0, 1, 0], sizes = [16, 16, 16], strides = [1, 1, 1]} : vector<16x18x16xbf16> to vector<16x16x16xbf16>
    %31 = vector.extract_strided_slice %28 {offsets = [0, 2, 0], sizes = [16, 16, 16], strides = [1, 1, 1]} : vector<16x18x16xbf16> to vector<16x16x16xbf16>
    %c2 = arith.constant 2 : index
    %c0_39 = arith.constant 0 : index
    %c0_40 = arith.constant 0 : index
    %32 = vector.load %arg8[%c2, %c0_39, %c0_40] : memref<18x18x16xbf16, #tpu.memory_space<vmem>>, vector<16x18x16xbf16>
    %33 = vector.extract_strided_slice %32 {offsets = [0, 0, 0], sizes = [16, 16, 16], strides = [1, 1, 1]} : vector<16x18x16xbf16> to vector<16x16x16xbf16>
    %34 = vector.extract_strided_slice %32 {offsets = [0, 1, 0], sizes = [16, 16, 16], strides = [1, 1, 1]} : vector<16x18x16xbf16> to vector<16x16x16xbf16>
    %35 = vector.extract_strided_slice %32 {offsets = [0, 2, 0], sizes = [16, 16, 16], strides = [1, 1, 1]} : vector<16x18x16xbf16> to vector<16x16x16xbf16>
    %36 = tpu.concatenate %25, %26, %27, %29, %30, %31, %33, %34, %35 in 2 : vector<16x16x16xbf16>, vector<16x16x16xbf16>, vector<16x16x16xbf16>, vector<16x16x16xbf16>, vector<16x16x16xbf16>, vector<16x16x16xbf16>, vector<16x16x16xbf16>, vector<16x16x16xbf16>, vector<16x16x16xbf16> -> vector<16x16x144xbf16>
    %37 = vector.shape_cast %36 : vector<16x16x144xbf16> to vector<256x144xbf16>
    %c0_41 = arith.constant 0 : index
    %c0_42 = arith.constant 0 : index
    %38 = vector.load %arg3[%c0_41, %c0_42] : memref<144x8xbf16, #tpu.memory_space<vmem>>, vector<144x8xbf16>
    %cst_43 = arith.constant dense<0.000000e+00> : vector<256x8xf32>
    %39 = tpu.matmul %37, %38, %cst_43 {dimension_numbers = #tpu.dot_dimension_numbers<[1], [0], [0], [1], [0, 0, 1, 1], [], []>} : vector<256x144xbf16>, vector<144x8xbf16>, vector<256x8xf32> -> vector<256x8xf32>
    %c0_44 = arith.constant 0 : index
    %c0_45 = arith.constant 0 : index
    %40 = vector.load %arg4[%c0_44, %c0_45] : memref<1x8xf32, #tpu.memory_space<vmem>>, vector<1x8xf32>
    %41 = vector.shape_cast %40 : vector<1x8xf32> to vector<8xf32>
    %42 = vector.shape_cast %41 : vector<8xf32> to vector<1x8xf32>
    %43 = vector.broadcast %42 : vector<1x8xf32> to vector<256x8xf32>
    %44 = arith.addf %39, %43 : vector<256x8xf32>
    %cst_46 = arith.constant 0.000000e+00 : f32
    %45 = vector.broadcast %cst_46 : f32 to vector<256x8xf32>
    %46 = arith.cmpf ogt, %44, %45 : vector<256x8xf32>
    %cst_47 = arith.constant 2.000000e-01 : f32
    %47 = vector.broadcast %cst_47 : f32 to vector<256x8xf32>
    %48 = arith.mulf %47, %44 : vector<256x8xf32>
    %49 = arith.select %46, %44, %48 : vector<256x8xi1>, vector<256x8xf32>
    %50 = vector.shape_cast %49 : vector<256x8xf32> to vector<16x16x8xf32>
    %51 = arith.truncf %50 : vector<16x16x8xf32> to vector<16x16x8xbf16>
    %c1_48 = arith.constant 1 : index
    %c1_49 = arith.constant 1 : index
    %c0_50 = arith.constant 0 : index
    %52 = vector.load %arg9[%c1_48, %c1_49, %c0_50] : memref<18x18x8xbf16, #tpu.memory_space<vmem>>, vector<16x16x8xbf16>
    tpu.vector_store %arg9[%c1_48, %c1_49, %c0_50], %51 {strides = array<i32>} : memref<18x18x8xbf16, #tpu.memory_space<vmem>>, vector<16x16x8xbf16>,
    %c0_51 = arith.constant 0 : index
    %c0_52 = arith.constant 0 : index
    %c0_53 = arith.constant 0 : index
    %53 = vector.load %arg9[%c0_51, %c0_52, %c0_53] : memref<18x18x8xbf16, #tpu.memory_space<vmem>>, vector<16x18x8xbf16>
    %54 = vector.extract_strided_slice %53 {offsets = [0, 0, 0], sizes = [16, 16, 8], strides = [1, 1, 1]} : vector<16x18x8xbf16> to vector<16x16x8xbf16>
    %55 = vector.extract_strided_slice %53 {offsets = [0, 1, 0], sizes = [16, 16, 8], strides = [1, 1, 1]} : vector<16x18x8xbf16> to vector<16x16x8xbf16>
    %56 = vector.extract_strided_slice %53 {offsets = [0, 2, 0], sizes = [16, 16, 8], strides = [1, 1, 1]} : vector<16x18x8xbf16> to vector<16x16x8xbf16>
    %c1_54 = arith.constant 1 : index
    %c0_55 = arith.constant 0 : index
    %c0_56 = arith.constant 0 : index
    %57 = vector.load %arg9[%c1_54, %c0_55, %c0_56] : memref<18x18x8xbf16, #tpu.memory_space<vmem>>, vector<16x18x8xbf16>
    %58 = vector.extract_strided_slice %57 {offsets = [0, 0, 0], sizes = [16, 16, 8], strides = [1, 1, 1]} : vector<16x18x8xbf16> to vector<16x16x8xbf16>
    %59 = vector.extract_strided_slice %57 {offsets = [0, 1, 0], sizes = [16, 16, 8], strides = [1, 1, 1]} : vector<16x18x8xbf16> to vector<16x16x8xbf16>
    %60 = vector.extract_strided_slice %57 {offsets = [0, 2, 0], sizes = [16, 16, 8], strides = [1, 1, 1]} : vector<16x18x8xbf16> to vector<16x16x8xbf16>
    %c2_57 = arith.constant 2 : index
    %c0_58 = arith.constant 0 : index
    %c0_59 = arith.constant 0 : index
    %61 = vector.load %arg9[%c2_57, %c0_58, %c0_59] : memref<18x18x8xbf16, #tpu.memory_space<vmem>>, vector<16x18x8xbf16>
    %62 = vector.extract_strided_slice %61 {offsets = [0, 0, 0], sizes = [16, 16, 8], strides = [1, 1, 1]} : vector<16x18x8xbf16> to vector<16x16x8xbf16>
    %63 = vector.extract_strided_slice %61 {offsets = [0, 1, 0], sizes = [16, 16, 8], strides = [1, 1, 1]} : vector<16x18x8xbf16> to vector<16x16x8xbf16>
    %64 = vector.extract_strided_slice %61 {offsets = [0, 2, 0], sizes = [16, 16, 8], strides = [1, 1, 1]} : vector<16x18x8xbf16> to vector<16x16x8xbf16>
    %65 = tpu.concatenate %54, %55, %56, %58, %59, %60, %62, %63, %64 in 2 : vector<16x16x8xbf16>, vector<16x16x8xbf16>, vector<16x16x8xbf16>, vector<16x16x8xbf16>, vector<16x16x8xbf16>, vector<16x16x8xbf16>, vector<16x16x8xbf16>, vector<16x16x8xbf16>, vector<16x16x8xbf16> -> vector<16x16x72xbf16>
    %66 = vector.shape_cast %65 : vector<16x16x72xbf16> to vector<256x72xbf16>
    %c0_60 = arith.constant 0 : index
    %c0_61 = arith.constant 0 : index
    %67 = vector.load %arg5[%c0_60, %c0_61] : memref<72x8xbf16, #tpu.memory_space<vmem>>, vector<72x8xbf16>
    %cst_62 = arith.constant dense<0.000000e+00> : vector<256x8xf32>
    %68 = tpu.matmul %66, %67, %cst_62 {dimension_numbers = #tpu.dot_dimension_numbers<[1], [0], [0], [1], [0, 0, 1, 1], [], []>} : vector<256x72xbf16>, vector<72x8xbf16>, vector<256x8xf32> -> vector<256x8xf32>
    %c0_63 = arith.constant 0 : index
    %c0_64 = arith.constant 0 : index
    %69 = vector.load %arg6[%c0_63, %c0_64] : memref<1x8xf32, #tpu.memory_space<vmem>>, vector<1x8xf32>
    %70 = vector.shape_cast %69 : vector<1x8xf32> to vector<8xf32>
    %71 = vector.shape_cast %70 : vector<8xf32> to vector<1x8xf32>
    %72 = vector.broadcast %71 : vector<1x8xf32> to vector<256x8xf32>
    %73 = arith.addf %68, %72 : vector<256x8xf32>
    %cst_65 = arith.constant 0.000000e+00 : f32
    %74 = vector.broadcast %cst_65 : f32 to vector<256x8xf32>
    %75 = arith.cmpf ogt, %73, %74 : vector<256x8xf32>
    %cst_66 = arith.constant 2.000000e-01 : f32
    %76 = vector.broadcast %cst_66 : f32 to vector<256x8xf32>
    %77 = arith.mulf %76, %73 : vector<256x8xf32>
    %78 = arith.select %75, %73, %77 : vector<256x8xi1>, vector<256x8xf32>
    %79 = tpu.transpose %78, [1, 0] : vector<256x8xf32> -> vector<8x256xf32>
    %c0_67 = arith.constant 0 : index
    %c0_68 = arith.constant 0 : index
    %c0_69 = arith.constant 0 : index
    %80 = vector.load %arg7[%c0_67, %c0_68, %c0_69] : memref<1x8x256xf32, #tpu.memory_space<vmem>>, vector<1x8x256xf32>
    %81 = vector.shape_cast %80 : vector<1x8x256xf32> to vector<8x256xf32>
    %82 = vector.shape_cast %79 : vector<8x256xf32> to vector<1x8x256xf32>
    tpu.vector_store %arg7[%c0_67, %c0_68, %c0_69], %82 {strides = array<i32>} : memref<1x8x256xf32, #tpu.memory_space<vmem>>, vector<1x8x256xf32>,
    return
  }
  func.func @transform_0(%arg0: i32) -> (i32, i32, i32) {
    %c0_i32 = arith.constant 0 : i32
    %c0_i32_0 = arith.constant 0 : i32
    %c0_i32_1 = arith.constant 0 : i32
    return %arg0, %c0_i32, %c0_i32_0 : i32, i32, i32
  }
  func.func @transform_1(%arg0: i32) -> (i32, i32, i32) {
    %c0_i32 = arith.constant 0 : i32
    %c0_i32_0 = arith.constant 0 : i32
    %c0_i32_1 = arith.constant 0 : i32
    return %arg0, %c0_i32, %c0_i32_0 : i32, i32, i32
  }
  func.func @transform_2(%arg0: i32) -> (i32, i32) {
    %c0_i32 = arith.constant 0 : i32
    %c0_i32_0 = arith.constant 0 : i32
    %c0_i32_1 = arith.constant 0 : i32
    return %c0_i32, %c0_i32_0 : i32, i32
  }
  func.func @transform_3(%arg0: i32) -> (i32, i32) {
    %c0_i32 = arith.constant 0 : i32
    %c0_i32_0 = arith.constant 0 : i32
    %c0_i32_1 = arith.constant 0 : i32
    return %c0_i32, %c0_i32_0 : i32, i32
  }
  func.func @transform_4(%arg0: i32) -> (i32, i32) {
    %c0_i32 = arith.constant 0 : i32
    %c0_i32_0 = arith.constant 0 : i32
    %c0_i32_1 = arith.constant 0 : i32
    return %c0_i32, %c0_i32_0 : i32, i32
  }
  func.func @transform_5(%arg0: i32) -> (i32, i32) {
    %c0_i32 = arith.constant 0 : i32
    %c0_i32_0 = arith.constant 0 : i32
    %c0_i32_1 = arith.constant 0 : i32
    return %c0_i32, %c0_i32_0 : i32, i32
  }
  func.func @transform_6(%arg0: i32) -> (i32, i32, i32) {
    %c0_i32 = arith.constant 0 : i32
    %c0_i32_0 = arith.constant 0 : i32
    %c0_i32_1 = arith.constant 0 : i32
    return %arg0, %c0_i32, %c0_i32_0 : i32, i32, i32
  }
}

</mosaic_0001>

<llo_original>
// kernel: tpu_custom_call.1
$region0: #{tpu_custom_call.1}
  #allocation0 [shape = 'u32[]', space=smem, size = 0x4, offset = 0x4, fixed_abs, tag = 'smem constant byte address 0x4 - core index']
  #allocation1 [shape = 'u32[144,128]{1,0:T(1,128)}', space=vmem, size = 0x12000, scoped, tag = 'internal scratch']
  #allocation2 [shape = 'bf16[18,18,16]{2,1,0:T(8,128)(2,1)}', space=vmem, size = 0x1b000, scoped, tag = 'scratch operand']
  #allocation3 [shape = 'bf16[18,18,8]{2,1,0:T(8,128)(2,1)}', space=vmem, size = 0x1b000, scoped, tag = 'scratch operand']
  %s0 = inlined_call_operand.vmem [shape: bf16[2,8,256], index: 0, kind: input, shape index: {}]
  %s1 = inlined_call_operand.vmem [shape: bf16[2,8,256], index: 1, kind: input, shape index: {}]
  %s2 = inlined_call_operand.vmem [shape: bf16[144,8], index: 2, kind: input, shape index: {}]
  %s3 = inlined_call_operand.vmem [shape: f32[1,8], index: 3, kind: input, shape index: {}]
  %s4 = inlined_call_operand.vmem [shape: bf16[72,8], index: 4, kind: input, shape index: {}]
  %s5 = inlined_call_operand.vmem [shape: f32[1,8], index: 5, kind: input, shape index: {}]
  %s6 = inlined_call_operand.hbm [shape: f32[2,8,256], index: 6, kind: output, shape index: {}]
  %s7 = sld [smem:[#allocation0]]
  $region57: #{tpu_custom_call.1} parent=0
    _
  %s9 = ssub.s32 1, %s7
  %s10 = scalar_select 0, %s9, %s7
  $region1: #{tpu_custom_call.1} parent=0
    #allocation4 [shape = 'u8[16384]{0}', space=vmem, size = 0x4000, scoped, tag = 'output window, operand 0']
    #allocation5 [shape = 's32[2]{0}', space=sflag, size = 0x8, scoped, tag = 'scoped memory for tpu_custom_call.1']
    %11 = vsyncpa [#allocation5], 0
    %s12 = scalar_lea.sflag [#allocation5], 1
    %13 = vsyncpa %s12, 0
    loop: start=0, step=1, limit=4
    $region2: #{tpu_custom_call.1} parent=1 // loop_pre_header
      _
    $region3: #{tpu_custom_call.1} parent=1 // loop_header
      %s15 = sphi 0, %s19
      %p16 = scmp.ge.s32.totalorder %s15, 4
      %s25 = sphi 0, %s27
      %s28 = sphi 0, %s25
      %s29 = sphi 0, %s28
      %s45 = sphi 0, %s29
      %s51 = sphi 0, %s53
      %s54 = sphi 0, %s51
      %s55 = sphi 0, %s54
      %s71 = sphi 0, %s55
      %s75 = sphi 0, %s75
      %s77 = sphi 0, %s75
      %s78 = sphi 0, %s77
      %s92 = sphi 0, %s78
      %s96 = sphi 0, %s96
      %s98 = sphi 0, %s96
      %s99 = sphi 0, %s98
      %s113 = sphi 0, %s99
      %s117 = sphi 0, %s117
      %s119 = sphi 0, %s117
      %s120 = sphi 0, %s119
      %s134 = sphi 0, %s120
      %s138 = sphi 0, %s138
      %s140 = sphi 0, %s138
      %s141 = sphi 0, %s140
      %s155 = sphi 0, %s141
      %s161 = sphi 0, %s163
      %s164 = sphi 0, %s161
      %s165 = sphi 0, %s164
      %s181 = sphi 0, %s165
    $region4: #{tpu_custom_call.1} parent=1 // loop_header_branch
      %18 = sbr.rel (%p16) target = $region8
    $region5: #{tpu_custom_call.1} parent=1 // loop_body
      %s20 = ssub.s32 %s15, 1
      %s21 = ssub.s32 %s15, 2
      %s22 = sadd.s32 %s15, 1
      %s23 = ssub.s32 %s15, %s22
      %p24 = scmp.eq.s32.totalorder %s23, 0
      %s26 = sadd.s32 %s25, 1
      %s27 = scalar_select %p24, %s25, %s26
      %p30 = pneg %p24
      %p31 = scmp.eq.s32.totalorder %s15, 1
      %p32 = por %p30, %p31
      %p33 = scmp.ne.s32.totalorder %s25, %s28
      %p34 = scmp.eq.s32.totalorder %s15, 0
      %p35 = por %p33, %p34
      %p36 = scmp.ne.s32.totalorder %s25, %s28
      %p37 = scmp.eq.s32.totalorder %s20, 1
      %p38 = por %p36, %p37
      %p39 = scmp.ne.s32.totalorder %s28, %s29
      %p40 = scmp.eq.s32.totalorder %s20, 0
      %p41 = por %p39, %p40
      %p42 = scmp.ne.s32.totalorder %s28, %s29
      %p43 = scmp.eq.s32.totalorder %s21, 1
      %p44 = por %p42, %p43
      %p46 = scmp.ne.s32.totalorder %s29, %s45
      %p47 = scmp.eq.s32.totalorder %s21, 0
      %p48 = por %p46, %p47
      %s49 = ssub.s32 %s15, %s22
      %p50 = scmp.eq.s32.totalorder %s49, 0
      %s52 = sadd.s32 %s51, 1
      %s53 = scalar_select %p50, %s51, %s52
      %p56 = pneg %p50
      %p57 = scmp.eq.s32.totalorder %s15, 1
      %p58 = por %p56, %p57
      %p59 = scmp.ne.s32.totalorder %s51, %s54
      %p60 = scmp.eq.s32.totalorder %s15, 0
      %p61 = por %p59, %p60
      %p62 = scmp.ne.s32.totalorder %s51, %s54
      %p63 = scmp.eq.s32.totalorder %s20, 1
      %p64 = por %p62, %p63
      %p65 = scmp.ne.s32.totalorder %s54, %s55
      %p66 = scmp.eq.s32.totalorder %s20, 0
      %p67 = por %p65, %p66
      %p68 = scmp.ne.s32.totalorder %s54, %s55
      %p69 = scmp.eq.s32.totalorder %s21, 1
      %p70 = por %p68, %p69
      %p72 = scmp.ne.s32.totalorder %s55, %s71
      %p73 = scmp.eq.s32.totalorder %s21, 0
      %p74 = por %p72, %p73
      %s76 = sadd.s32 %s75, 1
      %p79 = scmp.eq.s32.totalorder %s15, 1
      %p80 = scmp.ne.s32.totalorder %s75, %s77
      %p81 = scmp.eq.s32.totalorder %s15, 0
      %p82 = por %p80, %p81
      %p83 = scmp.ne.s32.totalorder %s75, %s77
      %p84 = scmp.eq.s32.totalorder %s20, 1
      %p85 = por %p83, %p84
      %p86 = scmp.ne.s32.totalorder %s77, %s78
      %p87 = scmp.eq.s32.totalorder %s20, 0
      %p88 = por %p86, %p87
      %p89 = scmp.ne.s32.totalorder %s77, %s78
      %p90 = scmp.eq.s32.totalorder %s21, 1
      %p91 = por %p89, %p90
      %p93 = scmp.ne.s32.totalorder %s78, %s92
      %p94 = scmp.eq.s32.totalorder %s21, 0
      %p95 = por %p93, %p94
      %s97 = sadd.s32 %s96, 1
      %p100 = scmp.eq.s32.totalorder %s15, 1
      %p101 = scmp.ne.s32.totalorder %s96, %s98
      %p102 = scmp.eq.s32.totalorder %s15, 0
      %p103 = por %p101, %p102
      %p104 = scmp.ne.s32.totalorder %s96, %s98
      %p105 = scmp.eq.s32.totalorder %s20, 1
      %p106 = por %p104, %p105
      %p107 = scmp.ne.s32.totalorder %s98, %s99
      %p108 = scmp.eq.s32.totalorder %s20, 0
      %p109 = por %p107, %p108
      %p110 = scmp.ne.s32.totalorder %s98, %s99
      %p111 = scmp.eq.s32.totalorder %s21, 1
      %p112 = por %p110, %p111
      %p114 = scmp.ne.s32.totalorder %s99, %s113
      %p115 = scmp.eq.s32.totalorder %s21, 0
      %p116 = por %p114, %p115
      %s118 = sadd.s32 %s117, 1
      %p121 = scmp.eq.s32.totalorder %s15, 1
      %p122 = scmp.ne.s32.totalorder %s117, %s119
      %p123 = scmp.eq.s32.totalorder %s15, 0
      %p124 = por %p122, %p123
      %p125 = scmp.ne.s32.totalorder %s117, %s119
      %p126 = scmp.eq.s32.totalorder %s20, 1
      %p127 = por %p125, %p126
      %p128 = scmp.ne.s32.totalorder %s119, %s120
      %p129 = scmp.eq.s32.totalorder %s20, 0
      %p130 = por %p128, %p129
      %p131 = scmp.ne.s32.totalorder %s119, %s120
      %p132 = scmp.eq.s32.totalorder %s21, 1
      %p133 = por %p131, %p132
      %p135 = scmp.ne.s32.totalorder %s120, %s134
      %p136 = scmp.eq.s32.totalorder %s21, 0
      %p137 = por %p135, %p136
      %s139 = sadd.s32 %s138, 1
      %p142 = scmp.eq.s32.totalorder %s15, 1
      %p143 = scmp.ne.s32.totalorder %s138, %s140
      %p144 = scmp.eq.s32.totalorder %s15, 0
      %p145 = por %p143, %p144
      %p146 = scmp.ne.s32.totalorder %s138, %s140
      %p147 = scmp.eq.s32.totalorder %s20, 1
      %p148 = por %p146, %p147
      %p149 = scmp.ne.s32.totalorder %s140, %s141
      %p150 = scmp.eq.s32.totalorder %s20, 0
      %p151 = por %p149, %p150
      %p152 = scmp.ne.s32.totalorder %s140, %s141
      %p153 = scmp.eq.s32.totalorder %s21, 1
      %p154 = por %p152, %p153
      %p156 = scmp.ne.s32.totalorder %s141, %s155
      %p157 = scmp.eq.s32.totalorder %s21, 0
      %p158 = por %p156, %p157
      %s159 = ssub.s32 %s15, %s22
      %p160 = scmp.eq.s32.totalorder %s159, 0
      %s162 = sadd.s32 %s161, 1
      %s163 = scalar_select %p160, %s161, %s162
      %p166 = pneg %p160
      %p167 = scmp.eq.s32.totalorder %s15, 1
      %p168 = por %p166, %p167
      %p169 = scmp.ne.s32.totalorder %s161, %s164
      %p170 = scmp.eq.s32.totalorder %s15, 0
      %p171 = por %p169, %p170
      %p172 = scmp.ne.s32.totalorder %s161, %s164
      %p173 = scmp.eq.s32.totalorder %s20, 1
      %p174 = por %p172, %p173
      %p175 = scmp.ne.s32.totalorder %s164, %s165
      %p176 = scmp.eq.s32.totalorder %s20, 0
      %p177 = por %p175, %p176
      %p178 = scmp.ne.s32.totalorder %s164, %s165
      %p179 = scmp.eq.s32.totalorder %s21, 1
      %p180 = por %p178, %p179
      %p182 = scmp.ne.s32.totalorder %s165, %s181
      %p183 = scmp.eq.s32.totalorder %s21, 0
      %p184 = por %p182, %p183
      %p185 = scmp.le.s32.totalorder 1, %s15
      %p186 = scmp.lt.s32.totalorder %s15, 3
      %p187 = pnand %p185, %p186
      %p188 = pneg %p187
      // Predicated region
      $region9: #{tpu_custom_call.1} parent=5 // pred_check
        _
      $region10: #{tpu_custom_call.1} parent=5 // pred_check_branch
        %190 = sbr.rel (%p187) target = $region12
      $region11: #{tpu_custom_call.1} parent=5 // pred_region
        %s191 = ssub.s32 %s15, 1
        // Predicated region
        $region13: #{tpu_custom_call.1} parent=11 // pred_check
          %p192 = pneg %p88
        $region14: #{tpu_custom_call.1} parent=11 // pred_check_branch
          %194 = sbr.rel (%p192) target = $region16
        $region15: #{tpu_custom_call.1} parent=11 // pred_region
          _
        $region16: #{tpu_custom_call.1} parent=11 // pred_fallthru
          _
        // Predicated region
        $region17: #{tpu_custom_call.1} parent=11 // pred_check
          %p195 = pneg %p109
        $region18: #{tpu_custom_call.1} parent=11 // pred_check_branch
          %197 = sbr.rel (%p195) target = $region20
        $region19: #{tpu_custom_call.1} parent=11 // pred_region
          _
        $region20: #{tpu_custom_call.1} parent=11 // pred_fallthru
          _
        // Predicated region
        $region21: #{tpu_custom_call.1} parent=11 // pred_check
          %p198 = pneg %p130
        $region22: #{tpu_custom_call.1} parent=11 // pred_check_branch
          %200 = sbr.rel (%p198) target = $region24
        $region23: #{tpu_custom_call.1} parent=11 // pred_region
          _
        $region24: #{tpu_custom_call.1} parent=11 // pred_fallthru
          _
        // Predicated region
        $region25: #{tpu_custom_call.1} parent=11 // pred_check
          %p201 = pneg %p151
        $region26: #{tpu_custom_call.1} parent=11 // pred_check_branch
          %203 = sbr.rel (%p201) target = $region28
        $region27: #{tpu_custom_call.1} parent=11 // pred_region
          _
        $region28: #{tpu_custom_call.1} parent=11 // pred_fallthru
          _
      $region12: #{tpu_custom_call.1} parent=5 // pred_fallthru
        _
      %p204 = scmp.lt.s32.totalorder %s15, 2
      // Predicated region
      $region29: #{tpu_custom_call.1} parent=5 // pred_check
        %p205 = pneg %p204
      $region30: #{tpu_custom_call.1} parent=5 // pred_check_branch
        %207 = sbr.rel (%p205) target = $region32
      $region31: #{tpu_custom_call.1} parent=5 // pred_region
        // Predicated region
        $region33: #{tpu_custom_call.1} parent=31 // pred_check
          %p208 = pneg %p35
        $region34: #{tpu_custom_call.1} parent=31 // pred_check_branch
          %210 = sbr.rel (%p208) target = $region36
        $region35: #{tpu_custom_call.1} parent=31 // pred_region
          %p211 = scmp.lt.s32.totalorder %s15, 1
          %s212 = scalar_select %p211, %s15, 1
          %s213 = smul.addr %s212, 2
          %s214 = smul.addr %s213, 4
          %s215 = scalar_lea.vmem %s0, %s214
        $region36: #{tpu_custom_call.1} parent=31 // pred_fallthru
          _
        // Predicated region
        $region37: #{tpu_custom_call.1} parent=31 // pred_check
          %p216 = pneg %p61
        $region38: #{tpu_custom_call.1} parent=31 // pred_check_branch
          %218 = sbr.rel (%p216) target = $region40
        $region39: #{tpu_custom_call.1} parent=31 // pred_region
          %p219 = scmp.lt.s32.totalorder %s15, 1
          %s220 = scalar_select %p219, %s15, 1
          %s221 = smul.addr %s220, 2
          %s222 = smul.addr %s221, 4
          %s223 = scalar_lea.vmem %s1, %s222
        $region40: #{tpu_custom_call.1} parent=31 // pred_fallthru
          _
      $region32: #{tpu_custom_call.1} parent=5 // pred_fallthru
        _
      %p224 = scmp.le.s32.totalorder 1, %s15
      %p225 = scmp.lt.s32.totalorder %s15, 3
      %p226 = pnand %p224, %p225
      %p227 = pneg %p226
      // Predicated region
      $region41: #{tpu_custom_call.1} parent=5 // pred_check
        _
      $region42: #{tpu_custom_call.1} parent=5 // pred_check_branch
        %229 = sbr.rel (%p226) target = $region44
      $region43: #{tpu_custom_call.1} parent=5 // pred_region
        %s230 = ssub.s32 %s15, 1
        %p231 = scmp.lt.s32.totalorder %s20, 1
        %s232 = scalar_select %p231, %s20, 1
        %s233 = smul.addr %s232, 2
        %s234 = smul.addr %s233, 4
        %s235 = scalar_lea.vmem %s0, %s234
        %p236 = pneg %p41
        %p237 = pneg %p38
        %p238 = scmp.lt.s32.totalorder %s20, 1
        %s239 = scalar_select %p238, %s20, 1
        %s240 = smul.addr %s239, 2
        %s241 = smul.addr %s240, 4
        %s242 = scalar_lea.vmem %s1, %s241
        %p243 = pneg %p67
        %p244 = pneg %p64
        %p245 = pneg %p88
        %p246 = pneg %p85
        %p247 = pneg %p109
        %p248 = pneg %p106
        %p249 = pneg %p130
        %p250 = pneg %p127
        %p251 = pneg %p151
        %p252 = pneg %p148
        %p253 = pneg %p177
        %p254 = pneg %p174
        %s255 = sand.u32 %s164, 1
        %s256 = scalar_lea.sflag [#allocation5], %s255
        %s257 = sand.u32 %s164, 1
        %s258 = smul.addr %s257, 16
        %s259 = scalar_lea.vmem [#allocation4], %s258
        %p260 = scmp.lt.s32.totalorder %s20, 1
        %s261 = scalar_select %p260, %s20, 1
        %s262 = smul.addr %s261, 2
        %s263 = smul.addr %s262, 4
        %s264 = scalar_lea.vmem %s0, %s263
        %p265 = scmp.lt.s32.totalorder %s20, 1
        %s266 = scalar_select %p265, %s20, 1
        %s267 = smul.addr %s266, 2
        %s268 = smul.addr %s267, 4
        %s269 = scalar_lea.vmem %s1, %s268
        %vm271 = vcmask 125952
        %272 = vst.msk [vmem:[#allocation2] sm:$0xf] %vm271, 0
        %273 = vst.msk [vmem:[#allocation2 + $0x4] sm:$0xf] %vm271, 0
        %vm274 = vcmask 122880
        %275 = vst.msk [vmem:[#allocation2 + $0x8] sm:$0x1] %vm274, 0
        %s276 = scalar_lea.vmem [#allocation2], 204
        %277 = vst.msk [vmem:[%s276] sm:$0xf] %vm271, 0
        %278 = vst.msk [vmem:[%s276 + $0x4] sm:$0xf] %vm271, 0
        %279 = vst.msk [vmem:[%s276 + $0x8] sm:$0x1] %vm274, 0
        %s280 = scalar_lea.vmem [#allocation2], 12
        %vm281 = vcmask 122880
        %vm282 = vsmask.f32 256
        %vm283 = vmand %vm281, %vm282
        %v284 = vld [vmem:[%s280] sm:$0x1]
        %v285 = vsel %vm283, 0, %v284
        %286 = vst [vmem:[%s280] sm:$0x1] %v285
        %v287 = vld [vmem:[%s280 + $0xc] sm:$0x1]
        %v288 = vsel %vm283, 0, %v287
        %289 = vst [vmem:[%s280 + $0xc] sm:$0x1] %v288
        %v290 = vld [vmem:[%s280 + $0x18] sm:$0x1]
        %v291 = vsel %vm283, 0, %v290
        %292 = vst [vmem:[%s280 + $0x18] sm:$0x1] %v291
        %v293 = vld [vmem:[%s280 + $0x24] sm:$0x1]
        %v294 = vsel %vm283, 0, %v293
        %295 = vst [vmem:[%s280 + $0x24] sm:$0x1] %v294
        %v296 = vld [vmem:[%s280 + $0x30] sm:$0x1]
        %v297 = vsel %vm283, 0, %v296
        %298 = vst [vmem:[%s280 + $0x30] sm:$0x1] %v297
        %v299 = vld [vmem:[%s280 + $0x3c] sm:$0x1]
        %v300 = vsel %vm283, 0, %v299
        %301 = vst [vmem:[%s280 + $0x3c] sm:$0x1] %v300
        %v302 = vld [vmem:[%s280 + $0x48] sm:$0x1]
        %v303 = vsel %vm283, 0, %v302
        %304 = vst [vmem:[%s280 + $0x48] sm:$0x1] %v303
        %v305 = vld [vmem:[%s280 + $0x54] sm:$0x1]
        %v306 = vsel %vm283, 0, %v305
        %307 = vst [vmem:[%s280 + $0x54] sm:$0x1] %v306
        %v308 = vld [vmem:[%s280 + $0x60] sm:$0x1]
        %v309 = vsel %vm283, 0, %v308
        %310 = vst [vmem:[%s280 + $0x60] sm:$0x1] %v309
        %v311 = vld [vmem:[%s280 + $0x6c] sm:$0x1]
        %v312 = vsel %vm283, 0, %v311
        %313 = vst [vmem:[%s280 + $0x6c] sm:$0x1] %v312
        %v314 = vld [vmem:[%s280 + $0x78] sm:$0x1]
        %v315 = vsel %vm283, 0, %v314
        %316 = vst [vmem:[%s280 + $0x78] sm:$0x1] %v315
        %v317 = vld [vmem:[%s280 + $0x84] sm:$0x1]
        %v318 = vsel %vm283, 0, %v317
        %319 = vst [vmem:[%s280 + $0x84] sm:$0x1] %v318
        %v320 = vld [vmem:[%s280 + $0x90] sm:$0x1]
        %v321 = vsel %vm283, 0, %v320
        %322 = vst [vmem:[%s280 + $0x90] sm:$0x1] %v321
        %v323 = vld [vmem:[%s280 + $0x9c] sm:$0x1]
        %v324 = vsel %vm283, 0, %v323
        %325 = vst [vmem:[%s280 + $0x9c] sm:$0x1] %v324
        %v326 = vld [vmem:[%s280 + $0xa8] sm:$0x1]
        %v327 = vsel %vm283, 0, %v326
        %328 = vst [vmem:[%s280 + $0xa8] sm:$0x1] %v327
        %v329 = vld [vmem:[%s280 + $0xb4] sm:$0x1]
        %v330 = vsel %vm283, 0, %v329
        %331 = vst [vmem:[%s280 + $0xb4] sm:$0x1] %v330
        %vm332 = vsmask.f32 7938
        %vm333 = vmand %vm281, %vm332
        %v334 = vld [vmem:[%s280 + $0x8] sm:$0x1]
        %v335 = vsel %vm333, 0, %v334
        %336 = vst [vmem:[%s280 + $0x8] sm:$0x1] %v335
        %v337 = vld [vmem:[%s280 + $0x14] sm:$0x1]
        %v338 = vsel %vm333, 0, %v337
        %339 = vst [vmem:[%s280 + $0x14] sm:$0x1] %v338
        %v340 = vld [vmem:[%s280 + $0x20] sm:$0x1]
        %v341 = vsel %vm333, 0, %v340
        %342 = vst [vmem:[%s280 + $0x20] sm:$0x1] %v341
        %v343 = vld [vmem:[%s280 + $0x2c] sm:$0x1]
        %v344 = vsel %vm333, 0, %v343
        %345 = vst [vmem:[%s280 + $0x2c] sm:$0x1] %v344
        %v346 = vld [vmem:[%s280 + $0x38] sm:$0x1]
        %v347 = vsel %vm333, 0, %v346
        %348 = vst [vmem:[%s280 + $0x38] sm:$0x1] %v347
        %v349 = vld [vmem:[%s280 + $0x44] sm:$0x1]
        %v350 = vsel %vm333, 0, %v349
        %351 = vst [vmem:[%s280 + $0x44] sm:$0x1] %v350
        %v352 = vld [vmem:[%s280 + $0x50] sm:$0x1]
        %v353 = vsel %vm333, 0, %v352
        %354 = vst [vmem:[%s280 + $0x50] sm:$0x1] %v353
        %v355 = vld [vmem:[%s280 + $0x5c] sm:$0x1]
        %v356 = vsel %vm333, 0, %v355
        %357 = vst [vmem:[%s280 + $0x5c] sm:$0x1] %v356
        %v358 = vld [vmem:[%s280 + $0x68] sm:$0x1]
        %v359 = vsel %vm333, 0, %v358
        %360 = vst [vmem:[%s280 + $0x68] sm:$0x1] %v359
        %v361 = vld [vmem:[%s280 + $0x74] sm:$0x1]
        %v362 = vsel %vm333, 0, %v361
        %363 = vst [vmem:[%s280 + $0x74] sm:$0x1] %v362
        %v364 = vld [vmem:[%s280 + $0x80] sm:$0x1]
        %v365 = vsel %vm333, 0, %v364
        %366 = vst [vmem:[%s280 + $0x80] sm:$0x1] %v365
        %v367 = vld [vmem:[%s280 + $0x8c] sm:$0x1]
        %v368 = vsel %vm333, 0, %v367
        %369 = vst [vmem:[%s280 + $0x8c] sm:$0x1] %v368
        %v370 = vld [vmem:[%s280 + $0x98] sm:$0x1]
        %v371 = vsel %vm333, 0, %v370
        %372 = vst [vmem:[%s280 + $0x98] sm:$0x1] %v371
        %v373 = vld [vmem:[%s280 + $0xa4] sm:$0x1]
        %v374 = vsel %vm333, 0, %v373
        %375 = vst [vmem:[%s280 + $0xa4] sm:$0x1] %v374
        %v376 = vld [vmem:[%s280 + $0xb0] sm:$0x1]
        %v377 = vsel %vm333, 0, %v376
        %378 = vst [vmem:[%s280 + $0xb0] sm:$0x1] %v377
        %v379 = vld [vmem:[%s280 + $0xbc] sm:$0x1]
        %v380 = vsel %vm333, 0, %v379
        %381 = vst [vmem:[%s280 + $0xbc] sm:$0x1] %v380
        %vm382 = vcmask 60416
        %383 = vst.msk [vmem:[#allocation3] sm:$0xf] %vm382, 0
        %384 = vst.msk [vmem:[#allocation3 + $0x4] sm:$0xf] %vm382, 0
        %vm385 = vcmask 57344
        %386 = vst.msk [vmem:[#allocation3 + $0x8] sm:$0x1] %vm385, 0
        %s387 = scalar_lea.vmem [#allocation3], 204
        %388 = vst.msk [vmem:[%s387] sm:$0xf] %vm382, 0
        %389 = vst.msk [vmem:[%s387 + $0x4] sm:$0xf] %vm382, 0
        %390 = vst.msk [vmem:[%s387 + $0x8] sm:$0x1] %vm385, 0
        %s391 = scalar_lea.vmem [#allocation3], 12
        %vm392 = vcmask 57344
        %vm393 = vmand %vm392, %vm282
        %v394 = vld [vmem:[%s391] sm:$0x1]
        %v395 = vsel %vm393, 0, %v394
        %396 = vst [vmem:[%s391] sm:$0x1] %v395
        %v397 = vld [vmem:[%s391 + $0xc] sm:$0x1]
        %v398 = vsel %vm393, 0, %v397
        %399 = vst [vmem:[%s391 + $0xc] sm:$0x1] %v398
        %v400 = vld [vmem:[%s391 + $0x18] sm:$0x1]
        %v401 = vsel %vm393, 0, %v400
        %402 = vst [vmem:[%s391 + $0x18] sm:$0x1] %v401
        %v403 = vld [vmem:[%s391 + $0x24] sm:$0x1]
        %v404 = vsel %vm393, 0, %v403
        %405 = vst [vmem:[%s391 + $0x24] sm:$0x1] %v404
        %v406 = vld [vmem:[%s391 + $0x30] sm:$0x1]
        %v407 = vsel %vm393, 0, %v406
        %408 = vst [vmem:[%s391 + $0x30] sm:$0x1] %v407
        %v409 = vld [vmem:[%s391 + $0x3c] sm:$0x1]
        %v410 = vsel %vm393, 0, %v409
        %411 = vst [vmem:[%s391 + $0x3c] sm:$0x1] %v410
        %v412 = vld [vmem:[%s391 + $0x48] sm:$0x1]
        %v413 = vsel %vm393, 0, %v412
        %414 = vst [vmem:[%s391 + $0x48] sm:$0x1] %v413
        %v415 = vld [vmem:[%s391 + $0x54] sm:$0x1]
        %v416 = vsel %vm393, 0, %v415
        %417 = vst [vmem:[%s391 + $0x54] sm:$0x1] %v416
        %v418 = vld [vmem:[%s391 + $0x60] sm:$0x1]
        %v419 = vsel %vm393, 0, %v418
        %420 = vst [vmem:[%s391 + $0x60] sm:$0x1] %v419
        %v421 = vld [vmem:[%s391 + $0x6c] sm:$0x1]
        %v422 = vsel %vm393, 0, %v421
        %423 = vst [vmem:[%s391 + $0x6c] sm:$0x1] %v422
        %v424 = vld [vmem:[%s391 + $0x78] sm:$0x1]
        %v425 = vsel %vm393, 0, %v424
        %426 = vst [vmem:[%s391 + $0x78] sm:$0x1] %v425
        %v427 = vld [vmem:[%s391 + $0x84] sm:$0x1]
        %v428 = vsel %vm393, 0, %v427
        %429 = vst [vmem:[%s391 + $0x84] sm:$0x1] %v428
        %v430 = vld [vmem:[%s391 + $0x90] sm:$0x1]
        %v431 = vsel %vm393, 0, %v430
        %432 = vst [vmem:[%s391 + $0x90] sm:$0x1] %v431
        %v433 = vld [vmem:[%s391 + $0x9c] sm:$0x1]
        %v434 = vsel %vm393, 0, %v433
        %435 = vst [vmem:[%s391 + $0x9c] sm:$0x1] %v434
        %v436 = vld [vmem:[%s391 + $0xa8] sm:$0x1]
        %v437 = vsel %vm393, 0, %v436
        %438 = vst [vmem:[%s391 + $0xa8] sm:$0x1] %v437
        %v439 = vld [vmem:[%s391 + $0xb4] sm:$0x1]
        %v440 = vsel %vm393, 0, %v439
        %441 = vst [vmem:[%s391 + $0xb4] sm:$0x1] %v440
        %vm442 = vmand %vm392, %vm332
        %v443 = vld [vmem:[%s391 + $0x8] sm:$0x1]
        %v444 = vsel %vm442, 0, %v443
        %445 = vst [vmem:[%s391 + $0x8] sm:$0x1] %v444
        %v446 = vld [vmem:[%s391 + $0x14] sm:$0x1]
        %v447 = vsel %vm442, 0, %v446
        %448 = vst [vmem:[%s391 + $0x14] sm:$0x1] %v447
        %v449 = vld [vmem:[%s391 + $0x20] sm:$0x1]
        %v450 = vsel %vm442, 0, %v449
        %451 = vst [vmem:[%s391 + $0x20] sm:$0x1] %v450
        %v452 = vld [vmem:[%s391 + $0x2c] sm:$0x1]
        %v453 = vsel %vm442, 0, %v452
        %454 = vst [vmem:[%s391 + $0x2c] sm:$0x1] %v453
        %v455 = vld [vmem:[%s391 + $0x38] sm:$0x1]
        %v456 = vsel %vm442, 0, %v455
        %457 = vst [vmem:[%s391 + $0x38] sm:$0x1] %v456
        %v458 = vld [vmem:[%s391 + $0x44] sm:$0x1]
        %v459 = vsel %vm442, 0, %v458
        %460 = vst [vmem:[%s391 + $0x44] sm:$0x1] %v459
        %v461 = vld [vmem:[%s391 + $0x50] sm:$0x1]
        %v462 = vsel %vm442, 0, %v461
        %463 = vst [vmem:[%s391 + $0x50] sm:$0x1] %v462
        %v464 = vld [vmem:[%s391 + $0x5c] sm:$0x1]
        %v465 = vsel %vm442, 0, %v464
        %466 = vst [vmem:[%s391 + $0x5c] sm:$0x1] %v465
        %v467 = vld [vmem:[%s391 + $0x68] sm:$0x1]
        %v468 = vsel %vm442, 0, %v467
        %469 = vst [vmem:[%s391 + $0x68] sm:$0x1] %v468
        %v470 = vld [vmem:[%s391 + $0x74] sm:$0x1]
        %v471 = vsel %vm442, 0, %v470
        %472 = vst [vmem:[%s391 + $0x74] sm:$0x1] %v471
        %v473 = vld [vmem:[%s391 + $0x80] sm:$0x1]
        %v474 = vsel %vm442, 0, %v473
        %475 = vst [vmem:[%s391 + $0x80] sm:$0x1] %v474
        %v476 = vld [vmem:[%s391 + $0x8c] sm:$0x1]
        %v477 = vsel %vm442, 0, %v476
        %478 = vst [vmem:[%s391 + $0x8c] sm:$0x1] %v477
        %v479 = vld [vmem:[%s391 + $0x98] sm:$0x1]
        %v480 = vsel %vm442, 0, %v479
        %481 = vst [vmem:[%s391 + $0x98] sm:$0x1] %v480
        %v482 = vld [vmem:[%s391 + $0xa4] sm:$0x1]
        %v483 = vsel %vm442, 0, %v482
        %484 = vst [vmem:[%s391 + $0xa4] sm:$0x1] %v483
        %v485 = vld [vmem:[%s391 + $0xb0] sm:$0x1]
        %v486 = vsel %vm442, 0, %v485
        %487 = vst [vmem:[%s391 + $0xb0] sm:$0x1] %v486
        %v488 = vld [vmem:[%s391 + $0xbc] sm:$0x1]
        %v489 = vsel %vm442, 0, %v488
        %490 = vst [vmem:[%s391 + $0xbc] sm:$0x1] %v489
        %v491 = vld [vmem:[%s264] sm:$0xff]
        %v492 = vunpack.c.l.bf16 %v491
        %v493 = vunpack.c.h.bf16 %v491
        %494 = vxpose.xlu0.b32.start [1/16] %v492, 128
        %495 = vxpose.xlu0.b32.cont [2/16] 0.0, 128
        %496 = vxpose.xlu0.b32.cont [3/16] 0.0, 128
        %497 = vxpose.xlu0.b32.cont [4/16] 0.0, 128
        %498 = vxpose.xlu0.b32.cont [5/16] 0.0, 128
        %499 = vxpose.xlu0.b32.cont [6/16] 0.0, 128
        %500 = vxpose.xlu0.b32.cont [7/16] 0.0, 128
        %501 = vxpose.xlu0.b32.cont [8/16] 0.0, 128
        %502 = vxpose.xlu0.b32.cont [9/16] 0.0, 128
        %503 = vxpose.xlu0.b32.cont [10/16] 0.0, 128
        %504 = vxpose.xlu0.b32.cont [11/16] 0.0, 128
        %505 = vxpose.xlu0.b32.cont [12/16] 0.0, 128
        %506 = vxpose.xlu0.b32.cont [13/16] 0.0, 128
        %507 = vxpose.xlu0.b32.cont [14/16] 0.0, 128
        %508 = vxpose.xlu0.b32.cont [15/16] 0.0, 128
        %509 = vxpose.xlu0.b32.end [16/16] 0.0, 128
        %v510 = vpop.trf.xlu0
        %v511 = vpop.trf.xlu0
        %v512 = vpop.trf.xlu0
        %v513 = vpop.trf.xlu0
        %v514 = vpop.trf.xlu0
        %v515 = vpop.trf.xlu0
        %v516 = vpop.trf.xlu0
        %v517 = vpop.trf.xlu0
        %v518 = vpop.trf.xlu0
        %v519 = vpop.trf.xlu0
        %v520 = vpop.trf.xlu0
        %v521 = vpop.trf.xlu0
        %v522 = vpop.trf.xlu0
        %v523 = vpop.trf.xlu0
        %v524 = vpop.trf.xlu0
        %v525 = vpop.trf.xlu0
        %526 = vxpose.xlu0.b32.start [1/16] %v493, 128
        %527 = vxpose.xlu0.b32.cont [2/16] 0.0, 128
        %528 = vxpose.xlu0.b32.cont [3/16] 0.0, 128
        %529 = vxpose.xlu0.b32.cont [4/16] 0.0, 128
        %530 = vxpose.xlu0.b32.cont [5/16] 0.0, 128
        %531 = vxpose.xlu0.b32.cont [6/16] 0.0, 128
        %532 = vxpose.xlu0.b32.cont [7/16] 0.0, 128
        %533 = vxpose.xlu0.b32.cont [8/16] 0.0, 128
        %534 = vxpose.xlu0.b32.cont [9/16] 0.0, 128
        %535 = vxpose.xlu0.b32.cont [10/16] 0.0, 128
        %536 = vxpose.xlu0.b32.cont [11/16] 0.0, 128
        %537 = vxpose.xlu0.b32.cont [12/16] 0.0, 128
        %538 = vxpose.xlu0.b32.cont [13/16] 0.0, 128
        %539 = vxpose.xlu0.b32.cont [14/16] 0.0, 128
        %540 = vxpose.xlu0.b32.cont [15/16] 0.0, 128
        %541 = vxpose.xlu0.b32.end [16/16] 0.0, 128
        %v542 = vpop.trf.xlu0
        %v543 = vpop.trf.xlu0
        %v544 = vpop.trf.xlu0
        %v545 = vpop.trf.xlu0
        %v546 = vpop.trf.xlu0
        %v547 = vpop.trf.xlu0
        %v548 = vpop.trf.xlu0
        %v549 = vpop.trf.xlu0
        %v550 = vpop.trf.xlu0
        %v551 = vpop.trf.xlu0
        %v552 = vpop.trf.xlu0
        %v553 = vpop.trf.xlu0
        %v554 = vpop.trf.xlu0
        %v555 = vpop.trf.xlu0
        %v556 = vpop.trf.xlu0
        %v557 = vpop.trf.xlu0
        %v558 = vld [vmem:[%s269] sm:$0xff]
        %v559 = vunpack.c.l.bf16 %v558
        %v560 = vunpack.c.h.bf16 %v558
        %561 = vxpose.xlu0.b32.start [1/16] %v559, 128
        %562 = vxpose.xlu0.b32.cont [2/16] 0.0, 128
        %563 = vxpose.xlu0.b32.cont [3/16] 0.0, 128
        %564 = vxpose.xlu0.b32.cont [4/16] 0.0, 128
        %565 = vxpose.xlu0.b32.cont [5/16] 0.0, 128
        %566 = vxpose.xlu0.b32.cont [6/16] 0.0, 128
        %567 = vxpose.xlu0.b32.cont [7/16] 0.0, 128
        %568 = vxpose.xlu0.b32.cont [8/16] 0.0, 128
        %569 = vxpose.xlu0.b32.cont [9/16] 0.0, 128
        %570 = vxpose.xlu0.b32.cont [10/16] 0.0, 128
        %571 = vxpose.xlu0.b32.cont [11/16] 0.0, 128
        %572 = vxpose.xlu0.b32.cont [12/16] 0.0, 128
        %573 = vxpose.xlu0.b32.cont [13/16] 0.0, 128
        %574 = vxpose.xlu0.b32.cont [14/16] 0.0, 128
        %575 = vxpose.xlu0.b32.cont [15/16] 0.0, 128
        %576 = vxpose.xlu0.b32.end [16/16] 0.0, 128
        %v577 = vpop.trf.xlu0
        %v578 = vpop.trf.xlu0
        %v579 = vpop.trf.xlu0
        %v580 = vpop.trf.xlu0
        %v581 = vpop.trf.xlu0
        %v582 = vpop.trf.xlu0
        %v583 = vpop.trf.xlu0
        %v584 = vpop.trf.xlu0
        %v585 = vpop.trf.xlu0
        %v586 = vpop.trf.xlu0
        %v587 = vpop.trf.xlu0
        %v588 = vpop.trf.xlu0
        %v589 = vpop.trf.xlu0
        %v590 = vpop.trf.xlu0
        %v591 = vpop.trf.xlu0
        %v592 = vpop.trf.xlu0
        %593 = vxpose.xlu0.b32.start [1/16] %v560, 128
        %594 = vxpose.xlu0.b32.cont [2/16] 0.0, 128
        %595 = vxpose.xlu0.b32.cont [3/16] 0.0, 128
        %596 = vxpose.xlu0.b32.cont [4/16] 0.0, 128
        %597 = vxpose.xlu0.b32.cont [5/16] 0.0, 128
        %598 = vxpose.xlu0.b32.cont [6/16] 0.0, 128
        %599 = vxpose.xlu0.b32.cont [7/16] 0.0, 128
        %600 = vxpose.xlu0.b32.cont [8/16] 0.0, 128
        %601 = vxpose.xlu0.b32.cont [9/16] 0.0, 128
        %602 = vxpose.xlu0.b32.cont [10/16] 0.0, 128
        %603 = vxpose.xlu0.b32.cont [11/16] 0.0, 128
        %604 = vxpose.xlu0.b32.cont [12/16] 0.0, 128
        %605 = vxpose.xlu0.b32.cont [13/16] 0.0, 128
        %606 = vxpose.xlu0.b32.cont [14/16] 0.0, 128
        %607 = vxpose.xlu0.b32.cont [15/16] 0.0, 128
        %608 = vxpose.xlu0.b32.end [16/16] 0.0, 128
        %v609 = vpop.trf.xlu0
        %v610 = vpop.trf.xlu0
        %v611 = vpop.trf.xlu0
        %v612 = vpop.trf.xlu0
        %v613 = vpop.trf.xlu0
        %v614 = vpop.trf.xlu0
        %v615 = vpop.trf.xlu0
        %v616 = vpop.trf.xlu0
        %v617 = vpop.trf.xlu0
        %v618 = vpop.trf.xlu0
        %v619 = vpop.trf.xlu0
        %v620 = vpop.trf.xlu0
        %v621 = vpop.trf.xlu0
        %v622 = vpop.trf.xlu0
        %v623 = vpop.trf.xlu0
        %v624 = vpop.trf.xlu0
        %657 = vrot.lane.b32.xlu0 %v577, 8
        %v658 = vpop.permute.xlu0 %657
        %659 = vrot.lane.b32.xlu0 %v578, 8
        %v660 = vpop.permute.xlu0 %659
        %661 = vrot.lane.b32.xlu0 %v579, 8
        %v662 = vpop.permute.xlu0 %661
        %663 = vrot.lane.b32.xlu0 %v580, 8
        %v664 = vpop.permute.xlu0 %663
        %665 = vrot.lane.b32.xlu0 %v581, 8
        %v666 = vpop.permute.xlu0 %665
        %667 = vrot.lane.b32.xlu0 %v582, 8
        %v668 = vpop.permute.xlu0 %667
        %669 = vrot.lane.b32.xlu0 %v583, 8
        %v670 = vpop.permute.xlu0 %669
        %671 = vrot.lane.b32.xlu0 %v584, 8
        %v672 = vpop.permute.xlu0 %671
        %673 = vrot.lane.b32.xlu0 %v585, 8
        %v674 = vpop.permute.xlu0 %673
        %675 = vrot.lane.b32.xlu0 %v586, 8
        %v676 = vpop.permute.xlu0 %675
        %677 = vrot.lane.b32.xlu0 %v587, 8
        %v678 = vpop.permute.xlu0 %677
        %679 = vrot.lane.b32.xlu0 %v588, 8
        %v680 = vpop.permute.xlu0 %679
        %681 = vrot.lane.b32.xlu0 %v589, 8
        %v682 = vpop.permute.xlu0 %681
        %683 = vrot.lane.b32.xlu0 %v590, 8
        %v684 = vpop.permute.xlu0 %683
        %685 = vrot.lane.b32.xlu0 %v591, 8
        %v686 = vpop.permute.xlu0 %685
        %687 = vrot.lane.b32.xlu0 %v592, 8
        %v688 = vpop.permute.xlu0 %687
        %689 = vrot.lane.b32.xlu0 %v609, 8
        %v690 = vpop.permute.xlu0 %689
        %691 = vrot.lane.b32.xlu0 %v610, 8
        %v692 = vpop.permute.xlu0 %691
        %693 = vrot.lane.b32.xlu0 %v611, 8
        %v694 = vpop.permute.xlu0 %693
        %695 = vrot.lane.b32.xlu0 %v612, 8
        %v696 = vpop.permute.xlu0 %695
        %697 = vrot.lane.b32.xlu0 %v613, 8
        %v698 = vpop.permute.xlu0 %697
        %699 = vrot.lane.b32.xlu0 %v614, 8
        %v700 = vpop.permute.xlu0 %699
        %701 = vrot.lane.b32.xlu0 %v615, 8
        %v702 = vpop.permute.xlu0 %701
        %703 = vrot.lane.b32.xlu0 %v616, 8
        %v704 = vpop.permute.xlu0 %703
        %705 = vrot.lane.b32.xlu0 %v617, 8
        %v706 = vpop.permute.xlu0 %705
        %707 = vrot.lane.b32.xlu0 %v618, 8
        %v708 = vpop.permute.xlu0 %707
        %709 = vrot.lane.b32.xlu0 %v619, 8
        %v710 = vpop.permute.xlu0 %709
        %711 = vrot.lane.b32.xlu0 %v620, 8
        %v712 = vpop.permute.xlu0 %711
        %713 = vrot.lane.b32.xlu0 %v621, 8
        %v714 = vpop.permute.xlu0 %713
        %715 = vrot.lane.b32.xlu0 %v622, 8
        %v716 = vpop.permute.xlu0 %715
        %717 = vrot.lane.b32.xlu0 %v623, 8
        %v718 = vpop.permute.xlu0 %717
        %719 = vrot.lane.b32.xlu0 %v624, 8
        %v720 = vpop.permute.xlu0 %719
        %vm753 = vcmask 64512
        %v754 = vsel %vm753, %v510, %v658
        %v755 = vsel %vm753, %v511, %v660
        %v756 = vsel %vm753, %v512, %v662
        %v757 = vsel %vm753, %v513, %v664
        %v758 = vsel %vm753, %v514, %v666
        %v759 = vsel %vm753, %v515, %v668
        %v760 = vsel %vm753, %v516, %v670
        %v761 = vsel %vm753, %v517, %v672
        %v762 = vsel %vm753, %v518, %v674
        %v763 = vsel %vm753, %v519, %v676
        %v764 = vsel %vm753, %v520, %v678
        %v765 = vsel %vm753, %v521, %v680
        %v766 = vsel %vm753, %v522, %v682
        %v767 = vsel %vm753, %v523, %v684
        %v768 = vsel %vm753, %v524, %v686
        %v769 = vsel %vm753, %v525, %v688
        %v770 = vsel %vm753, %v542, %v690
        %v771 = vsel %vm753, %v543, %v692
        %v772 = vsel %vm753, %v544, %v694
        %v773 = vsel %vm753, %v545, %v696
        %v774 = vsel %vm753, %v546, %v698
        %v775 = vsel %vm753, %v547, %v700
        %v776 = vsel %vm753, %v548, %v702
        %v777 = vsel %vm753, %v549, %v704
        %v778 = vsel %vm753, %v550, %v706
        %v779 = vsel %vm753, %v551, %v708
        %v780 = vsel %vm753, %v552, %v710
        %v781 = vsel %vm753, %v553, %v712
        %v782 = vsel %vm753, %v554, %v714
        %v783 = vsel %vm753, %v555, %v716
        %v784 = vsel %vm753, %v556, %v718
        %v785 = vsel %vm753, %v557, %v720
        %v786 = vpack.c.bf16 %v755, %v754
        %v787 = vpack.c.bf16 %v757, %v756
        %v788 = vpack.c.bf16 %v759, %v758
        %v789 = vpack.c.bf16 %v761, %v760
        %v790 = vpack.c.bf16 %v763, %v762
        %v791 = vpack.c.bf16 %v765, %v764
        %v792 = vpack.c.bf16 %v767, %v766
        %v793 = vpack.c.bf16 %v769, %v768
        %v794 = vpack.c.bf16 %v771, %v770
        %v795 = vpack.c.bf16 %v773, %v772
        %v796 = vpack.c.bf16 %v775, %v774
        %v797 = vpack.c.bf16 %v777, %v776
        %v798 = vpack.c.bf16 %v779, %v778
        %v799 = vpack.c.bf16 %v781, %v780
        %v800 = vpack.c.bf16 %v783, %v782
        %v801 = vpack.c.bf16 %v785, %v784
        %v818 = vunpack.c.l.b16 %v786
        %v819 = vunpack.c.h.b16 %v786
        %v820 = vunpack.c.l.b16 %v787
        %v821 = vunpack.c.h.b16 %v787
        %v822 = vunpack.c.l.b16 %v788
        %v823 = vunpack.c.h.b16 %v788
        %v824 = vunpack.c.l.b16 %v789
        %v825 = vunpack.c.h.b16 %v789
        %v826 = vunpack.c.l.b16 %v790
        %v827 = vunpack.c.h.b16 %v790
        %v828 = vunpack.c.l.b16 %v791
        %v829 = vunpack.c.h.b16 %v791
        %v830 = vunpack.c.l.b16 %v792
        %v831 = vunpack.c.h.b16 %v792
        %v832 = vunpack.c.l.b16 %v793
        %v833 = vunpack.c.h.b16 %v793
        %v834 = vunpack.c.l.b16 %v794
        %v835 = vunpack.c.h.b16 %v794
        %v836 = vunpack.c.l.b16 %v795
        %v837 = vunpack.c.h.b16 %v795
        %v838 = vunpack.c.l.b16 %v796
        %v839 = vunpack.c.h.b16 %v796
        %v840 = vunpack.c.l.b16 %v797
        %v841 = vunpack.c.h.b16 %v797
        %v842 = vunpack.c.l.b16 %v798
        %v843 = vunpack.c.h.b16 %v798
        %v844 = vunpack.c.l.b16 %v799
        %v845 = vunpack.c.h.b16 %v799
        %v846 = vunpack.c.l.b16 %v800
        %v847 = vunpack.c.h.b16 %v800
        %v848 = vunpack.c.l.b16 %v801
        %v849 = vunpack.c.h.b16 %v801
        %v850 = vpack.c.b16 %v818, %v818
        %v851 = vpack.c.b16 %v819, %v819
        %v852 = vpack.c.b16 %v820, %v820
        %v853 = vpack.c.b16 %v821, %v821
        %v854 = vpack.c.b16 %v822, %v822
        %v855 = vpack.c.b16 %v823, %v823
        %v856 = vpack.c.b16 %v824, %v824
        %v857 = vpack.c.b16 %v825, %v825
        %v858 = vpack.c.b16 %v826, %v826
        %v859 = vpack.c.b16 %v827, %v827
        %v860 = vpack.c.b16 %v828, %v828
        %v861 = vpack.c.b16 %v829, %v829
        %v862 = vpack.c.b16 %v830, %v830
        %v863 = vpack.c.b16 %v831, %v831
        %v864 = vpack.c.b16 %v832, %v832
        %v865 = vpack.c.b16 %v833, %v833
        %v866 = vpack.c.b16 %v834, %v834
        %v867 = vpack.c.b16 %v835, %v835
        %v868 = vpack.c.b16 %v836, %v836
        %v869 = vpack.c.b16 %v837, %v837
        %v870 = vpack.c.b16 %v838, %v838
        %v871 = vpack.c.b16 %v839, %v839
        %v872 = vpack.c.b16 %v840, %v840
        %v873 = vpack.c.b16 %v841, %v841
        %v874 = vpack.c.b16 %v842, %v842
        %v875 = vpack.c.b16 %v843, %v843
        %v876 = vpack.c.b16 %v844, %v844
        %v877 = vpack.c.b16 %v845, %v845
        %v878 = vpack.c.b16 %v846, %v846
        %v879 = vpack.c.b16 %v847, %v847
        %v880 = vpack.c.b16 %v848, %v848
        %v881 = vpack.c.b16 %v849, %v849
        %vm882 = vsmask.f32 4368
        %vm883 = vmor %vm282, %vm882
        %v885 = vshrl.u32 %v850, 16
        %v887 = vrot.slane %v885, 7
        %v888 = vshll.u32 %v850, 16
        %v890 = vor.u32 %v887, %v888
        %v891 = vrot.slane %v887, 4
        %v893 = vshrl.u32 %v851, 16
        %v895 = vrot.slane %v893, 7
        %v896 = vshll.u32 %v851, 16
        %v898 = vor.u32 %v895, %v896
        %v899 = vsel %vm883, %v891, %v898
        %v900 = vrot.slane %v895, 4
        %v902 = vshrl.u32 %v852, 16
        %v904 = vrot.slane %v902, 7
        %v905 = vshll.u32 %v852, 16
        %v907 = vor.u32 %v904, %v905
        %v908 = vrot.slane %v904, 4
        %v910 = vshrl.u32 %v853, 16
        %v912 = vrot.slane %v910, 7
        %v913 = vshll.u32 %v853, 16
        %v915 = vor.u32 %v912, %v913
        %v916 = vsel %vm883, %v908, %v915
        %v917 = vrot.slane %v912, 4
        %v919 = vshrl.u32 %v854, 16
        %v921 = vrot.slane %v919, 7
        %v922 = vshll.u32 %v854, 16
        %v924 = vor.u32 %v921, %v922
        %v925 = vrot.slane %v921, 4
        %v927 = vshrl.u32 %v855, 16
        %v929 = vrot.slane %v927, 7
        %v930 = vshll.u32 %v855, 16
        %v932 = vor.u32 %v929, %v930
        %v933 = vsel %vm883, %v925, %v932
        %v934 = vrot.slane %v929, 4
        %v936 = vshrl.u32 %v856, 16
        %v938 = vrot.slane %v936, 7
        %v939 = vshll.u32 %v856, 16
        %v941 = vor.u32 %v938, %v939
        %v942 = vrot.slane %v938, 4
        %v944 = vshrl.u32 %v857, 16
        %v946 = vrot.slane %v944, 7
        %v947 = vshll.u32 %v857, 16
        %v949 = vor.u32 %v946, %v947
        %v950 = vsel %vm883, %v942, %v949
        %v951 = vrot.slane %v946, 4
        %v953 = vshrl.u32 %v858, 16
        %v955 = vrot.slane %v953, 7
        %v956 = vshll.u32 %v858, 16
        %v958 = vor.u32 %v955, %v956
        %v959 = vrot.slane %v955, 4
        %v961 = vshrl.u32 %v859, 16
        %v963 = vrot.slane %v961, 7
        %v964 = vshll.u32 %v859, 16
        %v966 = vor.u32 %v963, %v964
        %v967 = vsel %vm883, %v959, %v966
        %v968 = vrot.slane %v963, 4
        %v970 = vshrl.u32 %v860, 16
        %v972 = vrot.slane %v970, 7
        %v973 = vshll.u32 %v860, 16
        %v975 = vor.u32 %v972, %v973
        %v976 = vrot.slane %v972, 4
        %v978 = vshrl.u32 %v861, 16
        %v980 = vrot.slane %v978, 7
        %v981 = vshll.u32 %v861, 16
        %v983 = vor.u32 %v980, %v981
        %v984 = vsel %vm883, %v976, %v983
        %v985 = vrot.slane %v980, 4
        %v987 = vshrl.u32 %v862, 16
        %v989 = vrot.slane %v987, 7
        %v990 = vshll.u32 %v862, 16
        %v992 = vor.u32 %v989, %v990
        %v993 = vrot.slane %v989, 4
        %v995 = vshrl.u32 %v863, 16
        %v997 = vrot.slane %v995, 7
        %v998 = vshll.u32 %v863, 16
        %v1000 = vor.u32 %v997, %v998
        %v1001 = vsel %vm883, %v993, %v1000
        %v1002 = vrot.slane %v997, 4
        %v1004 = vshrl.u32 %v864, 16
        %v1006 = vrot.slane %v1004, 7
        %v1007 = vshll.u32 %v864, 16
        %v1009 = vor.u32 %v1006, %v1007
        %v1010 = vrot.slane %v1006, 4
        %v1012 = vshrl.u32 %v865, 16
        %v1014 = vrot.slane %v1012, 7
        %v1015 = vshll.u32 %v865, 16
        %v1017 = vor.u32 %v1014, %v1015
        %v1018 = vsel %vm883, %v1010, %v1017
        %v1019 = vrot.slane %v1014, 4
        %v1021 = vshrl.u32 %v866, 16
        %v1023 = vrot.slane %v1021, 7
        %v1024 = vshll.u32 %v866, 16
        %v1026 = vor.u32 %v1023, %v1024
        %v1027 = vrot.slane %v1023, 4
        %v1029 = vshrl.u32 %v867, 16
        %v1031 = vrot.slane %v1029, 7
        %v1032 = vshll.u32 %v867, 16
        %v1034 = vor.u32 %v1031, %v1032
        %v1035 = vsel %vm883, %v1027, %v1034
        %v1036 = vrot.slane %v1031, 4
        %v1038 = vshrl.u32 %v868, 16
        %v1040 = vrot.slane %v1038, 7
        %v1041 = vshll.u32 %v868, 16
        %v1043 = vor.u32 %v1040, %v1041
        %v1044 = vrot.slane %v1040, 4
        %v1046 = vshrl.u32 %v869, 16
        %v1048 = vrot.slane %v1046, 7
        %v1049 = vshll.u32 %v869, 16
        %v1051 = vor.u32 %v1048, %v1049
        %v1052 = vsel %vm883, %v1044, %v1051
        %v1053 = vrot.slane %v1048, 4
        %v1055 = vshrl.u32 %v870, 16
        %v1057 = vrot.slane %v1055, 7
        %v1058 = vshll.u32 %v870, 16
        %v1060 = vor.u32 %v1057, %v1058
        %v1061 = vrot.slane %v1057, 4
        %v1063 = vshrl.u32 %v871, 16
        %v1065 = vrot.slane %v1063, 7
        %v1066 = vshll.u32 %v871, 16
        %v1068 = vor.u32 %v1065, %v1066
        %v1069 = vsel %vm883, %v1061, %v1068
        %v1070 = vrot.slane %v1065, 4
        %v1072 = vshrl.u32 %v872, 16
        %v1074 = vrot.slane %v1072, 7
        %v1075 = vshll.u32 %v872, 16
        %v1077 = vor.u32 %v1074, %v1075
        %v1078 = vrot.slane %v1074, 4
        %v1080 = vshrl.u32 %v873, 16
        %v1082 = vrot.slane %v1080, 7
        %v1083 = vshll.u32 %v873, 16
        %v1085 = vor.u32 %v1082, %v1083
        %v1086 = vsel %vm883, %v1078, %v1085
        %v1087 = vrot.slane %v1082, 4
        %v1089 = vshrl.u32 %v874, 16
        %v1091 = vrot.slane %v1089, 7
        %v1092 = vshll.u32 %v874, 16
        %v1094 = vor.u32 %v1091, %v1092
        %v1095 = vrot.slane %v1091, 4
        %v1097 = vshrl.u32 %v875, 16
        %v1099 = vrot.slane %v1097, 7
        %v1100 = vshll.u32 %v875, 16
        %v1102 = vor.u32 %v1099, %v1100
        %v1103 = vsel %vm883, %v1095, %v1102
        %v1104 = vrot.slane %v1099, 4
        %v1106 = vshrl.u32 %v876, 16
        %v1108 = vrot.slane %v1106, 7
        %v1109 = vshll.u32 %v876, 16
        %v1111 = vor.u32 %v1108, %v1109
        %v1112 = vrot.slane %v1108, 4
        %v1114 = vshrl.u32 %v877, 16
        %v1116 = vrot.slane %v1114, 7
        %v1117 = vshll.u32 %v877, 16
        %v1119 = vor.u32 %v1116, %v1117
        %v1120 = vsel %vm883, %v1112, %v1119
        %v1121 = vrot.slane %v1116, 4
        %v1123 = vshrl.u32 %v878, 16
        %v1125 = vrot.slane %v1123, 7
        %v1126 = vshll.u32 %v878, 16
        %v1128 = vor.u32 %v1125, %v1126
        %v1129 = vrot.slane %v1125, 4
        %v1131 = vshrl.u32 %v879, 16
        %v1133 = vrot.slane %v1131, 7
        %v1134 = vshll.u32 %v879, 16
        %v1136 = vor.u32 %v1133, %v1134
        %v1137 = vsel %vm883, %v1129, %v1136
        %v1138 = vrot.slane %v1133, 4
        %v1140 = vshrl.u32 %v880, 16
        %v1142 = vrot.slane %v1140, 7
        %v1143 = vshll.u32 %v880, 16
        %v1145 = vor.u32 %v1142, %v1143
        %v1146 = vrot.slane %v1142, 4
        %v1148 = vshrl.u32 %v881, 16
        %v1150 = vrot.slane %v1148, 7
        %v1151 = vshll.u32 %v881, 16
        %v1153 = vor.u32 %v1150, %v1151
        %v1154 = vsel %vm883, %v1146, %v1153
        %v1155 = vrot.slane %v1150, 4
        %vm1204 = vcmask 125952
        %vm1205 = vmand %vm1204, %vm332
        %v1206 = vld [vmem:[%s280] sm:$0xf]
        %v1207 = vsel %vm1205, %v890, %v1206
        %1208 = vst [vmem:[%s280] sm:$0xf] %v1207
        %1209 = vst.msk [vmem:[%s280 + $0x4] sm:$0xf] %vm271, %v899
        %v1210 = vld [vmem:[%s280 + $0x8] sm:$0x1]
        %v1211 = vsel %vm283, %v900, %v1210
        %1212 = vst [vmem:[%s280 + $0x8] sm:$0x1] %v1211
        %v1213 = vld [vmem:[%s280 + $0xc] sm:$0xf]
        %v1214 = vsel %vm1205, %v907, %v1213
        %1215 = vst [vmem:[%s280 + $0xc] sm:$0xf] %v1214
        %1216 = vst.msk [vmem:[%s280 + $0x10] sm:$0xf] %vm271, %v916
        %v1217 = vld [vmem:[%s280 + $0x14] sm:$0x1]
        %v1218 = vsel %vm283, %v917, %v1217
        %1219 = vst [vmem:[%s280 + $0x14] sm:$0x1] %v1218
        %v1220 = vld [vmem:[%s280 + $0x18] sm:$0xf]
        %v1221 = vsel %vm1205, %v924, %v1220
        %1222 = vst [vmem:[%s280 + $0x18] sm:$0xf] %v1221
        %1223 = vst.msk [vmem:[%s280 + $0x1c] sm:$0xf] %vm271, %v933
        %v1224 = vld [vmem:[%s280 + $0x20] sm:$0x1]
        %v1225 = vsel %vm283, %v934, %v1224
        %1226 = vst [vmem:[%s280 + $0x20] sm:$0x1] %v1225
        %v1227 = vld [vmem:[%s280 + $0x24] sm:$0xf]
        %v1228 = vsel %vm1205, %v941, %v1227
        %1229 = vst [vmem:[%s280 + $0x24] sm:$0xf] %v1228
        %1230 = vst.msk [vmem:[%s280 + $0x28] sm:$0xf] %vm271, %v950
        %v1231 = vld [vmem:[%s280 + $0x2c] sm:$0x1]
        %v1232 = vsel %vm283, %v951, %v1231
        %1233 = vst [vmem:[%s280 + $0x2c] sm:$0x1] %v1232
        %v1234 = vld [vmem:[%s280 + $0x30] sm:$0xf]
        %v1235 = vsel %vm1205, %v958, %v1234
        %1236 = vst [vmem:[%s280 + $0x30] sm:$0xf] %v1235
        %1237 = vst.msk [vmem:[%s280 + $0x34] sm:$0xf] %vm271, %v967
        %v1238 = vld [vmem:[%s280 + $0x38] sm:$0x1]
        %v1239 = vsel %vm283, %v968, %v1238
        %1240 = vst [vmem:[%s280 + $0x38] sm:$0x1] %v1239
        %v1241 = vld [vmem:[%s280 + $0x3c] sm:$0xf]
        %v1242 = vsel %vm1205, %v975, %v1241
        %1243 = vst [vmem:[%s280 + $0x3c] sm:$0xf] %v1242
        %1244 = vst.msk [vmem:[%s280 + $0x40] sm:$0xf] %vm271, %v984
        %v1245 = vld [vmem:[%s280 + $0x44] sm:$0x1]
        %v1246 = vsel %vm283, %v985, %v1245
        %1247 = vst [vmem:[%s280 + $0x44] sm:$0x1] %v1246
        %v1248 = vld [vmem:[%s280 + $0x48] sm:$0xf]
        %v1249 = vsel %vm1205, %v992, %v1248
        %1250 = vst [vmem:[%s280 + $0x48] sm:$0xf] %v1249
        %1251 = vst.msk [vmem:[%s280 + $0x4c] sm:$0xf] %vm271, %v1001
        %v1252 = vld [vmem:[%s280 + $0x50] sm:$0x1]
        %v1253 = vsel %vm283, %v1002, %v1252
        %1254 = vst [vmem:[%s280 + $0x50] sm:$0x1] %v1253
        %v1255 = vld [vmem:[%s280 + $0x54] sm:$0xf]
        %v1256 = vsel %vm1205, %v1009, %v1255
        %1257 = vst [vmem:[%s280 + $0x54] sm:$0xf] %v1256
        %1258 = vst.msk [vmem:[%s280 + $0x58] sm:$0xf] %vm271, %v1018
        %v1259 = vld [vmem:[%s280 + $0x5c] sm:$0x1]
        %v1260 = vsel %vm283, %v1019, %v1259
        %1261 = vst [vmem:[%s280 + $0x5c] sm:$0x1] %v1260
        %v1262 = vld [vmem:[%s280 + $0x60] sm:$0xf]
        %v1263 = vsel %vm1205, %v1026, %v1262
        %1264 = vst [vmem:[%s280 + $0x60] sm:$0xf] %v1263
        %1265 = vst.msk [vmem:[%s280 + $0x64] sm:$0xf] %vm271, %v1035
        %v1266 = vld [vmem:[%s280 + $0x68] sm:$0x1]
        %v1267 = vsel %vm283, %v1036, %v1266
        %1268 = vst [vmem:[%s280 + $0x68] sm:$0x1] %v1267
        %v1269 = vld [vmem:[%s280 + $0x6c] sm:$0xf]
        %v1270 = vsel %vm1205, %v1043, %v1269
        %1271 = vst [vmem:[%s280 + $0x6c] sm:$0xf] %v1270
        %1272 = vst.msk [vmem:[%s280 + $0x70] sm:$0xf] %vm271, %v1052
        %v1273 = vld [vmem:[%s280 + $0x74] sm:$0x1]
        %v1274 = vsel %vm283, %v1053, %v1273
        %1275 = vst [vmem:[%s280 + $0x74] sm:$0x1] %v1274
        %v1276 = vld [vmem:[%s280 + $0x78] sm:$0xf]
        %v1277 = vsel %vm1205, %v1060, %v1276
        %1278 = vst [vmem:[%s280 + $0x78] sm:$0xf] %v1277
        %1279 = vst.msk [vmem:[%s280 + $0x7c] sm:$0xf] %vm271, %v1069
        %v1280 = vld [vmem:[%s280 + $0x80] sm:$0x1]
        %v1281 = vsel %vm283, %v1070, %v1280
        %1282 = vst [vmem:[%s280 + $0x80] sm:$0x1] %v1281
        %v1283 = vld [vmem:[%s280 + $0x84] sm:$0xf]
        %v1284 = vsel %vm1205, %v1077, %v1283
        %1285 = vst [vmem:[%s280 + $0x84] sm:$0xf] %v1284
        %1286 = vst.msk [vmem:[%s280 + $0x88] sm:$0xf] %vm271, %v1086
        %v1287 = vld [vmem:[%s280 + $0x8c] sm:$0x1]
        %v1288 = vsel %vm283, %v1087, %v1287
        %1289 = vst [vmem:[%s280 + $0x8c] sm:$0x1] %v1288
        %v1290 = vld [vmem:[%s280 + $0x90] sm:$0xf]
        %v1291 = vsel %vm1205, %v1094, %v1290
        %1292 = vst [vmem:[%s280 + $0x90] sm:$0xf] %v1291
        %1293 = vst.msk [vmem:[%s280 + $0x94] sm:$0xf] %vm271, %v1103
        %v1294 = vld [vmem:[%s280 + $0x98] sm:$0x1]
        %v1295 = vsel %vm283, %v1104, %v1294
        %1296 = vst [vmem:[%s280 + $0x98] sm:$0x1] %v1295
        %v1297 = vld [vmem:[%s280 + $0x9c] sm:$0xf]
        %v1298 = vsel %vm1205, %v1111, %v1297
        %1299 = vst [vmem:[%s280 + $0x9c] sm:$0xf] %v1298
        %1300 = vst.msk [vmem:[%s280 + $0xa0] sm:$0xf] %vm271, %v1120
        %v1301 = vld [vmem:[%s280 + $0xa4] sm:$0x1]
        %v1302 = vsel %vm283, %v1121, %v1301
        %1303 = vst [vmem:[%s280 + $0xa4] sm:$0x1] %v1302
        %v1304 = vld [vmem:[%s280 + $0xa8] sm:$0xf]
        %v1305 = vsel %vm1205, %v1128, %v1304
        %1306 = vst [vmem:[%s280 + $0xa8] sm:$0xf] %v1305
        %1307 = vst.msk [vmem:[%s280 + $0xac] sm:$0xf] %vm271, %v1137
        %v1308 = vld [vmem:[%s280 + $0xb0] sm:$0x1]
        %v1309 = vsel %vm283, %v1138, %v1308
        %1310 = vst [vmem:[%s280 + $0xb0] sm:$0x1] %v1309
        %v1311 = vld [vmem:[%s280 + $0xb4] sm:$0xf]
        %v1312 = vsel %vm1205, %v1145, %v1311
        %1313 = vst [vmem:[%s280 + $0xb4] sm:$0xf] %v1312
        %1314 = vst.msk [vmem:[%s280 + $0xb8] sm:$0xf] %vm271, %v1154
        %v1315 = vld [vmem:[%s280 + $0xbc] sm:$0x1]
        %v1316 = vsel %vm283, %v1155, %v1315
        %1317 = vst [vmem:[%s280 + $0xbc] sm:$0x1] %v1316
        %v1318 = vld [vmem:[#allocation2] sm:$0xf]
        %v1319 = vld [vmem:[#allocation2 + $0x4] sm:$0xf]
        %v1320 = vld [vmem:[#allocation2 + $0x8] sm:$0x1]
        %v1321 = vld [vmem:[#allocation2 + $0xc] sm:$0xf]
        %v1322 = vld [vmem:[#allocation2 + $0x10] sm:$0xf]
        %v1323 = vld [vmem:[#allocation2 + $0x14] sm:$0x1]
        %v1324 = vld [vmem:[#allocation2 + $0x18] sm:$0xf]
        %v1325 = vld [vmem:[#allocation2 + $0x1c] sm:$0xf]
        %v1326 = vld [vmem:[#allocation2 + $0x20] sm:$0x1]
        %v1327 = vld [vmem:[#allocation2 + $0x24] sm:$0xf]
        %v1328 = vld [vmem:[#allocation2 + $0x28] sm:$0xf]
        %v1329 = vld [vmem:[#allocation2 + $0x2c] sm:$0x1]
        %v1330 = vld [vmem:[#allocation2 + $0x30] sm:$0xf]
        %v1331 = vld [vmem:[#allocation2 + $0x34] sm:$0xf]
        %v1332 = vld [vmem:[#allocation2 + $0x38] sm:$0x1]
        %v1333 = vld [vmem:[#allocation2 + $0x3c] sm:$0xf]
        %v1334 = vld [vmem:[#allocation2 + $0x40] sm:$0xf]
        %v1335 = vld [vmem:[#allocation2 + $0x44] sm:$0x1]
        %v1336 = vld [vmem:[#allocation2 + $0x48] sm:$0xf]
        %v1337 = vld [vmem:[#allocation2 + $0x4c] sm:$0xf]
        %v1338 = vld [vmem:[#allocation2 + $0x50] sm:$0x1]
        %v1339 = vld [vmem:[#allocation2 + $0x54] sm:$0xf]
        %v1340 = vld [vmem:[#allocation2 + $0x58] sm:$0xf]
        %v1341 = vld [vmem:[#allocation2 + $0x5c] sm:$0x1]
        %v1342 = vld [vmem:[#allocation2 + $0x60] sm:$0xf]
        %v1343 = vld [vmem:[#allocation2 + $0x64] sm:$0xf]
        %v1344 = vld [vmem:[#allocation2 + $0x68] sm:$0x1]
        %v1345 = vld [vmem:[#allocation2 + $0x6c] sm:$0xf]
        %v1346 = vld [vmem:[#allocation2 + $0x70] sm:$0xf]
        %v1347 = vld [vmem:[#allocation2 + $0x74] sm:$0x1]
        %v1348 = vld [vmem:[#allocation2 + $0x78] sm:$0xf]
        %v1349 = vld [vmem:[#allocation2 + $0x7c] sm:$0xf]
        %v1350 = vld [vmem:[#allocation2 + $0x80] sm:$0x1]
        %v1351 = vld [vmem:[#allocation2 + $0x84] sm:$0xf]
        %v1352 = vld [vmem:[#allocation2 + $0x88] sm:$0xf]
        %v1353 = vld [vmem:[#allocation2 + $0x8c] sm:$0x1]
        %v1354 = vld [vmem:[#allocation2 + $0x90] sm:$0xf]
        %v1355 = vld [vmem:[#allocation2 + $0x94] sm:$0xf]
        %v1356 = vld [vmem:[#allocation2 + $0x98] sm:$0x1]
        %v1357 = vld [vmem:[#allocation2 + $0x9c] sm:$0xf]
        %v1358 = vld [vmem:[#allocation2 + $0xa0] sm:$0xf]
        %v1359 = vld [vmem:[#allocation2 + $0xa4] sm:$0x1]
        %v1360 = vld [vmem:[#allocation2 + $0xa8] sm:$0xf]
        %v1361 = vld [vmem:[#allocation2 + $0xac] sm:$0xf]
        %v1362 = vld [vmem:[#allocation2 + $0xb0] sm:$0x1]
        %v1363 = vld [vmem:[#allocation2 + $0xb4] sm:$0xf]
        %v1364 = vld [vmem:[#allocation2 + $0xb8] sm:$0xf]
        %v1365 = vld [vmem:[#allocation2 + $0xbc] sm:$0x1]
        %v1366 = vld [vmem:[%s280] sm:$0xf]
        %v1367 = vld [vmem:[%s280 + $0x4] sm:$0xf]
        %v1368 = vld [vmem:[%s280 + $0x8] sm:$0x1]
        %v1369 = vld [vmem:[%s280 + $0xc] sm:$0xf]
        %v1370 = vld [vmem:[%s280 + $0x10] sm:$0xf]
        %v1371 = vld [vmem:[%s280 + $0x14] sm:$0x1]
        %v1372 = vld [vmem:[%s280 + $0x18] sm:$0xf]
        %v1373 = vld [vmem:[%s280 + $0x1c] sm:$0xf]
        %v1374 = vld [vmem:[%s280 + $0x20] sm:$0x1]
        %v1375 = vld [vmem:[%s280 + $0x24] sm:$0xf]
        %v1376 = vld [vmem:[%s280 + $0x28] sm:$0xf]
        %v1377 = vld [vmem:[%s280 + $0x2c] sm:$0x1]
        %v1378 = vld [vmem:[%s280 + $0x30] sm:$0xf]
        %v1379 = vld [vmem:[%s280 + $0x34] sm:$0xf]
        %v1380 = vld [vmem:[%s280 + $0x38] sm:$0x1]
        %v1381 = vld [vmem:[%s280 + $0x3c] sm:$0xf]
        %v1382 = vld [vmem:[%s280 + $0x40] sm:$0xf]
        %v1383 = vld [vmem:[%s280 + $0x44] sm:$0x1]
        %v1384 = vld [vmem:[%s280 + $0x48] sm:$0xf]
        %v1385 = vld [vmem:[%s280 + $0x4c] sm:$0xf]
        %v1386 = vld [vmem:[%s280 + $0x50] sm:$0x1]
        %v1387 = vld [vmem:[%s280 + $0x54] sm:$0xf]
        %v1388 = vld [vmem:[%s280 + $0x58] sm:$0xf]
        %v1389 = vld [vmem:[%s280 + $0x5c] sm:$0x1]
        %v1390 = vld [vmem:[%s280 + $0x60] sm:$0xf]
        %v1391 = vld [vmem:[%s280 + $0x64] sm:$0xf]
        %v1392 = vld [vmem:[%s280 + $0x68] sm:$0x1]
        %v1393 = vld [vmem:[%s280 + $0x6c] sm:$0xf]
        %v1394 = vld [vmem:[%s280 + $0x70] sm:$0xf]
        %v1395 = vld [vmem:[%s280 + $0x74] sm:$0x1]
        %v1396 = vld [vmem:[%s280 + $0x78] sm:$0xf]
        %v1397 = vld [vmem:[%s280 + $0x7c] sm:$0xf]
        %v1398 = vld [vmem:[%s280 + $0x80] sm:$0x1]
        %v1399 = vld [vmem:[%s280 + $0x84] sm:$0xf]
        %v1400 = vld [vmem:[%s280 + $0x88] sm:$0xf]
        %v1401 = vld [vmem:[%s280 + $0x8c] sm:$0x1]
        %v1402 = vld [vmem:[%s280 + $0x90] sm:$0xf]
        %v1403 = vld [vmem:[%s280 + $0x94] sm:$0xf]
        %v1404 = vld [vmem:[%s280 + $0x98] sm:$0x1]
        %v1405 = vld [vmem:[%s280 + $0x9c] sm:$0xf]
        %v1406 = vld [vmem:[%s280 + $0xa0] sm:$0xf]
        %v1407 = vld [vmem:[%s280 + $0xa4] sm:$0x1]
        %v1408 = vld [vmem:[%s280 + $0xa8] sm:$0xf]
        %v1409 = vld [vmem:[%s280 + $0xac] sm:$0xf]
        %v1410 = vld [vmem:[%s280 + $0xb0] sm:$0x1]
        %v1411 = vld [vmem:[%s280 + $0xb4] sm:$0xf]
        %v1412 = vld [vmem:[%s280 + $0xb8] sm:$0xf]
        %v1413 = vld [vmem:[%s280 + $0xbc] sm:$0x1]
        %s1414 = scalar_lea.vmem [#allocation2], 24
        %v1415 = vld [vmem:[%s1414] sm:$0xf]
        %v1416 = vld [vmem:[%s1414 + $0x4] sm:$0xf]
        %v1417 = vld [vmem:[%s1414 + $0x8] sm:$0x1]
        %v1418 = vld [vmem:[%s1414 + $0xc] sm:$0xf]
        %v1419 = vld [vmem:[%s1414 + $0x10] sm:$0xf]
        %v1420 = vld [vmem:[%s1414 + $0x14] sm:$0x1]
        %v1421 = vld [vmem:[%s1414 + $0x18] sm:$0xf]
        %v1422 = vld [vmem:[%s1414 + $0x1c] sm:$0xf]
        %v1423 = vld [vmem:[%s1414 + $0x20] sm:$0x1]
        %v1424 = vld [vmem:[%s1414 + $0x24] sm:$0xf]
        %v1425 = vld [vmem:[%s1414 + $0x28] sm:$0xf]
        %v1426 = vld [vmem:[%s1414 + $0x2c] sm:$0x1]
        %v1427 = vld [vmem:[%s1414 + $0x30] sm:$0xf]
        %v1428 = vld [vmem:[%s1414 + $0x34] sm:$0xf]
        %v1429 = vld [vmem:[%s1414 + $0x38] sm:$0x1]
        %v1430 = vld [vmem:[%s1414 + $0x3c] sm:$0xf]
        %v1431 = vld [vmem:[%s1414 + $0x40] sm:$0xf]
        %v1432 = vld [vmem:[%s1414 + $0x44] sm:$0x1]
        %v1433 = vld [vmem:[%s1414 + $0x48] sm:$0xf]
        %v1434 = vld [vmem:[%s1414 + $0x4c] sm:$0xf]
        %v1435 = vld [vmem:[%s1414 + $0x50] sm:$0x1]
        %v1436 = vld [vmem:[%s1414 + $0x54] sm:$0xf]
        %v1437 = vld [vmem:[%s1414 + $0x58] sm:$0xf]
        %v1438 = vld [vmem:[%s1414 + $0x5c] sm:$0x1]
        %v1439 = vld [vmem:[%s1414 + $0x60] sm:$0xf]
        %v1440 = vld [vmem:[%s1414 + $0x64] sm:$0xf]
        %v1441 = vld [vmem:[%s1414 + $0x68] sm:$0x1]
        %v1442 = vld [vmem:[%s1414 + $0x6c] sm:$0xf]
        %v1443 = vld [vmem:[%s1414 + $0x70] sm:$0xf]
        %v1444 = vld [vmem:[%s1414 + $0x74] sm:$0x1]
        %v1445 = vld [vmem:[%s1414 + $0x78] sm:$0xf]
        %v1446 = vld [vmem:[%s1414 + $0x7c] sm:$0xf]
        %v1447 = vld [vmem:[%s1414 + $0x80] sm:$0x1]
        %v1448 = vld [vmem:[%s1414 + $0x84] sm:$0xf]
        %v1449 = vld [vmem:[%s1414 + $0x88] sm:$0xf]
        %v1450 = vld [vmem:[%s1414 + $0x8c] sm:$0x1]
        %v1451 = vld [vmem:[%s1414 + $0x90] sm:$0xf]
        %v1452 = vld [vmem:[%s1414 + $0x94] sm:$0xf]
        %v1453 = vld [vmem:[%s1414 + $0x98] sm:$0x1]
        %v1454 = vld [vmem:[%s1414 + $0x9c] sm:$0xf]
        %v1455 = vld [vmem:[%s1414 + $0xa0] sm:$0xf]
        %v1456 = vld [vmem:[%s1414 + $0xa4] sm:$0x1]
        %v1457 = vld [vmem:[%s1414 + $0xa8] sm:$0xf]
        %v1458 = vld [vmem:[%s1414 + $0xac] sm:$0xf]
        %v1459 = vld [vmem:[%s1414 + $0xb0] sm:$0x1]
        %v1460 = vld [vmem:[%s1414 + $0xb4] sm:$0xf]
        %v1461 = vld [vmem:[%s1414 + $0xb8] sm:$0xf]
        %v1462 = vld [vmem:[%s1414 + $0xbc] sm:$0x1]
        %v1495 = vunpack.c.l.b16 %v1318
        %v1496 = vunpack.c.l.b16 %v1319
        %v1497 = vunpack.c.l.b16 %v1321
        %v1498 = vunpack.c.l.b16 %v1322
        %v1499 = vunpack.c.l.b16 %v1324
        %v1500 = vunpack.c.l.b16 %v1325
        %v1501 = vunpack.c.l.b16 %v1327
        %v1502 = vunpack.c.l.b16 %v1328
        %v1503 = vunpack.c.l.b16 %v1330
        %v1504 = vunpack.c.l.b16 %v1331
        %v1505 = vunpack.c.l.b16 %v1333
        %v1506 = vunpack.c.l.b16 %v1334
        %v1507 = vunpack.c.l.b16 %v1336
        %v1508 = vunpack.c.l.b16 %v1337
        %v1509 = vunpack.c.l.b16 %v1339
        %v1510 = vunpack.c.l.b16 %v1340
        %v1511 = vunpack.c.l.b16 %v1342
        %v1512 = vunpack.c.l.b16 %v1343
        %v1513 = vunpack.c.l.b16 %v1345
        %v1514 = vunpack.c.l.b16 %v1346
        %v1515 = vunpack.c.l.b16 %v1348
        %v1516 = vunpack.c.l.b16 %v1349
        %v1517 = vunpack.c.l.b16 %v1351
        %v1518 = vunpack.c.l.b16 %v1352
        %v1519 = vunpack.c.l.b16 %v1354
        %v1520 = vunpack.c.l.b16 %v1355
        %v1521 = vunpack.c.l.b16 %v1357
        %v1522 = vunpack.c.l.b16 %v1358
        %v1523 = vunpack.c.l.b16 %v1360
        %v1524 = vunpack.c.l.b16 %v1361
        %v1525 = vunpack.c.l.b16 %v1363
        %v1526 = vunpack.c.l.b16 %v1364
        %v1527 = vpack.c.b16 %v1496, %v1495
        %v1528 = vpack.c.b16 %v1498, %v1497
        %v1529 = vpack.c.b16 %v1500, %v1499
        %v1530 = vpack.c.b16 %v1502, %v1501
        %v1531 = vpack.c.b16 %v1504, %v1503
        %v1532 = vpack.c.b16 %v1506, %v1505
        %v1533 = vpack.c.b16 %v1508, %v1507
        %v1534 = vpack.c.b16 %v1510, %v1509
        %v1535 = vpack.c.b16 %v1512, %v1511
        %v1536 = vpack.c.b16 %v1514, %v1513
        %v1537 = vpack.c.b16 %v1516, %v1515
        %v1538 = vpack.c.b16 %v1518, %v1517
        %v1539 = vpack.c.b16 %v1520, %v1519
        %v1540 = vpack.c.b16 %v1522, %v1521
        %v1541 = vpack.c.b16 %v1524, %v1523
        %v1542 = vpack.c.b16 %v1526, %v1525
        %v1559 = vunpack.c.l.b16 %v1320
        %v1560 = vunpack.c.l.b16 %v1323
        %v1561 = vunpack.c.l.b16 %v1326
        %v1562 = vunpack.c.l.b16 %v1329
        %v1563 = vunpack.c.l.b16 %v1332
        %v1564 = vunpack.c.l.b16 %v1335
        %v1565 = vunpack.c.l.b16 %v1338
        %v1566 = vunpack.c.l.b16 %v1341
        %v1567 = vunpack.c.l.b16 %v1344
        %v1568 = vunpack.c.l.b16 %v1347
        %v1569 = vunpack.c.l.b16 %v1350
        %v1570 = vunpack.c.l.b16 %v1353
        %v1571 = vunpack.c.l.b16 %v1356
        %v1572 = vunpack.c.l.b16 %v1359
        %v1573 = vunpack.c.l.b16 %v1362
        %v1574 = vunpack.c.l.b16 %v1365
        %v1575 = vpack.c.b16 %v1559, %v1559
        %v1576 = vpack.c.b16 %v1560, %v1560
        %v1577 = vpack.c.b16 %v1561, %v1561
        %v1578 = vpack.c.b16 %v1562, %v1562
        %v1579 = vpack.c.b16 %v1563, %v1563
        %v1580 = vpack.c.b16 %v1564, %v1564
        %v1581 = vpack.c.b16 %v1565, %v1565
        %v1582 = vpack.c.b16 %v1566, %v1566
        %v1583 = vpack.c.b16 %v1567, %v1567
        %v1584 = vpack.c.b16 %v1568, %v1568
        %v1585 = vpack.c.b16 %v1569, %v1569
        %v1586 = vpack.c.b16 %v1570, %v1570
        %v1587 = vpack.c.b16 %v1571, %v1571
        %v1588 = vpack.c.b16 %v1572, %v1572
        %v1589 = vpack.c.b16 %v1573, %v1573
        %v1590 = vpack.c.b16 %v1574, %v1574
        %vm1591 = vsmask.f32 7424
        %v1593 = vshrl.u32 %v1527, 16
        %v1595 = vshll.u32 %v1527, 16
        %v1597 = vrot.slane %v1595, 1
        %v1598 = vor.u32 %v1593, %v1597
        %v1600 = vshll.u32 %v1575, 16
        %v1602 = vrot.slane %v1600, 1
        %v1603 = vsel %vm1591, %v1598, %v1602
        %v1605 = vshrl.u32 %v1528, 16
        %v1607 = vshll.u32 %v1528, 16
        %v1609 = vrot.slane %v1607, 1
        %v1610 = vor.u32 %v1605, %v1609
        %v1612 = vshll.u32 %v1576, 16
        %v1614 = vrot.slane %v1612, 1
        %v1615 = vsel %vm1591, %v1610, %v1614
        %v1617 = vshrl.u32 %v1529, 16
        %v1619 = vshll.u32 %v1529, 16
        %v1621 = vrot.slane %v1619, 1
        %v1622 = vor.u32 %v1617, %v1621
        %v1624 = vshll.u32 %v1577, 16
        %v1626 = vrot.slane %v1624, 1
        %v1627 = vsel %vm1591, %v1622, %v1626
        %v1629 = vshrl.u32 %v1530, 16
        %v1631 = vshll.u32 %v1530, 16
        %v1633 = vrot.slane %v1631, 1
        %v1634 = vor.u32 %v1629, %v1633
        %v1636 = vshll.u32 %v1578, 16
        %v1638 = vrot.slane %v1636, 1
        %v1639 = vsel %vm1591, %v1634, %v1638
        %v1641 = vshrl.u32 %v1531, 16
        %v1643 = vshll.u32 %v1531, 16
        %v1645 = vrot.slane %v1643, 1
        %v1646 = vor.u32 %v1641, %v1645
        %v1648 = vshll.u32 %v1579, 16
        %v1650 = vrot.slane %v1648, 1
        %v1651 = vsel %vm1591, %v1646, %v1650
        %v1653 = vshrl.u32 %v1532, 16
        %v1655 = vshll.u32 %v1532, 16
        %v1657 = vrot.slane %v1655, 1
        %v1658 = vor.u32 %v1653, %v1657
        %v1660 = vshll.u32 %v1580, 16
        %v1662 = vrot.slane %v1660, 1
        %v1663 = vsel %vm1591, %v1658, %v1662
        %v1665 = vshrl.u32 %v1533, 16
        %v1667 = vshll.u32 %v1533, 16
        %v1669 = vrot.slane %v1667, 1
        %v1670 = vor.u32 %v1665, %v1669
        %v1672 = vshll.u32 %v1581, 16
        %v1674 = vrot.slane %v1672, 1
        %v1675 = vsel %vm1591, %v1670, %v1674
        %v1677 = vshrl.u32 %v1534, 16
        %v1679 = vshll.u32 %v1534, 16
        %v1681 = vrot.slane %v1679, 1
        %v1682 = vor.u32 %v1677, %v1681
        %v1684 = vshll.u32 %v1582, 16
        %v1686 = vrot.slane %v1684, 1
        %v1687 = vsel %vm1591, %v1682, %v1686
        %v1689 = vshrl.u32 %v1535, 16
        %v1691 = vshll.u32 %v1535, 16
        %v1693 = vrot.slane %v1691, 1
        %v1694 = vor.u32 %v1689, %v1693
        %v1696 = vshll.u32 %v1583, 16
        %v1698 = vrot.slane %v1696, 1
        %v1699 = vsel %vm1591, %v1694, %v1698
        %v1701 = vshrl.u32 %v1536, 16
        %v1703 = vshll.u32 %v1536, 16
        %v1705 = vrot.slane %v1703, 1
        %v1706 = vor.u32 %v1701, %v1705
        %v1708 = vshll.u32 %v1584, 16
        %v1710 = vrot.slane %v1708, 1
        %v1711 = vsel %vm1591, %v1706, %v1710
        %v1713 = vshrl.u32 %v1537, 16
        %v1715 = vshll.u32 %v1537, 16
        %v1717 = vrot.slane %v1715, 1
        %v1718 = vor.u32 %v1713, %v1717
        %v1720 = vshll.u32 %v1585, 16
        %v1722 = vrot.slane %v1720, 1
        %v1723 = vsel %vm1591, %v1718, %v1722
        %v1725 = vshrl.u32 %v1538, 16
        %v1727 = vshll.u32 %v1538, 16
        %v1729 = vrot.slane %v1727, 1
        %v1730 = vor.u32 %v1725, %v1729
        %v1732 = vshll.u32 %v1586, 16
        %v1734 = vrot.slane %v1732, 1
        %v1735 = vsel %vm1591, %v1730, %v1734
        %v1737 = vshrl.u32 %v1539, 16
        %v1739 = vshll.u32 %v1539, 16
        %v1741 = vrot.slane %v1739, 1
        %v1742 = vor.u32 %v1737, %v1741
        %v1744 = vshll.u32 %v1587, 16
        %v1746 = vrot.slane %v1744, 1
        %v1747 = vsel %vm1591, %v1742, %v1746
        %v1749 = vshrl.u32 %v1540, 16
        %v1751 = vshll.u32 %v1540, 16
        %v1753 = vrot.slane %v1751, 1
        %v1754 = vor.u32 %v1749, %v1753
        %v1756 = vshll.u32 %v1588, 16
        %v1758 = vrot.slane %v1756, 1
        %v1759 = vsel %vm1591, %v1754, %v1758
        %v1761 = vshrl.u32 %v1541, 16
        %v1763 = vshll.u32 %v1541, 16
        %v1765 = vrot.slane %v1763, 1
        %v1766 = vor.u32 %v1761, %v1765
        %v1768 = vshll.u32 %v1589, 16
        %v1770 = vrot.slane %v1768, 1
        %v1771 = vsel %vm1591, %v1766, %v1770
        %v1773 = vshrl.u32 %v1542, 16
        %v1775 = vshll.u32 %v1542, 16
        %v1777 = vrot.slane %v1775, 1
        %v1778 = vor.u32 %v1773, %v1777
        %v1780 = vshll.u32 %v1590, 16
        %v1782 = vrot.slane %v1780, 1
        %v1783 = vsel %vm1591, %v1778, %v1782
        %1784 = vrot.lane.b32.xlu0 %v1603, 16
        %v1785 = vpop.permute.xlu0 %1784
        %1786 = vrot.lane.b32.xlu0 %v1615, 16
        %v1787 = vpop.permute.xlu0 %1786
        %1788 = vrot.lane.b32.xlu0 %v1627, 16
        %v1789 = vpop.permute.xlu0 %1788
        %1790 = vrot.lane.b32.xlu0 %v1639, 16
        %v1791 = vpop.permute.xlu0 %1790
        %1792 = vrot.lane.b32.xlu0 %v1651, 16
        %v1793 = vpop.permute.xlu0 %1792
        %1794 = vrot.lane.b32.xlu0 %v1663, 16
        %v1795 = vpop.permute.xlu0 %1794
        %1796 = vrot.lane.b32.xlu0 %v1675, 16
        %v1797 = vpop.permute.xlu0 %1796
        %1798 = vrot.lane.b32.xlu0 %v1687, 16
        %v1799 = vpop.permute.xlu0 %1798
        %1800 = vrot.lane.b32.xlu0 %v1699, 16
        %v1801 = vpop.permute.xlu0 %1800
        %1802 = vrot.lane.b32.xlu0 %v1711, 16
        %v1803 = vpop.permute.xlu0 %1802
        %1804 = vrot.lane.b32.xlu0 %v1723, 16
        %v1805 = vpop.permute.xlu0 %1804
        %1806 = vrot.lane.b32.xlu0 %v1735, 16
        %v1807 = vpop.permute.xlu0 %1806
        %1808 = vrot.lane.b32.xlu0 %v1747, 16
        %v1809 = vpop.permute.xlu0 %1808
        %1810 = vrot.lane.b32.xlu0 %v1759, 16
        %v1811 = vpop.permute.xlu0 %1810
        %1812 = vrot.lane.b32.xlu0 %v1771, 16
        %v1813 = vpop.permute.xlu0 %1812
        %1814 = vrot.lane.b32.xlu0 %v1783, 16
        %v1815 = vpop.permute.xlu0 %1814
        %vm1816 = vcmask 1046528
        %v1817 = vrot.slane %v1527, 1
        %v1818 = vrot.slane %v1575, 1
        %v1819 = vsel %vm1816, %v1817, %v1818
        %v1820 = vrot.slane %v1528, 1
        %v1821 = vrot.slane %v1576, 1
        %v1822 = vsel %vm1816, %v1820, %v1821
        %v1823 = vrot.slane %v1529, 1
        %v1824 = vrot.slane %v1577, 1
        %v1825 = vsel %vm1816, %v1823, %v1824
        %v1826 = vrot.slane %v1530, 1
        %v1827 = vrot.slane %v1578, 1
        %v1828 = vsel %vm1816, %v1826, %v1827
        %v1829 = vrot.slane %v1531, 1
        %v1830 = vrot.slane %v1579, 1
        %v1831 = vsel %vm1816, %v1829, %v1830
        %v1832 = vrot.slane %v1532, 1
        %v1833 = vrot.slane %v1580, 1
        %v1834 = vsel %vm1816, %v1832, %v1833
        %v1835 = vrot.slane %v1533, 1
        %v1836 = vrot.slane %v1581, 1
        %v1837 = vsel %vm1816, %v1835, %v1836
        %v1838 = vrot.slane %v1534, 1
        %v1839 = vrot.slane %v1582, 1
        %v1840 = vsel %vm1816, %v1838, %v1839
        %v1841 = vrot.slane %v1535, 1
        %v1842 = vrot.slane %v1583, 1
        %v1843 = vsel %vm1816, %v1841, %v1842
        %v1844 = vrot.slane %v1536, 1
        %v1845 = vrot.slane %v1584, 1
        %v1846 = vsel %vm1816, %v1844, %v1845
        %v1847 = vrot.slane %v1537, 1
        %v1848 = vrot.slane %v1585, 1
        %v1849 = vsel %vm1816, %v1847, %v1848
        %v1850 = vrot.slane %v1538, 1
        %v1851 = vrot.slane %v1586, 1
        %v1852 = vsel %vm1816, %v1850, %v1851
        %v1853 = vrot.slane %v1539, 1
        %v1854 = vrot.slane %v1587, 1
        %v1855 = vsel %vm1816, %v1853, %v1854
        %v1856 = vrot.slane %v1540, 1
        %v1857 = vrot.slane %v1588, 1
        %v1858 = vsel %vm1816, %v1856, %v1857
        %v1859 = vrot.slane %v1541, 1
        %v1860 = vrot.slane %v1589, 1
        %v1861 = vsel %vm1816, %v1859, %v1860
        %v1862 = vrot.slane %v1542, 1
        %v1863 = vrot.slane %v1590, 1
        %v1864 = vsel %vm1816, %v1862, %v1863
        %1865 = vrot.lane.b32.xlu0 %v1819, 32
        %v1866 = vpop.permute.xlu0 %1865
        %1867 = vrot.lane.b32.xlu0 %v1822, 32
        %v1868 = vpop.permute.xlu0 %1867
        %1869 = vrot.lane.b32.xlu0 %v1825, 32
        %v1870 = vpop.permute.xlu0 %1869
        %1871 = vrot.lane.b32.xlu0 %v1828, 32
        %v1872 = vpop.permute.xlu0 %1871
        %1873 = vrot.lane.b32.xlu0 %v1831, 32
        %v1874 = vpop.permute.xlu0 %1873
        %1875 = vrot.lane.b32.xlu0 %v1834, 32
        %v1876 = vpop.permute.xlu0 %1875
        %1877 = vrot.lane.b32.xlu0 %v1837, 32
        %v1878 = vpop.permute.xlu0 %1877
        %1879 = vrot.lane.b32.xlu0 %v1840, 32
        %v1880 = vpop.permute.xlu0 %1879
        %1881 = vrot.lane.b32.xlu0 %v1843, 32
        %v1882 = vpop.permute.xlu0 %1881
        %1883 = vrot.lane.b32.xlu0 %v1846, 32
        %v1884 = vpop.permute.xlu0 %1883
        %1885 = vrot.lane.b32.xlu0 %v1849, 32
        %v1886 = vpop.permute.xlu0 %1885
        %1887 = vrot.lane.b32.xlu0 %v1852, 32
        %v1888 = vpop.permute.xlu0 %1887
        %1889 = vrot.lane.b32.xlu0 %v1855, 32
        %v1890 = vpop.permute.xlu0 %1889
        %1891 = vrot.lane.b32.xlu0 %v1858, 32
        %v1892 = vpop.permute.xlu0 %1891
        %1893 = vrot.lane.b32.xlu0 %v1861, 32
        %v1894 = vpop.permute.xlu0 %1893
        %1895 = vrot.lane.b32.xlu0 %v1864, 32
        %v1896 = vpop.permute.xlu0 %1895
        %v1929 = vunpack.c.l.b16 %v1366
        %v1930 = vunpack.c.l.b16 %v1367
        %v1931 = vunpack.c.l.b16 %v1369
        %v1932 = vunpack.c.l.b16 %v1370
        %v1933 = vunpack.c.l.b16 %v1372
        %v1934 = vunpack.c.l.b16 %v1373
        %v1935 = vunpack.c.l.b16 %v1375
        %v1936 = vunpack.c.l.b16 %v1376
        %v1937 = vunpack.c.l.b16 %v1378
        %v1938 = vunpack.c.l.b16 %v1379
        %v1939 = vunpack.c.l.b16 %v1381
        %v1940 = vunpack.c.l.b16 %v1382
        %v1941 = vunpack.c.l.b16 %v1384
        %v1942 = vunpack.c.l.b16 %v1385
        %v1943 = vunpack.c.l.b16 %v1387
        %v1944 = vunpack.c.l.b16 %v1388
        %v1945 = vunpack.c.l.b16 %v1390
        %v1946 = vunpack.c.l.b16 %v1391
        %v1947 = vunpack.c.l.b16 %v1393
        %v1948 = vunpack.c.l.b16 %v1394
        %v1949 = vunpack.c.l.b16 %v1396
        %v1950 = vunpack.c.l.b16 %v1397
        %v1951 = vunpack.c.l.b16 %v1399
        %v1952 = vunpack.c.l.b16 %v1400
        %v1953 = vunpack.c.l.b16 %v1402
        %v1954 = vunpack.c.l.b16 %v1403
        %v1955 = vunpack.c.l.b16 %v1405
        %v1956 = vunpack.c.l.b16 %v1406
        %v1957 = vunpack.c.l.b16 %v1408
        %v1958 = vunpack.c.l.b16 %v1409
        %v1959 = vunpack.c.l.b16 %v1411
        %v1960 = vunpack.c.l.b16 %v1412
        %v1961 = vpack.c.b16 %v1930, %v1929
        %v1962 = vpack.c.b16 %v1932, %v1931
        %v1963 = vpack.c.b16 %v1934, %v1933
        %v1964 = vpack.c.b16 %v1936, %v1935
        %v1965 = vpack.c.b16 %v1938, %v1937
        %v1966 = vpack.c.b16 %v1940, %v1939
        %v1967 = vpack.c.b16 %v1942, %v1941
        %v1968 = vpack.c.b16 %v1944, %v1943
        %v1969 = vpack.c.b16 %v1946, %v1945
        %v1970 = vpack.c.b16 %v1948, %v1947
        %v1971 = vpack.c.b16 %v1950, %v1949
        %v1972 = vpack.c.b16 %v1952, %v1951
        %v1973 = vpack.c.b16 %v1954, %v1953
        %v1974 = vpack.c.b16 %v1956, %v1955
        %v1975 = vpack.c.b16 %v1958, %v1957
        %v1976 = vpack.c.b16 %v1960, %v1959
        %1977 = vrot.lane.b32.xlu0 %v1961, 48
        %v1978 = vpop.permute.xlu0 %1977
        %1979 = vrot.lane.b32.xlu0 %v1962, 48
        %v1980 = vpop.permute.xlu0 %1979
        %1981 = vrot.lane.b32.xlu0 %v1963, 48
        %v1982 = vpop.permute.xlu0 %1981
        %1983 = vrot.lane.b32.xlu0 %v1964, 48
        %v1984 = vpop.permute.xlu0 %1983
        %1985 = vrot.lane.b32.xlu0 %v1965, 48
        %v1986 = vpop.permute.xlu0 %1985
        %1987 = vrot.lane.b32.xlu0 %v1966, 48
        %v1988 = vpop.permute.xlu0 %1987
        %1989 = vrot.lane.b32.xlu0 %v1967, 48
        %v1990 = vpop.permute.xlu0 %1989
        %1991 = vrot.lane.b32.xlu0 %v1968, 48
        %v1992 = vpop.permute.xlu0 %1991
        %1993 = vrot.lane.b32.xlu0 %v1969, 48
        %v1994 = vpop.permute.xlu0 %1993
        %1995 = vrot.lane.b32.xlu0 %v1970, 48
        %v1996 = vpop.permute.xlu0 %1995
        %1997 = vrot.lane.b32.xlu0 %v1971, 48
        %v1998 = vpop.permute.xlu0 %1997
        %1999 = vrot.lane.b32.xlu0 %v1972, 48
        %v2000 = vpop.permute.xlu0 %1999
        %2001 = vrot.lane.b32.xlu0 %v1973, 48
        %v2002 = vpop.permute.xlu0 %2001
        %2003 = vrot.lane.b32.xlu0 %v1974, 48
        %v2004 = vpop.permute.xlu0 %2003
        %2005 = vrot.lane.b32.xlu0 %v1975, 48
        %v2006 = vpop.permute.xlu0 %2005
        %2007 = vrot.lane.b32.xlu0 %v1976, 48
        %v2008 = vpop.permute.xlu0 %2007
        %v2025 = vunpack.c.l.b16 %v1368
        %v2026 = vunpack.c.l.b16 %v1371
        %v2027 = vunpack.c.l.b16 %v1374
        %v2028 = vunpack.c.l.b16 %v1377
        %v2029 = vunpack.c.l.b16 %v1380
        %v2030 = vunpack.c.l.b16 %v1383
        %v2031 = vunpack.c.l.b16 %v1386
        %v2032 = vunpack.c.l.b16 %v1389
        %v2033 = vunpack.c.l.b16 %v1392
        %v2034 = vunpack.c.l.b16 %v1395
        %v2035 = vunpack.c.l.b16 %v1398
        %v2036 = vunpack.c.l.b16 %v1401
        %v2037 = vunpack.c.l.b16 %v1404
        %v2038 = vunpack.c.l.b16 %v1407
        %v2039 = vunpack.c.l.b16 %v1410
        %v2040 = vunpack.c.l.b16 %v1413
        %v2041 = vpack.c.b16 %v2025, %v2025
        %v2042 = vpack.c.b16 %v2026, %v2026
        %v2043 = vpack.c.b16 %v2027, %v2027
        %v2044 = vpack.c.b16 %v2028, %v2028
        %v2045 = vpack.c.b16 %v2029, %v2029
        %v2046 = vpack.c.b16 %v2030, %v2030
        %v2047 = vpack.c.b16 %v2031, %v2031
        %v2048 = vpack.c.b16 %v2032, %v2032
        %v2049 = vpack.c.b16 %v2033, %v2033
        %v2050 = vpack.c.b16 %v2034, %v2034
        %v2051 = vpack.c.b16 %v2035, %v2035
        %v2052 = vpack.c.b16 %v2036, %v2036
        %v2053 = vpack.c.b16 %v2037, %v2037
        %v2054 = vpack.c.b16 %v2038, %v2038
        %v2055 = vpack.c.b16 %v2039, %v2039
        %v2056 = vpack.c.b16 %v2040, %v2040
        %v2058 = vshrl.u32 %v1961, 16
        %v2060 = vshll.u32 %v1961, 16
        %v2062 = vrot.slane %v2060, 1
        %v2063 = vor.u32 %v2058, %v2062
        %v2065 = vshll.u32 %v2041, 16
        %v2067 = vrot.slane %v2065, 1
        %v2068 = vsel %vm1591, %v2063, %v2067
        %v2070 = vshrl.u32 %v1962, 16
        %v2072 = vshll.u32 %v1962, 16
        %v2074 = vrot.slane %v2072, 1
        %v2075 = vor.u32 %v2070, %v2074
        %v2077 = vshll.u32 %v2042, 16
        %v2079 = vrot.slane %v2077, 1
        %v2080 = vsel %vm1591, %v2075, %v2079
        %v2082 = vshrl.u32 %v1963, 16
        %v2084 = vshll.u32 %v1963, 16
        %v2086 = vrot.slane %v2084, 1
        %v2087 = vor.u32 %v2082, %v2086
        %v2089 = vshll.u32 %v2043, 16
        %v2091 = vrot.slane %v2089, 1
        %v2092 = vsel %vm1591, %v2087, %v2091
        %v2094 = vshrl.u32 %v1964, 16
        %v2096 = vshll.u32 %v1964, 16
        %v2098 = vrot.slane %v2096, 1
        %v2099 = vor.u32 %v2094, %v2098
        %v2101 = vshll.u32 %v2044, 16
        %v2103 = vrot.slane %v2101, 1
        %v2104 = vsel %vm1591, %v2099, %v2103
        %v2106 = vshrl.u32 %v1965, 16
        %v2108 = vshll.u32 %v1965, 16
        %v2110 = vrot.slane %v2108, 1
        %v2111 = vor.u32 %v2106, %v2110
        %v2113 = vshll.u32 %v2045, 16
        %v2115 = vrot.slane %v2113, 1
        %v2116 = vsel %vm1591, %v2111, %v2115
        %v2118 = vshrl.u32 %v1966, 16
        %v2120 = vshll.u32 %v1966, 16
        %v2122 = vrot.slane %v2120, 1
        %v2123 = vor.u32 %v2118, %v2122
        %v2125 = vshll.u32 %v2046, 16
        %v2127 = vrot.slane %v2125, 1
        %v2128 = vsel %vm1591, %v2123, %v2127
        %v2130 = vshrl.u32 %v1967, 16
        %v2132 = vshll.u32 %v1967, 16
        %v2134 = vrot.slane %v2132, 1
        %v2135 = vor.u32 %v2130, %v2134
        %v2137 = vshll.u32 %v2047, 16
        %v2139 = vrot.slane %v2137, 1
        %v2140 = vsel %vm1591, %v2135, %v2139
        %v2142 = vshrl.u32 %v1968, 16
        %v2144 = vshll.u32 %v1968, 16
        %v2146 = vrot.slane %v2144, 1
        %v2147 = vor.u32 %v2142, %v2146
        %v2149 = vshll.u32 %v2048, 16
        %v2151 = vrot.slane %v2149, 1
        %v2152 = vsel %vm1591, %v2147, %v2151
        %v2154 = vshrl.u32 %v1969, 16
        %v2156 = vshll.u32 %v1969, 16
        %v2158 = vrot.slane %v2156, 1
        %v2159 = vor.u32 %v2154, %v2158
        %v2161 = vshll.u32 %v2049, 16
        %v2163 = vrot.slane %v2161, 1
        %v2164 = vsel %vm1591, %v2159, %v2163
        %v2166 = vshrl.u32 %v1970, 16
        %v2168 = vshll.u32 %v1970, 16
        %v2170 = vrot.slane %v2168, 1
        %v2171 = vor.u32 %v2166, %v2170
        %v2173 = vshll.u32 %v2050, 16
        %v2175 = vrot.slane %v2173, 1
        %v2176 = vsel %vm1591, %v2171, %v2175
        %v2178 = vshrl.u32 %v1971, 16
        %v2180 = vshll.u32 %v1971, 16
        %v2182 = vrot.slane %v2180, 1
        %v2183 = vor.u32 %v2178, %v2182
        %v2185 = vshll.u32 %v2051, 16
        %v2187 = vrot.slane %v2185, 1
        %v2188 = vsel %vm1591, %v2183, %v2187
        %v2190 = vshrl.u32 %v1972, 16
        %v2192 = vshll.u32 %v1972, 16
        %v2194 = vrot.slane %v2192, 1
        %v2195 = vor.u32 %v2190, %v2194
        %v2197 = vshll.u32 %v2052, 16
        %v2199 = vrot.slane %v2197, 1
        %v2200 = vsel %vm1591, %v2195, %v2199
        %v2202 = vshrl.u32 %v1973, 16
        %v2204 = vshll.u32 %v1973, 16
        %v2206 = vrot.slane %v2204, 1
        %v2207 = vor.u32 %v2202, %v2206
        %v2209 = vshll.u32 %v2053, 16
        %v2211 = vrot.slane %v2209, 1
        %v2212 = vsel %vm1591, %v2207, %v2211
        %v2214 = vshrl.u32 %v1974, 16
        %v2216 = vshll.u32 %v1974, 16
        %v2218 = vrot.slane %v2216, 1
        %v2219 = vor.u32 %v2214, %v2218
        %v2221 = vshll.u32 %v2054, 16
        %v2223 = vrot.slane %v2221, 1
        %v2224 = vsel %vm1591, %v2219, %v2223
        %v2226 = vshrl.u32 %v1975, 16
        %v2228 = vshll.u32 %v1975, 16
        %v2230 = vrot.slane %v2228, 1
        %v2231 = vor.u32 %v2226, %v2230
        %v2233 = vshll.u32 %v2055, 16
        %v2235 = vrot.slane %v2233, 1
        %v2236 = vsel %vm1591, %v2231, %v2235
        %v2238 = vshrl.u32 %v1976, 16
        %v2240 = vshll.u32 %v1976, 16
        %v2242 = vrot.slane %v2240, 1
        %v2243 = vor.u32 %v2238, %v2242
        %v2245 = vshll.u32 %v2056, 16
        %v2247 = vrot.slane %v2245, 1
        %v2248 = vsel %vm1591, %v2243, %v2247
        %2249 = vrot.lane.b32.xlu0 %v2068, 64
        %v2250 = vpop.permute.xlu0 %2249
        %2251 = vrot.lane.b32.xlu0 %v2080, 64
        %v2252 = vpop.permute.xlu0 %2251
        %2253 = vrot.lane.b32.xlu0 %v2092, 64
        %v2254 = vpop.permute.xlu0 %2253
        %2255 = vrot.lane.b32.xlu0 %v2104, 64
        %v2256 = vpop.permute.xlu0 %2255
        %2257 = vrot.lane.b32.xlu0 %v2116, 64
        %v2258 = vpop.permute.xlu0 %2257
        %2259 = vrot.lane.b32.xlu0 %v2128, 64
        %v2260 = vpop.permute.xlu0 %2259
        %2261 = vrot.lane.b32.xlu0 %v2140, 64
        %v2262 = vpop.permute.xlu0 %2261
        %2263 = vrot.lane.b32.xlu0 %v2152, 64
        %v2264 = vpop.permute.xlu0 %2263
        %2265 = vrot.lane.b32.xlu0 %v2164, 64
        %v2266 = vpop.permute.xlu0 %2265
        %2267 = vrot.lane.b32.xlu0 %v2176, 64
        %v2268 = vpop.permute.xlu0 %2267
        %2269 = vrot.lane.b32.xlu0 %v2188, 64
        %v2270 = vpop.permute.xlu0 %2269
        %2271 = vrot.lane.b32.xlu0 %v2200, 64
        %v2272 = vpop.permute.xlu0 %2271
        %2273 = vrot.lane.b32.xlu0 %v2212, 64
        %v2274 = vpop.permute.xlu0 %2273
        %2275 = vrot.lane.b32.xlu0 %v2224, 64
        %v2276 = vpop.permute.xlu0 %2275
        %2277 = vrot.lane.b32.xlu0 %v2236, 64
        %v2278 = vpop.permute.xlu0 %2277
        %2279 = vrot.lane.b32.xlu0 %v2248, 64
        %v2280 = vpop.permute.xlu0 %2279
        %v2281 = vrot.slane %v1961, 1
        %v2282 = vrot.slane %v2041, 1
        %v2283 = vsel %vm1816, %v2281, %v2282
        %v2284 = vrot.slane %v1962, 1
        %v2285 = vrot.slane %v2042, 1
        %v2286 = vsel %vm1816, %v2284, %v2285
        %v2287 = vrot.slane %v1963, 1
        %v2288 = vrot.slane %v2043, 1
        %v2289 = vsel %vm1816, %v2287, %v2288
        %v2290 = vrot.slane %v1964, 1
        %v2291 = vrot.slane %v2044, 1
        %v2292 = vsel %vm1816, %v2290, %v2291
        %v2293 = vrot.slane %v1965, 1
        %v2294 = vrot.slane %v2045, 1
        %v2295 = vsel %vm1816, %v2293, %v2294
        %v2296 = vrot.slane %v1966, 1
        %v2297 = vrot.slane %v2046, 1
        %v2298 = vsel %vm1816, %v2296, %v2297
        %v2299 = vrot.slane %v1967, 1
        %v2300 = vrot.slane %v2047, 1
        %v2301 = vsel %vm1816, %v2299, %v2300
        %v2302 = vrot.slane %v1968, 1
        %v2303 = vrot.slane %v2048, 1
        %v2304 = vsel %vm1816, %v2302, %v2303
        %v2305 = vrot.slane %v1969, 1
        %v2306 = vrot.slane %v2049, 1
        %v2307 = vsel %vm1816, %v2305, %v2306
        %v2308 = vrot.slane %v1970, 1
        %v2309 = vrot.slane %v2050, 1
        %v2310 = vsel %vm1816, %v2308, %v2309
        %v2311 = vrot.slane %v1971, 1
        %v2312 = vrot.slane %v2051, 1
        %v2313 = vsel %vm1816, %v2311, %v2312
        %v2314 = vrot.slane %v1972, 1
        %v2315 = vrot.slane %v2052, 1
        %v2316 = vsel %vm1816, %v2314, %v2315
        %v2317 = vrot.slane %v1973, 1
        %v2318 = vrot.slane %v2053, 1
        %v2319 = vsel %vm1816, %v2317, %v2318
        %v2320 = vrot.slane %v1974, 1
        %v2321 = vrot.slane %v2054, 1
        %v2322 = vsel %vm1816, %v2320, %v2321
        %v2323 = vrot.slane %v1975, 1
        %v2324 = vrot.slane %v2055, 1
        %v2325 = vsel %vm1816, %v2323, %v2324
        %v2326 = vrot.slane %v1976, 1
        %v2327 = vrot.slane %v2056, 1
        %v2328 = vsel %vm1816, %v2326, %v2327
        %2329 = vrot.lane.b32.xlu0 %v2283, 80
        %v2330 = vpop.permute.xlu0 %2329
        %2331 = vrot.lane.b32.xlu0 %v2286, 80
        %v2332 = vpop.permute.xlu0 %2331
        %2333 = vrot.lane.b32.xlu0 %v2289, 80
        %v2334 = vpop.permute.xlu0 %2333
        %2335 = vrot.lane.b32.xlu0 %v2292, 80
        %v2336 = vpop.permute.xlu0 %2335
        %2337 = vrot.lane.b32.xlu0 %v2295, 80
        %v2338 = vpop.permute.xlu0 %2337
        %2339 = vrot.lane.b32.xlu0 %v2298, 80
        %v2340 = vpop.permute.xlu0 %2339
        %2341 = vrot.lane.b32.xlu0 %v2301, 80
        %v2342 = vpop.permute.xlu0 %2341
        %2343 = vrot.lane.b32.xlu0 %v2304, 80
        %v2344 = vpop.permute.xlu0 %2343
        %2345 = vrot.lane.b32.xlu0 %v2307, 80
        %v2346 = vpop.permute.xlu0 %2345
        %2347 = vrot.lane.b32.xlu0 %v2310, 80
        %v2348 = vpop.permute.xlu0 %2347
        %2349 = vrot.lane.b32.xlu0 %v2313, 80
        %v2350 = vpop.permute.xlu0 %2349
        %2351 = vrot.lane.b32.xlu0 %v2316, 80
        %v2352 = vpop.permute.xlu0 %2351
        %2353 = vrot.lane.b32.xlu0 %v2319, 80
        %v2354 = vpop.permute.xlu0 %2353
        %2355 = vrot.lane.b32.xlu0 %v2322, 80
        %v2356 = vpop.permute.xlu0 %2355
        %2357 = vrot.lane.b32.xlu0 %v2325, 80
        %v2358 = vpop.permute.xlu0 %2357
        %2359 = vrot.lane.b32.xlu0 %v2328, 80
        %v2360 = vpop.permute.xlu0 %2359
        %v2393 = vunpack.c.l.b16 %v1415
        %v2394 = vunpack.c.l.b16 %v1416
        %v2395 = vunpack.c.l.b16 %v1418
        %v2396 = vunpack.c.l.b16 %v1419
        %v2397 = vunpack.c.l.b16 %v1421
        %v2398 = vunpack.c.l.b16 %v1422
        %v2399 = vunpack.c.l.b16 %v1424
        %v2400 = vunpack.c.l.b16 %v1425
        %v2401 = vunpack.c.l.b16 %v1427
        %v2402 = vunpack.c.l.b16 %v1428
        %v2403 = vunpack.c.l.b16 %v1430
        %v2404 = vunpack.c.l.b16 %v1431
        %v2405 = vunpack.c.l.b16 %v1433
        %v2406 = vunpack.c.l.b16 %v1434
        %v2407 = vunpack.c.l.b16 %v1436
        %v2408 = vunpack.c.l.b16 %v1437
        %v2409 = vunpack.c.l.b16 %v1439
        %v2410 = vunpack.c.l.b16 %v1440
        %v2411 = vunpack.c.l.b16 %v1442
        %v2412 = vunpack.c.l.b16 %v1443
        %v2413 = vunpack.c.l.b16 %v1445
        %v2414 = vunpack.c.l.b16 %v1446
        %v2415 = vunpack.c.l.b16 %v1448
        %v2416 = vunpack.c.l.b16 %v1449
        %v2417 = vunpack.c.l.b16 %v1451
        %v2418 = vunpack.c.l.b16 %v1452
        %v2419 = vunpack.c.l.b16 %v1454
        %v2420 = vunpack.c.l.b16 %v1455
        %v2421 = vunpack.c.l.b16 %v1457
        %v2422 = vunpack.c.l.b16 %v1458
        %v2423 = vunpack.c.l.b16 %v1460
        %v2424 = vunpack.c.l.b16 %v1461
        %v2425 = vpack.c.b16 %v2394, %v2393
        %v2426 = vpack.c.b16 %v2396, %v2395
        %v2427 = vpack.c.b16 %v2398, %v2397
        %v2428 = vpack.c.b16 %v2400, %v2399
        %v2429 = vpack.c.b16 %v2402, %v2401
        %v2430 = vpack.c.b16 %v2404, %v2403
        %v2431 = vpack.c.b16 %v2406, %v2405
        %v2432 = vpack.c.b16 %v2408, %v2407
        %v2433 = vpack.c.b16 %v2410, %v2409
        %v2434 = vpack.c.b16 %v2412, %v2411
        %v2435 = vpack.c.b16 %v2414, %v2413
        %v2436 = vpack.c.b16 %v2416, %v2415
        %v2437 = vpack.c.b16 %v2418, %v2417
        %v2438 = vpack.c.b16 %v2420, %v2419
        %v2439 = vpack.c.b16 %v2422, %v2421
        %v2440 = vpack.c.b16 %v2424, %v2423
        %2441 = vrot.lane.b32.xlu0 %v2425, 96
        %v2442 = vpop.permute.xlu0 %2441
        %2443 = vrot.lane.b32.xlu0 %v2426, 96
        %v2444 = vpop.permute.xlu0 %2443
        %2445 = vrot.lane.b32.xlu0 %v2427, 96
        %v2446 = vpop.permute.xlu0 %2445
        %2447 = vrot.lane.b32.xlu0 %v2428, 96
        %v2448 = vpop.permute.xlu0 %2447
        %2449 = vrot.lane.b32.xlu0 %v2429, 96
        %v2450 = vpop.permute.xlu0 %2449
        %2451 = vrot.lane.b32.xlu0 %v2430, 96
        %v2452 = vpop.permute.xlu0 %2451
        %2453 = vrot.lane.b32.xlu0 %v2431, 96
        %v2454 = vpop.permute.xlu0 %2453
        %2455 = vrot.lane.b32.xlu0 %v2432, 96
        %v2456 = vpop.permute.xlu0 %2455
        %2457 = vrot.lane.b32.xlu0 %v2433, 96
        %v2458 = vpop.permute.xlu0 %2457
        %2459 = vrot.lane.b32.xlu0 %v2434, 96
        %v2460 = vpop.permute.xlu0 %2459
        %2461 = vrot.lane.b32.xlu0 %v2435, 96
        %v2462 = vpop.permute.xlu0 %2461
        %2463 = vrot.lane.b32.xlu0 %v2436, 96
        %v2464 = vpop.permute.xlu0 %2463
        %2465 = vrot.lane.b32.xlu0 %v2437, 96
        %v2466 = vpop.permute.xlu0 %2465
        %2467 = vrot.lane.b32.xlu0 %v2438, 96
        %v2468 = vpop.permute.xlu0 %2467
        %2469 = vrot.lane.b32.xlu0 %v2439, 96
        %v2470 = vpop.permute.xlu0 %2469
        %2471 = vrot.lane.b32.xlu0 %v2440, 96
        %v2472 = vpop.permute.xlu0 %2471
        %v2489 = vunpack.c.l.b16 %v1417
        %v2490 = vunpack.c.l.b16 %v1420
        %v2491 = vunpack.c.l.b16 %v1423
        %v2492 = vunpack.c.l.b16 %v1426
        %v2493 = vunpack.c.l.b16 %v1429
        %v2494 = vunpack.c.l.b16 %v1432
        %v2495 = vunpack.c.l.b16 %v1435
        %v2496 = vunpack.c.l.b16 %v1438
        %v2497 = vunpack.c.l.b16 %v1441
        %v2498 = vunpack.c.l.b16 %v1444
        %v2499 = vunpack.c.l.b16 %v1447
        %v2500 = vunpack.c.l.b16 %v1450
        %v2501 = vunpack.c.l.b16 %v1453
        %v2502 = vunpack.c.l.b16 %v1456
        %v2503 = vunpack.c.l.b16 %v1459
        %v2504 = vunpack.c.l.b16 %v1462
        %v2505 = vpack.c.b16 %v2489, %v2489
        %v2506 = vpack.c.b16 %v2490, %v2490
        %v2507 = vpack.c.b16 %v2491, %v2491
        %v2508 = vpack.c.b16 %v2492, %v2492
        %v2509 = vpack.c.b16 %v2493, %v2493
        %v2510 = vpack.c.b16 %v2494, %v2494
        %v2511 = vpack.c.b16 %v2495, %v2495
        %v2512 = vpack.c.b16 %v2496, %v2496
        %v2513 = vpack.c.b16 %v2497, %v2497
        %v2514 = vpack.c.b16 %v2498, %v2498
        %v2515 = vpack.c.b16 %v2499, %v2499
        %v2516 = vpack.c.b16 %v2500, %v2500
        %v2517 = vpack.c.b16 %v2501, %v2501
        %v2518 = vpack.c.b16 %v2502, %v2502
        %v2519 = vpack.c.b16 %v2503, %v2503
        %v2520 = vpack.c.b16 %v2504, %v2504
        %v2522 = vshrl.u32 %v2425, 16
        %v2524 = vshll.u32 %v2425, 16
        %v2526 = vrot.slane %v2524, 1
        %v2527 = vor.u32 %v2522, %v2526
        %v2529 = vshll.u32 %v2505, 16
        %v2531 = vrot.slane %v2529, 1
        %v2532 = vsel %vm1591, %v2527, %v2531
        %v2534 = vshrl.u32 %v2426, 16
        %v2536 = vshll.u32 %v2426, 16
        %v2538 = vrot.slane %v2536, 1
        %v2539 = vor.u32 %v2534, %v2538
        %v2541 = vshll.u32 %v2506, 16
        %v2543 = vrot.slane %v2541, 1
        %v2544 = vsel %vm1591, %v2539, %v2543
        %v2546 = vshrl.u32 %v2427, 16
        %v2548 = vshll.u32 %v2427, 16
        %v2550 = vrot.slane %v2548, 1
        %v2551 = vor.u32 %v2546, %v2550
        %v2553 = vshll.u32 %v2507, 16
        %v2555 = vrot.slane %v2553, 1
        %v2556 = vsel %vm1591, %v2551, %v2555
        %v2558 = vshrl.u32 %v2428, 16
        %v2560 = vshll.u32 %v2428, 16
        %v2562 = vrot.slane %v2560, 1
        %v2563 = vor.u32 %v2558, %v2562
        %v2565 = vshll.u32 %v2508, 16
        %v2567 = vrot.slane %v2565, 1
        %v2568 = vsel %vm1591, %v2563, %v2567
        %v2570 = vshrl.u32 %v2429, 16
        %v2572 = vshll.u32 %v2429, 16
        %v2574 = vrot.slane %v2572, 1
        %v2575 = vor.u32 %v2570, %v2574
        %v2577 = vshll.u32 %v2509, 16
        %v2579 = vrot.slane %v2577, 1
        %v2580 = vsel %vm1591, %v2575, %v2579
        %v2582 = vshrl.u32 %v2430, 16
        %v2584 = vshll.u32 %v2430, 16
        %v2586 = vrot.slane %v2584, 1
        %v2587 = vor.u32 %v2582, %v2586
        %v2589 = vshll.u32 %v2510, 16
        %v2591 = vrot.slane %v2589, 1
        %v2592 = vsel %vm1591, %v2587, %v2591
        %v2594 = vshrl.u32 %v2431, 16
        %v2596 = vshll.u32 %v2431, 16
        %v2598 = vrot.slane %v2596, 1
        %v2599 = vor.u32 %v2594, %v2598
        %v2601 = vshll.u32 %v2511, 16
        %v2603 = vrot.slane %v2601, 1
        %v2604 = vsel %vm1591, %v2599, %v2603
        %v2606 = vshrl.u32 %v2432, 16
        %v2608 = vshll.u32 %v2432, 16
        %v2610 = vrot.slane %v2608, 1
        %v2611 = vor.u32 %v2606, %v2610
        %v2613 = vshll.u32 %v2512, 16
        %v2615 = vrot.slane %v2613, 1
        %v2616 = vsel %vm1591, %v2611, %v2615
        %v2618 = vshrl.u32 %v2433, 16
        %v2620 = vshll.u32 %v2433, 16
        %v2622 = vrot.slane %v2620, 1
        %v2623 = vor.u32 %v2618, %v2622
        %v2625 = vshll.u32 %v2513, 16
        %v2627 = vrot.slane %v2625, 1
        %v2628 = vsel %vm1591, %v2623, %v2627
        %v2630 = vshrl.u32 %v2434, 16
        %v2632 = vshll.u32 %v2434, 16
        %v2634 = vrot.slane %v2632, 1
        %v2635 = vor.u32 %v2630, %v2634
        %v2637 = vshll.u32 %v2514, 16
        %v2639 = vrot.slane %v2637, 1
        %v2640 = vsel %vm1591, %v2635, %v2639
        %v2642 = vshrl.u32 %v2435, 16
        %v2644 = vshll.u32 %v2435, 16
        %v2646 = vrot.slane %v2644, 1
        %v2647 = vor.u32 %v2642, %v2646
        %v2649 = vshll.u32 %v2515, 16
        %v2651 = vrot.slane %v2649, 1
        %v2652 = vsel %vm1591, %v2647, %v2651
        %v2654 = vshrl.u32 %v2436, 16
        %v2656 = vshll.u32 %v2436, 16
        %v2658 = vrot.slane %v2656, 1
        %v2659 = vor.u32 %v2654, %v2658
        %v2661 = vshll.u32 %v2516, 16
        %v2663 = vrot.slane %v2661, 1
        %v2664 = vsel %vm1591, %v2659, %v2663
        %v2666 = vshrl.u32 %v2437, 16
        %v2668 = vshll.u32 %v2437, 16
        %v2670 = vrot.slane %v2668, 1
        %v2671 = vor.u32 %v2666, %v2670
        %v2673 = vshll.u32 %v2517, 16
        %v2675 = vrot.slane %v2673, 1
        %v2676 = vsel %vm1591, %v2671, %v2675
        %v2678 = vshrl.u32 %v2438, 16
        %v2680 = vshll.u32 %v2438, 16
        %v2682 = vrot.slane %v2680, 1
        %v2683 = vor.u32 %v2678, %v2682
        %v2685 = vshll.u32 %v2518, 16
        %v2687 = vrot.slane %v2685, 1
        %v2688 = vsel %vm1591, %v2683, %v2687
        %v2690 = vshrl.u32 %v2439, 16
        %v2692 = vshll.u32 %v2439, 16
        %v2694 = vrot.slane %v2692, 1
        %v2695 = vor.u32 %v2690, %v2694
        %v2697 = vshll.u32 %v2519, 16
        %v2699 = vrot.slane %v2697, 1
        %v2700 = vsel %vm1591, %v2695, %v2699
        %v2702 = vshrl.u32 %v2440, 16
        %v2704 = vshll.u32 %v2440, 16
        %v2706 = vrot.slane %v2704, 1
        %v2707 = vor.u32 %v2702, %v2706
        %v2709 = vshll.u32 %v2520, 16
        %v2711 = vrot.slane %v2709, 1
        %v2712 = vsel %vm1591, %v2707, %v2711
        %2713 = vrot.lane.b32.xlu0 %v2532, 112
        %v2714 = vpop.permute.xlu0 %2713
        %2715 = vrot.lane.b32.xlu0 %v2544, 112
        %v2716 = vpop.permute.xlu0 %2715
        %2717 = vrot.lane.b32.xlu0 %v2556, 112
        %v2718 = vpop.permute.xlu0 %2717
        %2719 = vrot.lane.b32.xlu0 %v2568, 112
        %v2720 = vpop.permute.xlu0 %2719
        %2721 = vrot.lane.b32.xlu0 %v2580, 112
        %v2722 = vpop.permute.xlu0 %2721
        %2723 = vrot.lane.b32.xlu0 %v2592, 112
        %v2724 = vpop.permute.xlu0 %2723
        %2725 = vrot.lane.b32.xlu0 %v2604, 112
        %v2726 = vpop.permute.xlu0 %2725
        %2727 = vrot.lane.b32.xlu0 %v2616, 112
        %v2728 = vpop.permute.xlu0 %2727
        %2729 = vrot.lane.b32.xlu0 %v2628, 112
        %v2730 = vpop.permute.xlu0 %2729
        %2731 = vrot.lane.b32.xlu0 %v2640, 112
        %v2732 = vpop.permute.xlu0 %2731
        %2733 = vrot.lane.b32.xlu0 %v2652, 112
        %v2734 = vpop.permute.xlu0 %2733
        %2735 = vrot.lane.b32.xlu0 %v2664, 112
        %v2736 = vpop.permute.xlu0 %2735
        %2737 = vrot.lane.b32.xlu0 %v2676, 112
        %v2738 = vpop.permute.xlu0 %2737
        %2739 = vrot.lane.b32.xlu0 %v2688, 112
        %v2740 = vpop.permute.xlu0 %2739
        %2741 = vrot.lane.b32.xlu0 %v2700, 112
        %v2742 = vpop.permute.xlu0 %2741
        %2743 = vrot.lane.b32.xlu0 %v2712, 112
        %v2744 = vpop.permute.xlu0 %2743
        %v2745 = vrot.slane %v2425, 1
        %v2746 = vrot.slane %v2505, 1
        %v2747 = vsel %vm1816, %v2745, %v2746
        %v2748 = vrot.slane %v2426, 1
        %v2749 = vrot.slane %v2506, 1
        %v2750 = vsel %vm1816, %v2748, %v2749
        %v2751 = vrot.slane %v2427, 1
        %v2752 = vrot.slane %v2507, 1
        %v2753 = vsel %vm1816, %v2751, %v2752
        %v2754 = vrot.slane %v2428, 1
        %v2755 = vrot.slane %v2508, 1
        %v2756 = vsel %vm1816, %v2754, %v2755
        %v2757 = vrot.slane %v2429, 1
        %v2758 = vrot.slane %v2509, 1
        %v2759 = vsel %vm1816, %v2757, %v2758
        %v2760 = vrot.slane %v2430, 1
        %v2761 = vrot.slane %v2510, 1
        %v2762 = vsel %vm1816, %v2760, %v2761
        %v2763 = vrot.slane %v2431, 1
        %v2764 = vrot.slane %v2511, 1
        %v2765 = vsel %vm1816, %v2763, %v2764
        %v2766 = vrot.slane %v2432, 1
        %v2767 = vrot.slane %v2512, 1
        %v2768 = vsel %vm1816, %v2766, %v2767
        %v2769 = vrot.slane %v2433, 1
        %v2770 = vrot.slane %v2513, 1
        %v2771 = vsel %vm1816, %v2769, %v2770
        %v2772 = vrot.slane %v2434, 1
        %v2773 = vrot.slane %v2514, 1
        %v2774 = vsel %vm1816, %v2772, %v2773
        %v2775 = vrot.slane %v2435, 1
        %v2776 = vrot.slane %v2515, 1
        %v2777 = vsel %vm1816, %v2775, %v2776
        %v2778 = vrot.slane %v2436, 1
        %v2779 = vrot.slane %v2516, 1
        %v2780 = vsel %vm1816, %v2778, %v2779
        %v2781 = vrot.slane %v2437, 1
        %v2782 = vrot.slane %v2517, 1
        %v2783 = vsel %vm1816, %v2781, %v2782
        %v2784 = vrot.slane %v2438, 1
        %v2785 = vrot.slane %v2518, 1
        %v2786 = vsel %vm1816, %v2784, %v2785
        %v2787 = vrot.slane %v2439, 1
        %v2788 = vrot.slane %v2519, 1
        %v2789 = vsel %vm1816, %v2787, %v2788
        %v2790 = vrot.slane %v2440, 1
        %v2791 = vrot.slane %v2520, 1
        %v2792 = vsel %vm1816, %v2790, %v2791
        %vm2793 = vcmask 130048
        %v2795 = vsel %vm2793, %v1527, %v1785
        %v2797 = vsel %vm2793, %v1528, %v1787
        %v2799 = vsel %vm2793, %v1529, %v1789
        %v2801 = vsel %vm2793, %v1530, %v1791
        %v2803 = vsel %vm2793, %v1531, %v1793
        %v2805 = vsel %vm2793, %v1532, %v1795
        %v2807 = vsel %vm2793, %v1533, %v1797
        %v2809 = vsel %vm2793, %v1534, %v1799
        %v2811 = vsel %vm2793, %v1535, %v1801
        %v2813 = vsel %vm2793, %v1536, %v1803
        %v2815 = vsel %vm2793, %v1537, %v1805
        %v2817 = vsel %vm2793, %v1538, %v1807
        %v2819 = vsel %vm2793, %v1539, %v1809
        %v2821 = vsel %vm2793, %v1540, %v1811
        %v2823 = vsel %vm2793, %v1541, %v1813
        %v2825 = vsel %vm2793, %v1542, %v1815
        %vm2826 = vcmask 261120
        %v2828 = vsel %vm2826, %v2795, %v1866
        %v2830 = vsel %vm2826, %v2797, %v1868
        %v2832 = vsel %vm2826, %v2799, %v1870
        %v2834 = vsel %vm2826, %v2801, %v1872
        %v2836 = vsel %vm2826, %v2803, %v1874
        %v2838 = vsel %vm2826, %v2805, %v1876
        %v2840 = vsel %vm2826, %v2807, %v1878
        %v2842 = vsel %vm2826, %v2809, %v1880
        %v2844 = vsel %vm2826, %v2811, %v1882
        %v2846 = vsel %vm2826, %v2813, %v1884
        %v2848 = vsel %vm2826, %v2815, %v1886
        %v2850 = vsel %vm2826, %v2817, %v1888
        %v2852 = vsel %vm2826, %v2819, %v1890
        %v2854 = vsel %vm2826, %v2821, %v1892
        %v2856 = vsel %vm2826, %v2823, %v1894
        %v2858 = vsel %vm2826, %v2825, %v1896
        %vm2859 = vcmask 392192
        %v2861 = vsel %vm2859, %v2828, %v1978
        %v2863 = vsel %vm2859, %v2830, %v1980
        %v2865 = vsel %vm2859, %v2832, %v1982
        %v2867 = vsel %vm2859, %v2834, %v1984
        %v2869 = vsel %vm2859, %v2836, %v1986
        %v2871 = vsel %vm2859, %v2838, %v1988
        %v2873 = vsel %vm2859, %v2840, %v1990
        %v2875 = vsel %vm2859, %v2842, %v1992
        %v2877 = vsel %vm2859, %v2844, %v1994
        %v2879 = vsel %vm2859, %v2846, %v1996
        %v2881 = vsel %vm2859, %v2848, %v1998
        %v2883 = vsel %vm2859, %v2850, %v2000
        %v2885 = vsel %vm2859, %v2852, %v2002
        %v2887 = vsel %vm2859, %v2854, %v2004
        %v2889 = vsel %vm2859, %v2856, %v2006
        %v2891 = vsel %vm2859, %v2858, %v2008
        %vm2892 = vcmask 523264
        %v2894 = vsel %vm2892, %v2861, %v2250
        %v2896 = vsel %vm2892, %v2863, %v2252
        %v2898 = vsel %vm2892, %v2865, %v2254
        %v2900 = vsel %vm2892, %v2867, %v2256
        %v2902 = vsel %vm2892, %v2869, %v2258
        %v2904 = vsel %vm2892, %v2871, %v2260
        %v2906 = vsel %vm2892, %v2873, %v2262
        %v2908 = vsel %vm2892, %v2875, %v2264
        %v2910 = vsel %vm2892, %v2877, %v2266
        %v2912 = vsel %vm2892, %v2879, %v2268
        %v2914 = vsel %vm2892, %v2881, %v2270
        %v2916 = vsel %vm2892, %v2883, %v2272
        %v2918 = vsel %vm2892, %v2885, %v2274
        %v2920 = vsel %vm2892, %v2887, %v2276
        %v2922 = vsel %vm2892, %v2889, %v2278
        %v2924 = vsel %vm2892, %v2891, %v2280
        %vm2925 = vcmask 654336
        %v2927 = vsel %vm2925, %v2894, %v2330
        %v2929 = vsel %vm2925, %v2896, %v2332
        %v2931 = vsel %vm2925, %v2898, %v2334
        %v2933 = vsel %vm2925, %v2900, %v2336
        %v2935 = vsel %vm2925, %v2902, %v2338
        %v2937 = vsel %vm2925, %v2904, %v2340
        %v2939 = vsel %vm2925, %v2906, %v2342
        %v2941 = vsel %vm2925, %v2908, %v2344
        %v2943 = vsel %vm2925, %v2910, %v2346
        %v2945 = vsel %vm2925, %v2912, %v2348
        %v2947 = vsel %vm2925, %v2914, %v2350
        %v2949 = vsel %vm2925, %v2916, %v2352
        %v2951 = vsel %vm2925, %v2918, %v2354
        %v2953 = vsel %vm2925, %v2920, %v2356
        %v2955 = vsel %vm2925, %v2922, %v2358
        %v2957 = vsel %vm2925, %v2924, %v2360
        %vm2958 = vcmask 785408
        %v2960 = vsel %vm2958, %v2927, %v2442
        %v2962 = vsel %vm2958, %v2929, %v2444
        %v2964 = vsel %vm2958, %v2931, %v2446
        %v2966 = vsel %vm2958, %v2933, %v2448
        %v2968 = vsel %vm2958, %v2935, %v2450
        %v2970 = vsel %vm2958, %v2937, %v2452
        %v2972 = vsel %vm2958, %v2939, %v2454
        %v2974 = vsel %vm2958, %v2941, %v2456
        %v2976 = vsel %vm2958, %v2943, %v2458
        %v2978 = vsel %vm2958, %v2945, %v2460
        %v2980 = vsel %vm2958, %v2947, %v2462
        %v2982 = vsel %vm2958, %v2949, %v2464
        %v2984 = vsel %vm2958, %v2951, %v2466
        %v2986 = vsel %vm2958, %v2953, %v2468
        %v2988 = vsel %vm2958, %v2955, %v2470
        %v2990 = vsel %vm2958, %v2957, %v2472
        %vm2991 = vcmask 916480
        %v2993 = vsel %vm2991, %v2960, %v2714
        %v2996 = vsel %vm2991, %v2962, %v2716
        %v2999 = vsel %vm2991, %v2964, %v2718
        %v3002 = vsel %vm2991, %v2966, %v2720
        %v3005 = vsel %vm2991, %v2968, %v2722
        %v3008 = vsel %vm2991, %v2970, %v2724
        %v3011 = vsel %vm2991, %v2972, %v2726
        %v3014 = vsel %vm2991, %v2974, %v2728
        %v3017 = vsel %vm2991, %v2976, %v2730
        %v3020 = vsel %vm2991, %v2978, %v2732
        %v3023 = vsel %vm2991, %v2980, %v2734
        %v3026 = vsel %vm2991, %v2982, %v2736
        %v3029 = vsel %vm2991, %v2984, %v2738
        %v3032 = vsel %vm2991, %v2986, %v2740
        %v3035 = vsel %vm2991, %v2988, %v2742
        %v3038 = vsel %vm2991, %v2990, %v2744
        %v3040 = vld [vmem:[%s2] sm:$0xf]
        %v3041 = vld [vmem:[%s2 + $0x4] sm:$0xf]
        %v3042 = vld [vmem:[%s2 + $0x8] sm:$0xf]
        %v3043 = vld [vmem:[%s2 + $0xc] sm:$0xf]
        %v3044 = vld [vmem:[%s2 + $0x10] sm:$0xf]
        %v3045 = vld [vmem:[%s2 + $0x14] sm:$0xf]
        %v3046 = vld [vmem:[%s2 + $0x18] sm:$0xf]
        %v3047 = vld [vmem:[%s2 + $0x1c] sm:$0xf]
        %v3048 = vld [vmem:[%s2 + $0x20] sm:$0xf]
        %v3049 = vld [vmem:[%s2 + $0x24] sm:$0xf]
        %v3050 = vld [vmem:[%s2 + $0x28] sm:$0xf]
        %v3051 = vld [vmem:[%s2 + $0x2c] sm:$0xf]
        %v3052 = vld [vmem:[%s2 + $0x30] sm:$0xf]
        %v3053 = vld [vmem:[%s2 + $0x34] sm:$0xf]
        %v3054 = vld [vmem:[%s2 + $0x38] sm:$0xf]
        %v3055 = vld [vmem:[%s2 + $0x3c] sm:$0xf]
        %v3056 = vld [vmem:[%s2 + $0x40] sm:$0xf]
        %v3057 = vld [vmem:[%s2 + $0x44] sm:$0xf]
        %v3058 = vld [vmem:[%s3] sm:$0x1]
        %v3060 = vlaneseq
        %v3061 = vshrl.u32 %v3060, 7
        %v3062 = vsub.s32 0, %v3061
        %v3063 = vrot.slane %v3058, %v3062
        %v3083 = vunpack.c.l.b16 %v3040
        %v3084 = vunpack.c.l.b16 %v3041
        %v3085 = vunpack.c.l.b16 %v3042
        %v3086 = vunpack.c.l.b16 %v3043
        %v3087 = vunpack.c.l.b16 %v3044
        %v3088 = vunpack.c.l.b16 %v3045
        %v3089 = vunpack.c.l.b16 %v3046
        %v3090 = vunpack.c.l.b16 %v3047
        %v3091 = vunpack.c.l.b16 %v3048
        %v3092 = vunpack.c.l.b16 %v3049
        %v3093 = vunpack.c.l.b16 %v3050
        %v3094 = vunpack.c.l.b16 %v3051
        %v3095 = vunpack.c.l.b16 %v3052
        %v3096 = vunpack.c.l.b16 %v3053
        %v3097 = vunpack.c.l.b16 %v3054
        %v3098 = vunpack.c.l.b16 %v3055
        %v3099 = vunpack.c.l.b16 %v3056
        %v3100 = vunpack.c.l.b16 %v3057
        %v3101 = vpack.c.b16 %v3084, %v3083
        %v3102 = vpack.c.b16 %v3086, %v3085
        %v3103 = vpack.c.b16 %v3088, %v3087
        %v3104 = vpack.c.b16 %v3090, %v3089
        %v3105 = vpack.c.b16 %v3092, %v3091
        %v3106 = vpack.c.b16 %v3094, %v3093
        %v3107 = vpack.c.b16 %v3096, %v3095
        %v3108 = vpack.c.b16 %v3098, %v3097
        %v3109 = vpack.c.b16 %v3100, %v3099
        %v3120 = vsel %vm2793, %v2747, 0
        %v3123 = vsel %vm2793, %v2750, 0
        %v3126 = vsel %vm2793, %v2753, 0
        %v3129 = vsel %vm2793, %v2756, 0
        %v3132 = vsel %vm2793, %v2759, 0
        %v3135 = vsel %vm2793, %v2762, 0
        %v3138 = vsel %vm2793, %v2765, 0
        %v3141 = vsel %vm2793, %v2768, 0
        %v3144 = vsel %vm2793, %v2771, 0
        %v3147 = vsel %vm2793, %v2774, 0
        %v3150 = vsel %vm2793, %v2777, 0
        %v3153 = vsel %vm2793, %v2780, 0
        %v3156 = vsel %vm2793, %v2783, 0
        %v3159 = vsel %vm2793, %v2786, 0
        %v3162 = vsel %vm2793, %v2789, 0
        %v3165 = vsel %vm2793, %v2792, 0
        %3167 = vmatprep.subr.bf16.mxu0 0
        %3168 = vmatpush1.bf16.msra.mxu0 %v3101
        %3169 = vmatprep.subr.bf16.mxu0 0
        %3170 = vmatpush1.bf16.msra.mxu0 %v3102
        %3171 = vmatprep.subr.bf16.mxu0 0
        %3172 = vmatpush1.bf16.msra.mxu0 %v3103
        %3173 = vmatprep.subr.bf16.mxu0 0
        %3174 = vmatpush1.bf16.msra.mxu0 %v3104
        %3175 = vmatprep.subr.bf16.mxu0 0
        %3176 = vmatpush1.bf16.msra.mxu0 %v3105
        %3177 = vmatprep.subr.bf16.mxu0 0
        %3178 = vmatpush1.bf16.msra.mxu0 %v3106
        %3179 = vmatprep.subr.bf16.mxu0 0
        %3180 = vmatpush1.bf16.msra.mxu0 %v3107
        %3181 = vmatprep.subr.bf16.mxu0 0
        %3182 = vmatpush1.bf16.msra.mxu0 %v3108
        %3183 = vmatprep.subr.bf16.mxu0 0
        %3184 = vmatpush1.bf16.msra.mxu0 %v3109
        %3185 = vmatprep.subr.bf16.mxu0 0
        %3186 = vmatpush1.bf16.msra.mxu0 0
        %3187 = vmatprep.subr.bf16.mxu0 0
        %3188 = vmatpush1.bf16.msra.mxu0 0
        %3189 = vmatprep.subr.bf16.mxu0 0
        %3190 = vmatpush1.bf16.msra.mxu0 0
        %3191 = vmatprep.subr.bf16.mxu0 0
        %3192 = vmatpush1.bf16.msra.mxu0 0
        %3193 = vmatprep.subr.bf16.mxu0 0
        %3194 = vmatpush1.bf16.msra.mxu0 0
        %3195 = vmatprep.subr.bf16.mxu0 0
        %3196 = vmatpush1.bf16.msra.mxu0 0
        %3197 = vmatprep.subr.bf16.mxu0 0
        %3198 = vmatpush1.bf16.msra.mxu0 0
        %3199 = vmatprep.mubr.bf16.mxu0 %v3120
        %3200 = vmatmul.mubr.bf16.gmra.mrb[0].mxu0 %v2993
        %v3201 = vpop.f32.mrb[0].mxu0
        %v3202 = vadd.f32 %v3063, %v3201
        %v3203 = vpop.f32.mrb[0].mxu0
        %v3204 = vpop.f32.mrb[0].mxu0
        %v3205 = vadd.f32 %v3063, %v3204
        %v3206 = vpop.f32.mrb[0].mxu0
        %3207 = vmatprep.mubr.bf16.mxu0 %v3123
        %3208 = vmatmul.mubr.bf16.gmra.mrb[0].mxu0 %v2996
        %v3209 = vpop.f32.mrb[0].mxu0
        %v3210 = vadd.f32 %v3063, %v3209
        %v3211 = vpop.f32.mrb[0].mxu0
        %v3212 = vpop.f32.mrb[0].mxu0
        %v3213 = vadd.f32 %v3063, %v3212
        %v3214 = vpop.f32.mrb[0].mxu0
        %3215 = vmatprep.mubr.bf16.mxu0 %v3126
        %3216 = vmatmul.mubr.bf16.gmra.mrb[0].mxu0 %v2999
        %v3217 = vpop.f32.mrb[0].mxu0
        %v3218 = vadd.f32 %v3063, %v3217
        %v3219 = vpop.f32.mrb[0].mxu0
        %v3220 = vpop.f32.mrb[0].mxu0
        %v3221 = vadd.f32 %v3063, %v3220
        %v3222 = vpop.f32.mrb[0].mxu0
        %3223 = vmatprep.mubr.bf16.mxu0 %v3129
        %3224 = vmatmul.mubr.bf16.gmra.mrb[0].mxu0 %v3002
        %v3225 = vpop.f32.mrb[0].mxu0
        %v3226 = vadd.f32 %v3063, %v3225
        %v3227 = vpop.f32.mrb[0].mxu0
        %v3228 = vpop.f32.mrb[0].mxu0
        %v3229 = vadd.f32 %v3063, %v3228
        %v3230 = vpop.f32.mrb[0].mxu0
        %3231 = vmatprep.mubr.bf16.mxu0 %v3132
        %3232 = vmatmul.mubr.bf16.gmra.mrb[0].mxu0 %v3005
        %v3233 = vpop.f32.mrb[0].mxu0
        %v3234 = vadd.f32 %v3063, %v3233
        %v3235 = vpop.f32.mrb[0].mxu0
        %v3236 = vpop.f32.mrb[0].mxu0
        %v3237 = vadd.f32 %v3063, %v3236
        %v3238 = vpop.f32.mrb[0].mxu0
        %3239 = vmatprep.mubr.bf16.mxu0 %v3135
        %3240 = vmatmul.mubr.bf16.gmra.mrb[0].mxu0 %v3008
        %v3241 = vpop.f32.mrb[0].mxu0
        %v3242 = vadd.f32 %v3063, %v3241
        %v3243 = vpop.f32.mrb[0].mxu0
        %v3244 = vpop.f32.mrb[0].mxu0
        %v3245 = vadd.f32 %v3063, %v3244
        %v3246 = vpop.f32.mrb[0].mxu0
        %3247 = vmatprep.mubr.bf16.mxu0 %v3138
        %3248 = vmatmul.mubr.bf16.gmra.mrb[0].mxu0 %v3011
        %v3249 = vpop.f32.mrb[0].mxu0
        %v3250 = vadd.f32 %v3063, %v3249
        %v3251 = vpop.f32.mrb[0].mxu0
        %v3252 = vpop.f32.mrb[0].mxu0
        %v3253 = vadd.f32 %v3063, %v3252
        %v3254 = vpop.f32.mrb[0].mxu0
        %3255 = vmatprep.mubr.bf16.mxu0 %v3141
        %3256 = vmatmul.mubr.bf16.gmra.mrb[0].mxu0 %v3014
        %v3257 = vpop.f32.mrb[0].mxu0
        %v3258 = vadd.f32 %v3063, %v3257
        %v3259 = vpop.f32.mrb[0].mxu0
        %v3260 = vpop.f32.mrb[0].mxu0
        %v3261 = vadd.f32 %v3063, %v3260
        %v3262 = vpop.f32.mrb[0].mxu0
        %3263 = vmatprep.mubr.bf16.mxu0 %v3144
        %3264 = vmatmul.mubr.bf16.gmra.mrb[0].mxu0 %v3017
        %v3265 = vpop.f32.mrb[0].mxu0
        %v3266 = vadd.f32 %v3063, %v3265
        %v3267 = vpop.f32.mrb[0].mxu0
        %v3268 = vpop.f32.mrb[0].mxu0
        %v3269 = vadd.f32 %v3063, %v3268
        %v3270 = vpop.f32.mrb[0].mxu0
        %3271 = vmatprep.mubr.bf16.mxu0 %v3147
        %3272 = vmatmul.mubr.bf16.gmra.mrb[0].mxu0 %v3020
        %v3273 = vpop.f32.mrb[0].mxu0
        %v3274 = vadd.f32 %v3063, %v3273
        %v3275 = vpop.f32.mrb[0].mxu0
        %v3276 = vpop.f32.mrb[0].mxu0
        %v3277 = vadd.f32 %v3063, %v3276
        %v3278 = vpop.f32.mrb[0].mxu0
        %3279 = vmatprep.mubr.bf16.mxu0 %v3150
        %3280 = vmatmul.mubr.bf16.gmra.mrb[0].mxu0 %v3023
        %v3281 = vpop.f32.mrb[0].mxu0
        %v3282 = vadd.f32 %v3063, %v3281
        %v3283 = vpop.f32.mrb[0].mxu0
        %v3284 = vpop.f32.mrb[0].mxu0
        %v3285 = vadd.f32 %v3063, %v3284
        %v3286 = vpop.f32.mrb[0].mxu0
        %3287 = vmatprep.mubr.bf16.mxu0 %v3153
        %3288 = vmatmul.mubr.bf16.gmra.mrb[0].mxu0 %v3026
        %v3289 = vpop.f32.mrb[0].mxu0
        %v3290 = vadd.f32 %v3063, %v3289
        %v3291 = vpop.f32.mrb[0].mxu0
        %v3292 = vpop.f32.mrb[0].mxu0
        %v3293 = vadd.f32 %v3063, %v3292
        %v3294 = vpop.f32.mrb[0].mxu0
        %3295 = vmatprep.mubr.bf16.mxu0 %v3156
        %3296 = vmatmul.mubr.bf16.gmra.mrb[0].mxu0 %v3029
        %v3297 = vpop.f32.mrb[0].mxu0
        %v3298 = vadd.f32 %v3063, %v3297
        %v3299 = vpop.f32.mrb[0].mxu0
        %v3300 = vpop.f32.mrb[0].mxu0
        %v3301 = vadd.f32 %v3063, %v3300
        %v3302 = vpop.f32.mrb[0].mxu0
        %3303 = vmatprep.mubr.bf16.mxu0 %v3159
        %3304 = vmatmul.mubr.bf16.gmra.mrb[0].mxu0 %v3032
        %v3305 = vpop.f32.mrb[0].mxu0
        %v3306 = vadd.f32 %v3063, %v3305
        %v3307 = vpop.f32.mrb[0].mxu0
        %v3308 = vpop.f32.mrb[0].mxu0
        %v3309 = vadd.f32 %v3063, %v3308
        %v3310 = vpop.f32.mrb[0].mxu0
        %3311 = vmatprep.mubr.bf16.mxu0 %v3162
        %3312 = vmatmul.mubr.bf16.gmra.mrb[0].mxu0 %v3035
        %v3313 = vpop.f32.mrb[0].mxu0
        %v3314 = vadd.f32 %v3063, %v3313
        %v3315 = vpop.f32.mrb[0].mxu0
        %v3316 = vpop.f32.mrb[0].mxu0
        %v3317 = vadd.f32 %v3063, %v3316
        %v3318 = vpop.f32.mrb[0].mxu0
        %3319 = vmatprep.mubr.bf16.mxu0 %v3165
        %3320 = vmatmul.mubr.bf16.gmra.mrb[0].mxu0 %v3038
        %v3321 = vpop.f32.mrb[0].mxu0
        %v3322 = vadd.f32 %v3063, %v3321
        %v3323 = vpop.f32.mrb[0].mxu0
        %v3324 = vpop.f32.mrb[0].mxu0
        %v3325 = vadd.f32 %v3063, %v3324
        %v3326 = vpop.f32.mrb[0].mxu0
        %3327 = vdwg.mxu0
        %vm3328 = vcmp.gt.f32.partialorder %v3202, 0.0
        %vm3329 = vcmp.gt.f32.partialorder %v3205, 0.0
        %vm3330 = vcmp.gt.f32.partialorder %v3210, 0.0
        %vm3331 = vcmp.gt.f32.partialorder %v3213, 0.0
        %vm3332 = vcmp.gt.f32.partialorder %v3218, 0.0
        %vm3333 = vcmp.gt.f32.partialorder %v3221, 0.0
        %vm3334 = vcmp.gt.f32.partialorder %v3226, 0.0
        %vm3335 = vcmp.gt.f32.partialorder %v3229, 0.0
        %vm3336 = vcmp.gt.f32.partialorder %v3234, 0.0
        %vm3337 = vcmp.gt.f32.partialorder %v3237, 0.0
        %vm3338 = vcmp.gt.f32.partialorder %v3242, 0.0
        %vm3339 = vcmp.gt.f32.partialorder %v3245, 0.0
        %vm3340 = vcmp.gt.f32.partialorder %v3250, 0.0
        %vm3341 = vcmp.gt.f32.partialorder %v3253, 0.0
        %vm3342 = vcmp.gt.f32.partialorder %v3258, 0.0
        %vm3343 = vcmp.gt.f32.partialorder %v3261, 0.0
        %vm3344 = vcmp.gt.f32.partialorder %v3266, 0.0
        %vm3345 = vcmp.gt.f32.partialorder %v3269, 0.0
        %vm3346 = vcmp.gt.f32.partialorder %v3274, 0.0
        %vm3347 = vcmp.gt.f32.partialorder %v3277, 0.0
        %vm3348 = vcmp.gt.f32.partialorder %v3282, 0.0
        %vm3349 = vcmp.gt.f32.partialorder %v3285, 0.0
        %vm3350 = vcmp.gt.f32.partialorder %v3290, 0.0
        %vm3351 = vcmp.gt.f32.partialorder %v3293, 0.0
        %vm3352 = vcmp.gt.f32.partialorder %v3298, 0.0
        %vm3353 = vcmp.gt.f32.partialorder %v3301, 0.0
        %vm3354 = vcmp.gt.f32.partialorder %v3306, 0.0
        %vm3355 = vcmp.gt.f32.partialorder %v3309, 0.0
        %vm3356 = vcmp.gt.f32.partialorder %v3314, 0.0
        %vm3357 = vcmp.gt.f32.partialorder %v3317, 0.0
        %vm3358 = vcmp.gt.f32.partialorder %v3322, 0.0
        %vm3359 = vcmp.gt.f32.partialorder %v3325, 0.0
        %v3360 = vmul.f32 %v3202, 0.2
        %v3361 = vmul.f32 %v3205, 0.2
        %v3362 = vmul.f32 %v3210, 0.2
        %v3363 = vmul.f32 %v3213, 0.2
        %v3364 = vmul.f32 %v3218, 0.2
        %v3365 = vmul.f32 %v3221, 0.2
        %v3366 = vmul.f32 %v3226, 0.2
        %v3367 = vmul.f32 %v3229, 0.2
        %v3368 = vmul.f32 %v3234, 0.2
        %v3369 = vmul.f32 %v3237, 0.2
        %v3370 = vmul.f32 %v3242, 0.2
        %v3371 = vmul.f32 %v3245, 0.2
        %v3372 = vmul.f32 %v3250, 0.2
        %v3373 = vmul.f32 %v3253, 0.2
        %v3374 = vmul.f32 %v3258, 0.2
        %v3375 = vmul.f32 %v3261, 0.2
        %v3376 = vmul.f32 %v3266, 0.2
        %v3377 = vmul.f32 %v3269, 0.2
        %v3378 = vmul.f32 %v3274, 0.2
        %v3379 = vmul.f32 %v3277, 0.2
        %v3380 = vmul.f32 %v3282, 0.2
        %v3381 = vmul.f32 %v3285, 0.2
        %v3382 = vmul.f32 %v3290, 0.2
        %v3383 = vmul.f32 %v3293, 0.2
        %v3384 = vmul.f32 %v3298, 0.2
        %v3385 = vmul.f32 %v3301, 0.2
        %v3386 = vmul.f32 %v3306, 0.2
        %v3387 = vmul.f32 %v3309, 0.2
        %v3388 = vmul.f32 %v3314, 0.2
        %v3389 = vmul.f32 %v3317, 0.2
        %v3390 = vmul.f32 %v3322, 0.2
        %v3391 = vmul.f32 %v3325, 0.2
        %v3392 = vsel %vm3328, %v3202, %v3360
        %v3393 = vsel %vm3329, %v3205, %v3361
        %v3394 = vsel %vm3330, %v3210, %v3362
        %v3395 = vsel %vm3331, %v3213, %v3363
        %v3396 = vsel %vm3332, %v3218, %v3364
        %v3397 = vsel %vm3333, %v3221, %v3365
        %v3398 = vsel %vm3334, %v3226, %v3366
        %v3399 = vsel %vm3335, %v3229, %v3367
        %v3400 = vsel %vm3336, %v3234, %v3368
        %v3401 = vsel %vm3337, %v3237, %v3369
        %v3402 = vsel %vm3338, %v3242, %v3370
        %v3403 = vsel %vm3339, %v3245, %v3371
        %v3404 = vsel %vm3340, %v3250, %v3372
        %v3405 = vsel %vm3341, %v3253, %v3373
        %v3406 = vsel %vm3342, %v3258, %v3374
        %v3407 = vsel %vm3343, %v3261, %v3375
        %v3408 = vsel %vm3344, %v3266, %v3376
        %v3409 = vsel %vm3345, %v3269, %v3377
        %v3410 = vsel %vm3346, %v3274, %v3378
        %v3411 = vsel %vm3347, %v3277, %v3379
        %v3412 = vsel %vm3348, %v3282, %v3380
        %v3413 = vsel %vm3349, %v3285, %v3381
        %v3414 = vsel %vm3350, %v3290, %v3382
        %v3415 = vsel %vm3351, %v3293, %v3383
        %v3416 = vsel %vm3352, %v3298, %v3384
        %v3417 = vsel %vm3353, %v3301, %v3385
        %v3418 = vsel %vm3354, %v3306, %v3386
        %v3419 = vsel %vm3355, %v3309, %v3387
        %v3420 = vsel %vm3356, %v3314, %v3388
        %v3421 = vsel %vm3357, %v3317, %v3389
        %v3422 = vsel %vm3358, %v3322, %v3390
        %v3423 = vsel %vm3359, %v3325, %v3391
        %v3424 = vpack.c.bf16 %v3393, %v3392
        %v3425 = vpack.c.bf16 %v3395, %v3394
        %v3426 = vpack.c.bf16 %v3397, %v3396
        %v3427 = vpack.c.bf16 %v3399, %v3398
        %v3428 = vpack.c.bf16 %v3401, %v3400
        %v3429 = vpack.c.bf16 %v3403, %v3402
        %v3430 = vpack.c.bf16 %v3405, %v3404
        %v3431 = vpack.c.bf16 %v3407, %v3406
        %v3432 = vpack.c.bf16 %v3409, %v3408
        %v3433 = vpack.c.bf16 %v3411, %v3410
        %v3434 = vpack.c.bf16 %v3413, %v3412
        %v3435 = vpack.c.bf16 %v3415, %v3414
        %v3436 = vpack.c.bf16 %v3417, %v3416
        %v3437 = vpack.c.bf16 %v3419, %v3418
        %v3438 = vpack.c.bf16 %v3421, %v3420
        %v3439 = vpack.c.bf16 %v3423, %v3422
        %v3456 = vunpack.c.l.b16 %v3424
        %v3457 = vunpack.c.h.b16 %v3424
        %v3458 = vunpack.c.l.b16 %v3425
        %v3459 = vunpack.c.h.b16 %v3425
        %v3460 = vunpack.c.l.b16 %v3426
        %v3461 = vunpack.c.h.b16 %v3426
        %v3462 = vunpack.c.l.b16 %v3427
        %v3463 = vunpack.c.h.b16 %v3427
        %v3464 = vunpack.c.l.b16 %v3428
        %v3465 = vunpack.c.h.b16 %v3428
        %v3466 = vunpack.c.l.b16 %v3429
        %v3467 = vunpack.c.h.b16 %v3429
        %v3468 = vunpack.c.l.b16 %v3430
        %v3469 = vunpack.c.h.b16 %v3430
        %v3470 = vunpack.c.l.b16 %v3431
        %v3471 = vunpack.c.h.b16 %v3431
        %v3472 = vunpack.c.l.b16 %v3432
        %v3473 = vunpack.c.h.b16 %v3432
        %v3474 = vunpack.c.l.b16 %v3433
        %v3475 = vunpack.c.h.b16 %v3433
        %v3476 = vunpack.c.l.b16 %v3434
        %v3477 = vunpack.c.h.b16 %v3434
        %v3478 = vunpack.c.l.b16 %v3435
        %v3479 = vunpack.c.h.b16 %v3435
        %v3480 = vunpack.c.l.b16 %v3436
        %v3481 = vunpack.c.h.b16 %v3436
        %v3482 = vunpack.c.l.b16 %v3437
        %v3483 = vunpack.c.h.b16 %v3437
        %v3484 = vunpack.c.l.b16 %v3438
        %v3485 = vunpack.c.h.b16 %v3438
        %v3486 = vunpack.c.l.b16 %v3439
        %v3487 = vunpack.c.h.b16 %v3439
        %v3488 = vpack.c.b16 %v3456, %v3456
        %v3489 = vpack.c.b16 %v3457, %v3457
        %v3490 = vpack.c.b16 %v3458, %v3458
        %v3491 = vpack.c.b16 %v3459, %v3459
        %v3492 = vpack.c.b16 %v3460, %v3460
        %v3493 = vpack.c.b16 %v3461, %v3461
        %v3494 = vpack.c.b16 %v3462, %v3462
        %v3495 = vpack.c.b16 %v3463, %v3463
        %v3496 = vpack.c.b16 %v3464, %v3464
        %v3497 = vpack.c.b16 %v3465, %v3465
        %v3498 = vpack.c.b16 %v3466, %v3466
        %v3499 = vpack.c.b16 %v3467, %v3467
        %v3500 = vpack.c.b16 %v3468, %v3468
        %v3501 = vpack.c.b16 %v3469, %v3469
        %v3502 = vpack.c.b16 %v3470, %v3470
        %v3503 = vpack.c.b16 %v3471, %v3471
        %v3504 = vpack.c.b16 %v3472, %v3472
        %v3505 = vpack.c.b16 %v3473, %v3473
        %v3506 = vpack.c.b16 %v3474, %v3474
        %v3507 = vpack.c.b16 %v3475, %v3475
        %v3508 = vpack.c.b16 %v3476, %v3476
        %v3509 = vpack.c.b16 %v3477, %v3477
        %v3510 = vpack.c.b16 %v3478, %v3478
        %v3511 = vpack.c.b16 %v3479, %v3479
        %v3512 = vpack.c.b16 %v3480, %v3480
        %v3513 = vpack.c.b16 %v3481, %v3481
        %v3514 = vpack.c.b16 %v3482, %v3482
        %v3515 = vpack.c.b16 %v3483, %v3483
        %v3516 = vpack.c.b16 %v3484, %v3484
        %v3517 = vpack.c.b16 %v3485, %v3485
        %v3518 = vpack.c.b16 %v3486, %v3486
        %v3519 = vpack.c.b16 %v3487, %v3487
        %v3521 = vshrl.u32 %v3488, 16
        %v3523 = vrot.slane %v3521, 7
        %v3524 = vshll.u32 %v3488, 16
        %v3526 = vor.u32 %v3523, %v3524
        %v3527 = vrot.slane %v3523, 4
        %v3529 = vshrl.u32 %v3489, 16
        %v3531 = vrot.slane %v3529, 7
        %v3532 = vshll.u32 %v3489, 16
        %v3534 = vor.u32 %v3531, %v3532
        %v3535 = vsel %vm883, %v3527, %v3534
        %v3536 = vrot.slane %v3531, 4
        %v3538 = vshrl.u32 %v3490, 16
        %v3540 = vrot.slane %v3538, 7
        %v3541 = vshll.u32 %v3490, 16
        %v3543 = vor.u32 %v3540, %v3541
        %v3544 = vrot.slane %v3540, 4
        %v3546 = vshrl.u32 %v3491, 16
        %v3548 = vrot.slane %v3546, 7
        %v3549 = vshll.u32 %v3491, 16
        %v3551 = vor.u32 %v3548, %v3549
        %v3552 = vsel %vm883, %v3544, %v3551
        %v3553 = vrot.slane %v3548, 4
        %v3555 = vshrl.u32 %v3492, 16
        %v3557 = vrot.slane %v3555, 7
        %v3558 = vshll.u32 %v3492, 16
        %v3560 = vor.u32 %v3557, %v3558
        %v3561 = vrot.slane %v3557, 4
        %v3563 = vshrl.u32 %v3493, 16
        %v3565 = vrot.slane %v3563, 7
        %v3566 = vshll.u32 %v3493, 16
        %v3568 = vor.u32 %v3565, %v3566
        %v3569 = vsel %vm883, %v3561, %v3568
        %v3570 = vrot.slane %v3565, 4
        %v3572 = vshrl.u32 %v3494, 16
        %v3574 = vrot.slane %v3572, 7
        %v3575 = vshll.u32 %v3494, 16
        %v3577 = vor.u32 %v3574, %v3575
        %v3578 = vrot.slane %v3574, 4
        %v3580 = vshrl.u32 %v3495, 16
        %v3582 = vrot.slane %v3580, 7
        %v3583 = vshll.u32 %v3495, 16
        %v3585 = vor.u32 %v3582, %v3583
        %v3586 = vsel %vm883, %v3578, %v3585
        %v3587 = vrot.slane %v3582, 4
        %v3589 = vshrl.u32 %v3496, 16
        %v3591 = vrot.slane %v3589, 7
        %v3592 = vshll.u32 %v3496, 16
        %v3594 = vor.u32 %v3591, %v3592
        %v3595 = vrot.slane %v3591, 4
        %v3597 = vshrl.u32 %v3497, 16
        %v3599 = vrot.slane %v3597, 7
        %v3600 = vshll.u32 %v3497, 16
        %v3602 = vor.u32 %v3599, %v3600
        %v3603 = vsel %vm883, %v3595, %v3602
        %v3604 = vrot.slane %v3599, 4
        %v3606 = vshrl.u32 %v3498, 16
        %v3608 = vrot.slane %v3606, 7
        %v3609 = vshll.u32 %v3498, 16
        %v3611 = vor.u32 %v3608, %v3609
        %v3612 = vrot.slane %v3608, 4
        %v3614 = vshrl.u32 %v3499, 16
        %v3616 = vrot.slane %v3614, 7
        %v3617 = vshll.u32 %v3499, 16
        %v3619 = vor.u32 %v3616, %v3617
        %v3620 = vsel %vm883, %v3612, %v3619
        %v3621 = vrot.slane %v3616, 4
        %v3623 = vshrl.u32 %v3500, 16
        %v3625 = vrot.slane %v3623, 7
        %v3626 = vshll.u32 %v3500, 16
        %v3628 = vor.u32 %v3625, %v3626
        %v3629 = vrot.slane %v3625, 4
        %v3631 = vshrl.u32 %v3501, 16
        %v3633 = vrot.slane %v3631, 7
        %v3634 = vshll.u32 %v3501, 16
        %v3636 = vor.u32 %v3633, %v3634
        %v3637 = vsel %vm883, %v3629, %v3636
        %v3638 = vrot.slane %v3633, 4
        %v3640 = vshrl.u32 %v3502, 16
        %v3642 = vrot.slane %v3640, 7
        %v3643 = vshll.u32 %v3502, 16
        %v3645 = vor.u32 %v3642, %v3643
        %v3646 = vrot.slane %v3642, 4
        %v3648 = vshrl.u32 %v3503, 16
        %v3650 = vrot.slane %v3648, 7
        %v3651 = vshll.u32 %v3503, 16
        %v3653 = vor.u32 %v3650, %v3651
        %v3654 = vsel %vm883, %v3646, %v3653
        %v3655 = vrot.slane %v3650, 4
        %v3657 = vshrl.u32 %v3504, 16
        %v3659 = vrot.slane %v3657, 7
        %v3660 = vshll.u32 %v3504, 16
        %v3662 = vor.u32 %v3659, %v3660
        %v3663 = vrot.slane %v3659, 4
        %v3665 = vshrl.u32 %v3505, 16
        %v3667 = vrot.slane %v3665, 7
        %v3668 = vshll.u32 %v3505, 16
        %v3670 = vor.u32 %v3667, %v3668
        %v3671 = vsel %vm883, %v3663, %v3670
        %v3672 = vrot.slane %v3667, 4
        %v3674 = vshrl.u32 %v3506, 16
        %v3676 = vrot.slane %v3674, 7
        %v3677 = vshll.u32 %v3506, 16
        %v3679 = vor.u32 %v3676, %v3677
        %v3680 = vrot.slane %v3676, 4
        %v3682 = vshrl.u32 %v3507, 16
        %v3684 = vrot.slane %v3682, 7
        %v3685 = vshll.u32 %v3507, 16
        %v3687 = vor.u32 %v3684, %v3685
        %v3688 = vsel %vm883, %v3680, %v3687
        %v3689 = vrot.slane %v3684, 4
        %v3691 = vshrl.u32 %v3508, 16
        %v3693 = vrot.slane %v3691, 7
        %v3694 = vshll.u32 %v3508, 16
        %v3696 = vor.u32 %v3693, %v3694
        %v3697 = vrot.slane %v3693, 4
        %v3699 = vshrl.u32 %v3509, 16
        %v3701 = vrot.slane %v3699, 7
        %v3702 = vshll.u32 %v3509, 16
        %v3704 = vor.u32 %v3701, %v3702
        %v3705 = vsel %vm883, %v3697, %v3704
        %v3706 = vrot.slane %v3701, 4
        %v3708 = vshrl.u32 %v3510, 16
        %v3710 = vrot.slane %v3708, 7
        %v3711 = vshll.u32 %v3510, 16
        %v3713 = vor.u32 %v3710, %v3711
        %v3714 = vrot.slane %v3710, 4
        %v3716 = vshrl.u32 %v3511, 16
        %v3718 = vrot.slane %v3716, 7
        %v3719 = vshll.u32 %v3511, 16
        %v3721 = vor.u32 %v3718, %v3719
        %v3722 = vsel %vm883, %v3714, %v3721
        %v3723 = vrot.slane %v3718, 4
        %v3725 = vshrl.u32 %v3512, 16
        %v3727 = vrot.slane %v3725, 7
        %v3728 = vshll.u32 %v3512, 16
        %v3730 = vor.u32 %v3727, %v3728
        %v3731 = vrot.slane %v3727, 4
        %v3733 = vshrl.u32 %v3513, 16
        %v3735 = vrot.slane %v3733, 7
        %v3736 = vshll.u32 %v3513, 16
        %v3738 = vor.u32 %v3735, %v3736
        %v3739 = vsel %vm883, %v3731, %v3738
        %v3740 = vrot.slane %v3735, 4
        %v3742 = vshrl.u32 %v3514, 16
        %v3744 = vrot.slane %v3742, 7
        %v3745 = vshll.u32 %v3514, 16
        %v3747 = vor.u32 %v3744, %v3745
        %v3748 = vrot.slane %v3744, 4
        %v3750 = vshrl.u32 %v3515, 16
        %v3752 = vrot.slane %v3750, 7
        %v3753 = vshll.u32 %v3515, 16
        %v3755 = vor.u32 %v3752, %v3753
        %v3756 = vsel %vm883, %v3748, %v3755
        %v3757 = vrot.slane %v3752, 4
        %v3759 = vshrl.u32 %v3516, 16
        %v3761 = vrot.slane %v3759, 7
        %v3762 = vshll.u32 %v3516, 16
        %v3764 = vor.u32 %v3761, %v3762
        %v3765 = vrot.slane %v3761, 4
        %v3767 = vshrl.u32 %v3517, 16
        %v3769 = vrot.slane %v3767, 7
        %v3770 = vshll.u32 %v3517, 16
        %v3772 = vor.u32 %v3769, %v3770
        %v3773 = vsel %vm883, %v3765, %v3772
        %v3774 = vrot.slane %v3769, 4
        %v3776 = vshrl.u32 %v3518, 16
        %v3778 = vrot.slane %v3776, 7
        %v3779 = vshll.u32 %v3518, 16
        %v3781 = vor.u32 %v3778, %v3779
        %v3782 = vrot.slane %v3778, 4
        %v3784 = vshrl.u32 %v3519, 16
        %v3786 = vrot.slane %v3784, 7
        %v3787 = vshll.u32 %v3519, 16
        %v3789 = vor.u32 %v3786, %v3787
        %v3790 = vsel %vm883, %v3782, %v3789
        %v3791 = vrot.slane %v3786, 4
        %vm3840 = vcmask 60416
        %vm3841 = vmand %vm3840, %vm332
        %v3842 = vld [vmem:[%s391] sm:$0xf]
        %v3843 = vsel %vm3841, %v3526, %v3842
        %3844 = vst [vmem:[%s391] sm:$0xf] %v3843
        %3845 = vst.msk [vmem:[%s391 + $0x4] sm:$0xf] %vm382, %v3535
        %v3846 = vld [vmem:[%s391 + $0x8] sm:$0x1]
        %v3847 = vsel %vm393, %v3536, %v3846
        %3848 = vst [vmem:[%s391 + $0x8] sm:$0x1] %v3847
        %v3849 = vld [vmem:[%s391 + $0xc] sm:$0xf]
        %v3850 = vsel %vm3841, %v3543, %v3849
        %3851 = vst [vmem:[%s391 + $0xc] sm:$0xf] %v3850
        %3852 = vst.msk [vmem:[%s391 + $0x10] sm:$0xf] %vm382, %v3552
        %v3853 = vld [vmem:[%s391 + $0x14] sm:$0x1]
        %v3854 = vsel %vm393, %v3553, %v3853
        %3855 = vst [vmem:[%s391 + $0x14] sm:$0x1] %v3854
        %v3856 = vld [vmem:[%s391 + $0x18] sm:$0xf]
        %v3857 = vsel %vm3841, %v3560, %v3856
        %3858 = vst [vmem:[%s391 + $0x18] sm:$0xf] %v3857
        %3859 = vst.msk [vmem:[%s391 + $0x1c] sm:$0xf] %vm382, %v3569
        %v3860 = vld [vmem:[%s391 + $0x20] sm:$0x1]
        %v3861 = vsel %vm393, %v3570, %v3860
        %3862 = vst [vmem:[%s391 + $0x20] sm:$0x1] %v3861
        %v3863 = vld [vmem:[%s391 + $0x24] sm:$0xf]
        %v3864 = vsel %vm3841, %v3577, %v3863
        %3865 = vst [vmem:[%s391 + $0x24] sm:$0xf] %v3864
        %3866 = vst.msk [vmem:[%s391 + $0x28] sm:$0xf] %vm382, %v3586
        %v3867 = vld [vmem:[%s391 + $0x2c] sm:$0x1]
        %v3868 = vsel %vm393, %v3587, %v3867
        %3869 = vst [vmem:[%s391 + $0x2c] sm:$0x1] %v3868
        %v3870 = vld [vmem:[%s391 + $0x30] sm:$0xf]
        %v3871 = vsel %vm3841, %v3594, %v3870
        %3872 = vst [vmem:[%s391 + $0x30] sm:$0xf] %v3871
        %3873 = vst.msk [vmem:[%s391 + $0x34] sm:$0xf] %vm382, %v3603
        %v3874 = vld [vmem:[%s391 + $0x38] sm:$0x1]
        %v3875 = vsel %vm393, %v3604, %v3874
        %3876 = vst [vmem:[%s391 + $0x38] sm:$0x1] %v3875
        %v3877 = vld [vmem:[%s391 + $0x3c] sm:$0xf]
        %v3878 = vsel %vm3841, %v3611, %v3877
        %3879 = vst [vmem:[%s391 + $0x3c] sm:$0xf] %v3878
        %3880 = vst.msk [vmem:[%s391 + $0x40] sm:$0xf] %vm382, %v3620
        %v3881 = vld [vmem:[%s391 + $0x44] sm:$0x1]
        %v3882 = vsel %vm393, %v3621, %v3881
        %3883 = vst [vmem:[%s391 + $0x44] sm:$0x1] %v3882
        %v3884 = vld [vmem:[%s391 + $0x48] sm:$0xf]
        %v3885 = vsel %vm3841, %v3628, %v3884
        %3886 = vst [vmem:[%s391 + $0x48] sm:$0xf] %v3885
        %3887 = vst.msk [vmem:[%s391 + $0x4c] sm:$0xf] %vm382, %v3637
        %v3888 = vld [vmem:[%s391 + $0x50] sm:$0x1]
        %v3889 = vsel %vm393, %v3638, %v3888
        %3890 = vst [vmem:[%s391 + $0x50] sm:$0x1] %v3889
        %v3891 = vld [vmem:[%s391 + $0x54] sm:$0xf]
        %v3892 = vsel %vm3841, %v3645, %v3891
        %3893 = vst [vmem:[%s391 + $0x54] sm:$0xf] %v3892
        %3894 = vst.msk [vmem:[%s391 + $0x58] sm:$0xf] %vm382, %v3654
        %v3895 = vld [vmem:[%s391 + $0x5c] sm:$0x1]
        %v3896 = vsel %vm393, %v3655, %v3895
        %3897 = vst [vmem:[%s391 + $0x5c] sm:$0x1] %v3896
        %v3898 = vld [vmem:[%s391 + $0x60] sm:$0xf]
        %v3899 = vsel %vm3841, %v3662, %v3898
        %3900 = vst [vmem:[%s391 + $0x60] sm:$0xf] %v3899
        %3901 = vst.msk [vmem:[%s391 + $0x64] sm:$0xf] %vm382, %v3671
        %v3902 = vld [vmem:[%s391 + $0x68] sm:$0x1]
        %v3903 = vsel %vm393, %v3672, %v3902
        %3904 = vst [vmem:[%s391 + $0x68] sm:$0x1] %v3903
        %v3905 = vld [vmem:[%s391 + $0x6c] sm:$0xf]
        %v3906 = vsel %vm3841, %v3679, %v3905
        %3907 = vst [vmem:[%s391 + $0x6c] sm:$0xf] %v3906
        %3908 = vst.msk [vmem:[%s391 + $0x70] sm:$0xf] %vm382, %v3688
        %v3909 = vld [vmem:[%s391 + $0x74] sm:$0x1]
        %v3910 = vsel %vm393, %v3689, %v3909
        %3911 = vst [vmem:[%s391 + $0x74] sm:$0x1] %v3910
        %v3912 = vld [vmem:[%s391 + $0x78] sm:$0xf]
        %v3913 = vsel %vm3841, %v3696, %v3912
        %3914 = vst [vmem:[%s391 + $0x78] sm:$0xf] %v3913
        %3915 = vst.msk [vmem:[%s391 + $0x7c] sm:$0xf] %vm382, %v3705
        %v3916 = vld [vmem:[%s391 + $0x80] sm:$0x1]
        %v3917 = vsel %vm393, %v3706, %v3916
        %3918 = vst [vmem:[%s391 + $0x80] sm:$0x1] %v3917
        %v3919 = vld [vmem:[%s391 + $0x84] sm:$0xf]
        %v3920 = vsel %vm3841, %v3713, %v3919
        %3921 = vst [vmem:[%s391 + $0x84] sm:$0xf] %v3920
        %3922 = vst.msk [vmem:[%s391 + $0x88] sm:$0xf] %vm382, %v3722
        %v3923 = vld [vmem:[%s391 + $0x8c] sm:$0x1]
        %v3924 = vsel %vm393, %v3723, %v3923
        %3925 = vst [vmem:[%s391 + $0x8c] sm:$0x1] %v3924
        %v3926 = vld [vmem:[%s391 + $0x90] sm:$0xf]
        %v3927 = vsel %vm3841, %v3730, %v3926
        %3928 = vst [vmem:[%s391 + $0x90] sm:$0xf] %v3927
        %3929 = vst.msk [vmem:[%s391 + $0x94] sm:$0xf] %vm382, %v3739
        %v3930 = vld [vmem:[%s391 + $0x98] sm:$0x1]
        %v3931 = vsel %vm393, %v3740, %v3930
        %3932 = vst [vmem:[%s391 + $0x98] sm:$0x1] %v3931
        %v3933 = vld [vmem:[%s391 + $0x9c] sm:$0xf]
        %v3934 = vsel %vm3841, %v3747, %v3933
        %3935 = vst [vmem:[%s391 + $0x9c] sm:$0xf] %v3934
        %3936 = vst.msk [vmem:[%s391 + $0xa0] sm:$0xf] %vm382, %v3756
        %v3937 = vld [vmem:[%s391 + $0xa4] sm:$0x1]
        %v3938 = vsel %vm393, %v3757, %v3937
        %3939 = vst [vmem:[%s391 + $0xa4] sm:$0x1] %v3938
        %v3940 = vld [vmem:[%s391 + $0xa8] sm:$0xf]
        %v3941 = vsel %vm3841, %v3764, %v3940
        %3942 = vst [vmem:[%s391 + $0xa8] sm:$0xf] %v3941
        %3943 = vst.msk [vmem:[%s391 + $0xac] sm:$0xf] %vm382, %v3773
        %v3944 = vld [vmem:[%s391 + $0xb0] sm:$0x1]
        %v3945 = vsel %vm393, %v3774, %v3944
        %3946 = vst [vmem:[%s391 + $0xb0] sm:$0x1] %v3945
        %v3947 = vld [vmem:[%s391 + $0xb4] sm:$0xf]
        %v3948 = vsel %vm3841, %v3781, %v3947
        %3949 = vst [vmem:[%s391 + $0xb4] sm:$0xf] %v3948
        %3950 = vst.msk [vmem:[%s391 + $0xb8] sm:$0xf] %vm382, %v3790
        %v3951 = vld [vmem:[%s391 + $0xbc] sm:$0x1]
        %v3952 = vsel %vm393, %v3791, %v3951
        %3953 = vst [vmem:[%s391 + $0xbc] sm:$0x1] %v3952
        %v3954 = vld [vmem:[#allocation3] sm:$0xf]
        %v3955 = vld [vmem:[#allocation3 + $0x4] sm:$0xf]
        %v3956 = vld [vmem:[#allocation3 + $0x8] sm:$0x1]
        %v3957 = vld [vmem:[#allocation3 + $0xc] sm:$0xf]
        %v3958 = vld [vmem:[#allocation3 + $0x10] sm:$0xf]
        %v3959 = vld [vmem:[#allocation3 + $0x14] sm:$0x1]
        %v3960 = vld [vmem:[#allocation3 + $0x18] sm:$0xf]
        %v3961 = vld [vmem:[#allocation3 + $0x1c] sm:$0xf]
        %v3962 = vld [vmem:[#allocation3 + $0x20] sm:$0x1]
        %v3963 = vld [vmem:[#allocation3 + $0x24] sm:$0xf]
        %v3964 = vld [vmem:[#allocation3 + $0x28] sm:$0xf]
        %v3965 = vld [vmem:[#allocation3 + $0x2c] sm:$0x1]
        %v3966 = vld [vmem:[#allocation3 + $0x30] sm:$0xf]
        %v3967 = vld [vmem:[#allocation3 + $0x34] sm:$0xf]
        %v3968 = vld [vmem:[#allocation3 + $0x38] sm:$0x1]
        %v3969 = vld [vmem:[#allocation3 + $0x3c] sm:$0xf]
        %v3970 = vld [vmem:[#allocation3 + $0x40] sm:$0xf]
        %v3971 = vld [vmem:[#allocation3 + $0x44] sm:$0x1]
        %v3972 = vld [vmem:[#allocation3 + $0x48] sm:$0xf]
        %v3973 = vld [vmem:[#allocation3 + $0x4c] sm:$0xf]
        %v3974 = vld [vmem:[#allocation3 + $0x50] sm:$0x1]
        %v3975 = vld [vmem:[#allocation3 + $0x54] sm:$0xf]
        %v3976 = vld [vmem:[#allocation3 + $0x58] sm:$0xf]
        %v3977 = vld [vmem:[#allocation3 + $0x5c] sm:$0x1]
        %v3978 = vld [vmem:[#allocation3 + $0x60] sm:$0xf]
        %v3979 = vld [vmem:[#allocation3 + $0x64] sm:$0xf]
        %v3980 = vld [vmem:[#allocation3 + $0x68] sm:$0x1]
        %v3981 = vld [vmem:[#allocation3 + $0x6c] sm:$0xf]
        %v3982 = vld [vmem:[#allocation3 + $0x70] sm:$0xf]
        %v3983 = vld [vmem:[#allocation3 + $0x74] sm:$0x1]
        %v3984 = vld [vmem:[#allocation3 + $0x78] sm:$0xf]
        %v3985 = vld [vmem:[#allocation3 + $0x7c] sm:$0xf]
        %v3986 = vld [vmem:[#allocation3 + $0x80] sm:$0x1]
        %v3987 = vld [vmem:[#allocation3 + $0x84] sm:$0xf]
        %v3988 = vld [vmem:[#allocation3 + $0x88] sm:$0xf]
        %v3989 = vld [vmem:[#allocation3 + $0x8c] sm:$0x1]
        %v3990 = vld [vmem:[#allocation3 + $0x90] sm:$0xf]
        %v3991 = vld [vmem:[#allocation3 + $0x94] sm:$0xf]
        %v3992 = vld [vmem:[#allocation3 + $0x98] sm:$0x1]
        %v3993 = vld [vmem:[#allocation3 + $0x9c] sm:$0xf]
        %v3994 = vld [vmem:[#allocation3 + $0xa0] sm:$0xf]
        %v3995 = vld [vmem:[#allocation3 + $0xa4] sm:$0x1]
        %v3996 = vld [vmem:[#allocation3 + $0xa8] sm:$0xf]
        %v3997 = vld [vmem:[#allocation3 + $0xac] sm:$0xf]
        %v3998 = vld [vmem:[#allocation3 + $0xb0] sm:$0x1]
        %v3999 = vld [vmem:[#allocation3 + $0xb4] sm:$0xf]
        %v4000 = vld [vmem:[#allocation3 + $0xb8] sm:$0xf]
        %v4001 = vld [vmem:[#allocation3 + $0xbc] sm:$0x1]
        %v4002 = vld [vmem:[%s391] sm:$0xf]
        %v4003 = vld [vmem:[%s391 + $0x4] sm:$0xf]
        %v4004 = vld [vmem:[%s391 + $0x8] sm:$0x1]
        %v4005 = vld [vmem:[%s391 + $0xc] sm:$0xf]
        %v4006 = vld [vmem:[%s391 + $0x10] sm:$0xf]
        %v4007 = vld [vmem:[%s391 + $0x14] sm:$0x1]
        %v4008 = vld [vmem:[%s391 + $0x18] sm:$0xf]
        %v4009 = vld [vmem:[%s391 + $0x1c] sm:$0xf]
        %v4010 = vld [vmem:[%s391 + $0x20] sm:$0x1]
        %v4011 = vld [vmem:[%s391 + $0x24] sm:$0xf]
        %v4012 = vld [vmem:[%s391 + $0x28] sm:$0xf]
        %v4013 = vld [vmem:[%s391 + $0x2c] sm:$0x1]
        %v4014 = vld [vmem:[%s391 + $0x30] sm:$0xf]
        %v4015 = vld [vmem:[%s391 + $0x34] sm:$0xf]
        %v4016 = vld [vmem:[%s391 + $0x38] sm:$0x1]
        %v4017 = vld [vmem:[%s391 + $0x3c] sm:$0xf]
        %v4018 = vld [vmem:[%s391 + $0x40] sm:$0xf]
        %v4019 = vld [vmem:[%s391 + $0x44] sm:$0x1]
        %v4020 = vld [vmem:[%s391 + $0x48] sm:$0xf]
        %v4021 = vld [vmem:[%s391 + $0x4c] sm:$0xf]
        %v4022 = vld [vmem:[%s391 + $0x50] sm:$0x1]
        %v4023 = vld [vmem:[%s391 + $0x54] sm:$0xf]
        %v4024 = vld [vmem:[%s391 + $0x58] sm:$0xf]
        %v4025 = vld [vmem:[%s391 + $0x5c] sm:$0x1]
        %v4026 = vld [vmem:[%s391 + $0x60] sm:$0xf]
        %v4027 = vld [vmem:[%s391 + $0x64] sm:$0xf]
        %v4028 = vld [vmem:[%s391 + $0x68] sm:$0x1]
        %v4029 = vld [vmem:[%s391 + $0x6c] sm:$0xf]
        %v4030 = vld [vmem:[%s391 + $0x70] sm:$0xf]
        %v4031 = vld [vmem:[%s391 + $0x74] sm:$0x1]
        %v4032 = vld [vmem:[%s391 + $0x78] sm:$0xf]
        %v4033 = vld [vmem:[%s391 + $0x7c] sm:$0xf]
        %v4034 = vld [vmem:[%s391 + $0x80] sm:$0x1]
        %v4035 = vld [vmem:[%s391 + $0x84] sm:$0xf]
        %v4036 = vld [vmem:[%s391 + $0x88] sm:$0xf]
        %v4037 = vld [vmem:[%s391 + $0x8c] sm:$0x1]
        %v4038 = vld [vmem:[%s391 + $0x90] sm:$0xf]
        %v4039 = vld [vmem:[%s391 + $0x94] sm:$0xf]
        %v4040 = vld [vmem:[%s391 + $0x98] sm:$0x1]
        %v4041 = vld [vmem:[%s391 + $0x9c] sm:$0xf]
        %v4042 = vld [vmem:[%s391 + $0xa0] sm:$0xf]
        %v4043 = vld [vmem:[%s391 + $0xa4] sm:$0x1]
        %v4044 = vld [vmem:[%s391 + $0xa8] sm:$0xf]
        %v4045 = vld [vmem:[%s391 + $0xac] sm:$0xf]
        %v4046 = vld [vmem:[%s391 + $0xb0] sm:$0x1]
        %v4047 = vld [vmem:[%s391 + $0xb4] sm:$0xf]
        %v4048 = vld [vmem:[%s391 + $0xb8] sm:$0xf]
        %v4049 = vld [vmem:[%s391 + $0xbc] sm:$0x1]
        %s4050 = scalar_lea.vmem [#allocation3], 24
        %v4051 = vld [vmem:[%s4050] sm:$0xf]
        %v4052 = vld [vmem:[%s4050 + $0x4] sm:$0xf]
        %v4053 = vld [vmem:[%s4050 + $0x8] sm:$0x1]
        %v4054 = vld [vmem:[%s4050 + $0xc] sm:$0xf]
        %v4055 = vld [vmem:[%s4050 + $0x10] sm:$0xf]
        %v4056 = vld [vmem:[%s4050 + $0x14] sm:$0x1]
        %v4057 = vld [vmem:[%s4050 + $0x18] sm:$0xf]
        %v4058 = vld [vmem:[%s4050 + $0x1c] sm:$0xf]
        %v4059 = vld [vmem:[%s4050 + $0x20] sm:$0x1]
        %v4060 = vld [vmem:[%s4050 + $0x24] sm:$0xf]
        %v4061 = vld [vmem:[%s4050 + $0x28] sm:$0xf]
        %v4062 = vld [vmem:[%s4050 + $0x2c] sm:$0x1]
        %v4063 = vld [vmem:[%s4050 + $0x30] sm:$0xf]
        %v4064 = vld [vmem:[%s4050 + $0x34] sm:$0xf]
        %v4065 = vld [vmem:[%s4050 + $0x38] sm:$0x1]
        %v4066 = vld [vmem:[%s4050 + $0x3c] sm:$0xf]
        %v4067 = vld [vmem:[%s4050 + $0x40] sm:$0xf]
        %v4068 = vld [vmem:[%s4050 + $0x44] sm:$0x1]
        %v4069 = vld [vmem:[%s4050 + $0x48] sm:$0xf]
        %v4070 = vld [vmem:[%s4050 + $0x4c] sm:$0xf]
        %v4071 = vld [vmem:[%s4050 + $0x50] sm:$0x1]
        %v4072 = vld [vmem:[%s4050 + $0x54] sm:$0xf]
        %v4073 = vld [vmem:[%s4050 + $0x58] sm:$0xf]
        %v4074 = vld [vmem:[%s4050 + $0x5c] sm:$0x1]
        %v4075 = vld [vmem:[%s4050 + $0x60] sm:$0xf]
        %v4076 = vld [vmem:[%s4050 + $0x64] sm:$0xf]
        %v4077 = vld [vmem:[%s4050 + $0x68] sm:$0x1]
        %v4078 = vld [vmem:[%s4050 + $0x6c] sm:$0xf]
        %v4079 = vld [vmem:[%s4050 + $0x70] sm:$0xf]
        %v4080 = vld [vmem:[%s4050 + $0x74] sm:$0x1]
        %v4081 = vld [vmem:[%s4050 + $0x78] sm:$0xf]
        %v4082 = vld [vmem:[%s4050 + $0x7c] sm:$0xf]
        %v4083 = vld [vmem:[%s4050 + $0x80] sm:$0x1]
        %v4084 = vld [vmem:[%s4050 + $0x84] sm:$0xf]
        %v4085 = vld [vmem:[%s4050 + $0x88] sm:$0xf]
        %v4086 = vld [vmem:[%s4050 + $0x8c] sm:$0x1]
        %v4087 = vld [vmem:[%s4050 + $0x90] sm:$0xf]
        %v4088 = vld [vmem:[%s4050 + $0x94] sm:$0xf]
        %v4089 = vld [vmem:[%s4050 + $0x98] sm:$0x1]
        %v4090 = vld [vmem:[%s4050 + $0x9c] sm:$0xf]
        %v4091 = vld [vmem:[%s4050 + $0xa0] sm:$0xf]
        %v4092 = vld [vmem:[%s4050 + $0xa4] sm:$0x1]
        %v4093 = vld [vmem:[%s4050 + $0xa8] sm:$0xf]
        %v4094 = vld [vmem:[%s4050 + $0xac] sm:$0xf]
        %v4095 = vld [vmem:[%s4050 + $0xb0] sm:$0x1]
        %v4096 = vld [vmem:[%s4050 + $0xb4] sm:$0xf]
        %v4097 = vld [vmem:[%s4050 + $0xb8] sm:$0xf]
        %v4098 = vld [vmem:[%s4050 + $0xbc] sm:$0x1]
        %v4131 = vunpack.c.l.b16 %v3954
        %v4132 = vunpack.c.l.b16 %v3955
        %v4133 = vunpack.c.l.b16 %v3957
        %v4134 = vunpack.c.l.b16 %v3958
        %v4135 = vunpack.c.l.b16 %v3960
        %v4136 = vunpack.c.l.b16 %v3961
        %v4137 = vunpack.c.l.b16 %v3963
        %v4138 = vunpack.c.l.b16 %v3964
        %v4139 = vunpack.c.l.b16 %v3966
        %v4140 = vunpack.c.l.b16 %v3967
        %v4141 = vunpack.c.l.b16 %v3969
        %v4142 = vunpack.c.l.b16 %v3970
        %v4143 = vunpack.c.l.b16 %v3972
        %v4144 = vunpack.c.l.b16 %v3973
        %v4145 = vunpack.c.l.b16 %v3975
        %v4146 = vunpack.c.l.b16 %v3976
        %v4147 = vunpack.c.l.b16 %v3978
        %v4148 = vunpack.c.l.b16 %v3979
        %v4149 = vunpack.c.l.b16 %v3981
        %v4150 = vunpack.c.l.b16 %v3982
        %v4151 = vunpack.c.l.b16 %v3984
        %v4152 = vunpack.c.l.b16 %v3985
        %v4153 = vunpack.c.l.b16 %v3987
        %v4154 = vunpack.c.l.b16 %v3988
        %v4155 = vunpack.c.l.b16 %v3990
        %v4156 = vunpack.c.l.b16 %v3991
        %v4157 = vunpack.c.l.b16 %v3993
        %v4158 = vunpack.c.l.b16 %v3994
        %v4159 = vunpack.c.l.b16 %v3996
        %v4160 = vunpack.c.l.b16 %v3997
        %v4161 = vunpack.c.l.b16 %v3999
        %v4162 = vunpack.c.l.b16 %v4000
        %v4163 = vpack.c.b16 %v4132, %v4131
        %v4164 = vpack.c.b16 %v4134, %v4133
        %v4165 = vpack.c.b16 %v4136, %v4135
        %v4166 = vpack.c.b16 %v4138, %v4137
        %v4167 = vpack.c.b16 %v4140, %v4139
        %v4168 = vpack.c.b16 %v4142, %v4141
        %v4169 = vpack.c.b16 %v4144, %v4143
        %v4170 = vpack.c.b16 %v4146, %v4145
        %v4171 = vpack.c.b16 %v4148, %v4147
        %v4172 = vpack.c.b16 %v4150, %v4149
        %v4173 = vpack.c.b16 %v4152, %v4151
        %v4174 = vpack.c.b16 %v4154, %v4153
        %v4175 = vpack.c.b16 %v4156, %v4155
        %v4176 = vpack.c.b16 %v4158, %v4157
        %v4177 = vpack.c.b16 %v4160, %v4159
        %v4178 = vpack.c.b16 %v4162, %v4161
        %v4195 = vunpack.c.l.b16 %v3956
        %v4196 = vunpack.c.l.b16 %v3959
        %v4197 = vunpack.c.l.b16 %v3962
        %v4198 = vunpack.c.l.b16 %v3965
        %v4199 = vunpack.c.l.b16 %v3968
        %v4200 = vunpack.c.l.b16 %v3971
        %v4201 = vunpack.c.l.b16 %v3974
        %v4202 = vunpack.c.l.b16 %v3977
        %v4203 = vunpack.c.l.b16 %v3980
        %v4204 = vunpack.c.l.b16 %v3983
        %v4205 = vunpack.c.l.b16 %v3986
        %v4206 = vunpack.c.l.b16 %v3989
        %v4207 = vunpack.c.l.b16 %v3992
        %v4208 = vunpack.c.l.b16 %v3995
        %v4209 = vunpack.c.l.b16 %v3998
        %v4210 = vunpack.c.l.b16 %v4001
        %v4211 = vpack.c.b16 %v4195, %v4195
        %v4212 = vpack.c.b16 %v4196, %v4196
        %v4213 = vpack.c.b16 %v4197, %v4197
        %v4214 = vpack.c.b16 %v4198, %v4198
        %v4215 = vpack.c.b16 %v4199, %v4199
        %v4216 = vpack.c.b16 %v4200, %v4200
        %v4217 = vpack.c.b16 %v4201, %v4201
        %v4218 = vpack.c.b16 %v4202, %v4202
        %v4219 = vpack.c.b16 %v4203, %v4203
        %v4220 = vpack.c.b16 %v4204, %v4204
        %v4221 = vpack.c.b16 %v4205, %v4205
        %v4222 = vpack.c.b16 %v4206, %v4206
        %v4223 = vpack.c.b16 %v4207, %v4207
        %v4224 = vpack.c.b16 %v4208, %v4208
        %v4225 = vpack.c.b16 %v4209, %v4209
        %v4226 = vpack.c.b16 %v4210, %v4210
        %v4228 = vshrl.u32 %v4163, 16
        %v4230 = vshll.u32 %v4163, 16
        %v4232 = vrot.slane %v4230, 1
        %v4233 = vor.u32 %v4228, %v4232
        %v4235 = vshll.u32 %v4211, 16
        %v4237 = vrot.slane %v4235, 1
        %v4238 = vsel %vm1591, %v4233, %v4237
        %v4240 = vshrl.u32 %v4164, 16
        %v4242 = vshll.u32 %v4164, 16
        %v4244 = vrot.slane %v4242, 1
        %v4245 = vor.u32 %v4240, %v4244
        %v4247 = vshll.u32 %v4212, 16
        %v4249 = vrot.slane %v4247, 1
        %v4250 = vsel %vm1591, %v4245, %v4249
        %v4252 = vshrl.u32 %v4165, 16
        %v4254 = vshll.u32 %v4165, 16
        %v4256 = vrot.slane %v4254, 1
        %v4257 = vor.u32 %v4252, %v4256
        %v4259 = vshll.u32 %v4213, 16
        %v4261 = vrot.slane %v4259, 1
        %v4262 = vsel %vm1591, %v4257, %v4261
        %v4264 = vshrl.u32 %v4166, 16
        %v4266 = vshll.u32 %v4166, 16
        %v4268 = vrot.slane %v4266, 1
        %v4269 = vor.u32 %v4264, %v4268
        %v4271 = vshll.u32 %v4214, 16
        %v4273 = vrot.slane %v4271, 1
        %v4274 = vsel %vm1591, %v4269, %v4273
        %v4276 = vshrl.u32 %v4167, 16
        %v4278 = vshll.u32 %v4167, 16
        %v4280 = vrot.slane %v4278, 1
        %v4281 = vor.u32 %v4276, %v4280
        %v4283 = vshll.u32 %v4215, 16
        %v4285 = vrot.slane %v4283, 1
        %v4286 = vsel %vm1591, %v4281, %v4285
        %v4288 = vshrl.u32 %v4168, 16
        %v4290 = vshll.u32 %v4168, 16
        %v4292 = vrot.slane %v4290, 1
        %v4293 = vor.u32 %v4288, %v4292
        %v4295 = vshll.u32 %v4216, 16
        %v4297 = vrot.slane %v4295, 1
        %v4298 = vsel %vm1591, %v4293, %v4297
        %v4300 = vshrl.u32 %v4169, 16
        %v4302 = vshll.u32 %v4169, 16
        %v4304 = vrot.slane %v4302, 1
        %v4305 = vor.u32 %v4300, %v4304
        %v4307 = vshll.u32 %v4217, 16
        %v4309 = vrot.slane %v4307, 1
        %v4310 = vsel %vm1591, %v4305, %v4309
        %v4312 = vshrl.u32 %v4170, 16
        %v4314 = vshll.u32 %v4170, 16
        %v4316 = vrot.slane %v4314, 1
        %v4317 = vor.u32 %v4312, %v4316
        %v4319 = vshll.u32 %v4218, 16
        %v4321 = vrot.slane %v4319, 1
        %v4322 = vsel %vm1591, %v4317, %v4321
        %v4324 = vshrl.u32 %v4171, 16
        %v4326 = vshll.u32 %v4171, 16
        %v4328 = vrot.slane %v4326, 1
        %v4329 = vor.u32 %v4324, %v4328
        %v4331 = vshll.u32 %v4219, 16
        %v4333 = vrot.slane %v4331, 1
        %v4334 = vsel %vm1591, %v4329, %v4333
        %v4336 = vshrl.u32 %v4172, 16
        %v4338 = vshll.u32 %v4172, 16
        %v4340 = vrot.slane %v4338, 1
        %v4341 = vor.u32 %v4336, %v4340
        %v4343 = vshll.u32 %v4220, 16
        %v4345 = vrot.slane %v4343, 1
        %v4346 = vsel %vm1591, %v4341, %v4345
        %v4348 = vshrl.u32 %v4173, 16
        %v4350 = vshll.u32 %v4173, 16
        %v4352 = vrot.slane %v4350, 1
        %v4353 = vor.u32 %v4348, %v4352
        %v4355 = vshll.u32 %v4221, 16
        %v4357 = vrot.slane %v4355, 1
        %v4358 = vsel %vm1591, %v4353, %v4357
        %v4360 = vshrl.u32 %v4174, 16
        %v4362 = vshll.u32 %v4174, 16
        %v4364 = vrot.slane %v4362, 1
        %v4365 = vor.u32 %v4360, %v4364
        %v4367 = vshll.u32 %v4222, 16
        %v4369 = vrot.slane %v4367, 1
        %v4370 = vsel %vm1591, %v4365, %v4369
        %v4372 = vshrl.u32 %v4175, 16
        %v4374 = vshll.u32 %v4175, 16
        %v4376 = vrot.slane %v4374, 1
        %v4377 = vor.u32 %v4372, %v4376
        %v4379 = vshll.u32 %v4223, 16
        %v4381 = vrot.slane %v4379, 1
        %v4382 = vsel %vm1591, %v4377, %v4381
        %v4384 = vshrl.u32 %v4176, 16
        %v4386 = vshll.u32 %v4176, 16
        %v4388 = vrot.slane %v4386, 1
        %v4389 = vor.u32 %v4384, %v4388
        %v4391 = vshll.u32 %v4224, 16
        %v4393 = vrot.slane %v4391, 1
        %v4394 = vsel %vm1591, %v4389, %v4393
        %v4396 = vshrl.u32 %v4177, 16
        %v4398 = vshll.u32 %v4177, 16
        %v4400 = vrot.slane %v4398, 1
        %v4401 = vor.u32 %v4396, %v4400
        %v4403 = vshll.u32 %v4225, 16
        %v4405 = vrot.slane %v4403, 1
        %v4406 = vsel %vm1591, %v4401, %v4405
        %v4408 = vshrl.u32 %v4178, 16
        %v4410 = vshll.u32 %v4178, 16
        %v4412 = vrot.slane %v4410, 1
        %v4413 = vor.u32 %v4408, %v4412
        %v4415 = vshll.u32 %v4226, 16
        %v4417 = vrot.slane %v4415, 1
        %v4418 = vsel %vm1591, %v4413, %v4417
        %4419 = vrot.lane.b32.xlu0 %v4238, 8
        %v4420 = vpop.permute.xlu0 %4419
        %4421 = vrot.lane.b32.xlu0 %v4250, 8
        %v4422 = vpop.permute.xlu0 %4421
        %4423 = vrot.lane.b32.xlu0 %v4262, 8
        %v4424 = vpop.permute.xlu0 %4423
        %4425 = vrot.lane.b32.xlu0 %v4274, 8
        %v4426 = vpop.permute.xlu0 %4425
        %4427 = vrot.lane.b32.xlu0 %v4286, 8
        %v4428 = vpop.permute.xlu0 %4427
        %4429 = vrot.lane.b32.xlu0 %v4298, 8
        %v4430 = vpop.permute.xlu0 %4429
        %4431 = vrot.lane.b32.xlu0 %v4310, 8
        %v4432 = vpop.permute.xlu0 %4431
        %4433 = vrot.lane.b32.xlu0 %v4322, 8
        %v4434 = vpop.permute.xlu0 %4433
        %4435 = vrot.lane.b32.xlu0 %v4334, 8
        %v4436 = vpop.permute.xlu0 %4435
        %4437 = vrot.lane.b32.xlu0 %v4346, 8
        %v4438 = vpop.permute.xlu0 %4437
        %4439 = vrot.lane.b32.xlu0 %v4358, 8
        %v4440 = vpop.permute.xlu0 %4439
        %4441 = vrot.lane.b32.xlu0 %v4370, 8
        %v4442 = vpop.permute.xlu0 %4441
        %4443 = vrot.lane.b32.xlu0 %v4382, 8
        %v4444 = vpop.permute.xlu0 %4443
        %4445 = vrot.lane.b32.xlu0 %v4394, 8
        %v4446 = vpop.permute.xlu0 %4445
        %4447 = vrot.lane.b32.xlu0 %v4406, 8
        %v4448 = vpop.permute.xlu0 %4447
        %4449 = vrot.lane.b32.xlu0 %v4418, 8
        %v4450 = vpop.permute.xlu0 %4449
        %v4451 = vrot.slane %v4163, 1
        %v4452 = vrot.slane %v4211, 1
        %v4453 = vsel %vm1816, %v4451, %v4452
        %v4454 = vrot.slane %v4164, 1
        %v4455 = vrot.slane %v4212, 1
        %v4456 = vsel %vm1816, %v4454, %v4455
        %v4457 = vrot.slane %v4165, 1
        %v4458 = vrot.slane %v4213, 1
        %v4459 = vsel %vm1816, %v4457, %v4458
        %v4460 = vrot.slane %v4166, 1
        %v4461 = vrot.slane %v4214, 1
        %v4462 = vsel %vm1816, %v4460, %v4461
        %v4463 = vrot.slane %v4167, 1
        %v4464 = vrot.slane %v4215, 1
        %v4465 = vsel %vm1816, %v4463, %v4464
        %v4466 = vrot.slane %v4168, 1
        %v4467 = vrot.slane %v4216, 1
        %v4468 = vsel %vm1816, %v4466, %v4467
        %v4469 = vrot.slane %v4169, 1
        %v4470 = vrot.slane %v4217, 1
        %v4471 = vsel %vm1816, %v4469, %v4470
        %v4472 = vrot.slane %v4170, 1
        %v4473 = vrot.slane %v4218, 1
        %v4474 = vsel %vm1816, %v4472, %v4473
        %v4475 = vrot.slane %v4171, 1
        %v4476 = vrot.slane %v4219, 1
        %v4477 = vsel %vm1816, %v4475, %v4476
        %v4478 = vrot.slane %v4172, 1
        %v4479 = vrot.slane %v4220, 1
        %v4480 = vsel %vm1816, %v4478, %v4479
        %v4481 = vrot.slane %v4173, 1
        %v4482 = vrot.slane %v4221, 1
        %v4483 = vsel %vm1816, %v4481, %v4482
        %v4484 = vrot.slane %v4174, 1
        %v4485 = vrot.slane %v4222, 1
        %v4486 = vsel %vm1816, %v4484, %v4485
        %v4487 = vrot.slane %v4175, 1
        %v4488 = vrot.slane %v4223, 1
        %v4489 = vsel %vm1816, %v4487, %v4488
        %v4490 = vrot.slane %v4176, 1
        %v4491 = vrot.slane %v4224, 1
        %v4492 = vsel %vm1816, %v4490, %v4491
        %v4493 = vrot.slane %v4177, 1
        %v4494 = vrot.slane %v4225, 1
        %v4495 = vsel %vm1816, %v4493, %v4494
        %v4496 = vrot.slane %v4178, 1
        %v4497 = vrot.slane %v4226, 1
        %v4498 = vsel %vm1816, %v4496, %v4497
        %4499 = vrot.lane.b32.xlu0 %v4453, 16
        %v4500 = vpop.permute.xlu0 %4499
        %4501 = vrot.lane.b32.xlu0 %v4456, 16
        %v4502 = vpop.permute.xlu0 %4501
        %4503 = vrot.lane.b32.xlu0 %v4459, 16
        %v4504 = vpop.permute.xlu0 %4503
        %4505 = vrot.lane.b32.xlu0 %v4462, 16
        %v4506 = vpop.permute.xlu0 %4505
        %4507 = vrot.lane.b32.xlu0 %v4465, 16
        %v4508 = vpop.permute.xlu0 %4507
        %4509 = vrot.lane.b32.xlu0 %v4468, 16
        %v4510 = vpop.permute.xlu0 %4509
        %4511 = vrot.lane.b32.xlu0 %v4471, 16
        %v4512 = vpop.permute.xlu0 %4511
        %4513 = vrot.lane.b32.xlu0 %v4474, 16
        %v4514 = vpop.permute.xlu0 %4513
        %4515 = vrot.lane.b32.xlu0 %v4477, 16
        %v4516 = vpop.permute.xlu0 %4515
        %4517 = vrot.lane.b32.xlu0 %v4480, 16
        %v4518 = vpop.permute.xlu0 %4517
        %4519 = vrot.lane.b32.xlu0 %v4483, 16
        %v4520 = vpop.permute.xlu0 %4519
        %4521 = vrot.lane.b32.xlu0 %v4486, 16
        %v4522 = vpop.permute.xlu0 %4521
        %4523 = vrot.lane.b32.xlu0 %v4489, 16
        %v4524 = vpop.permute.xlu0 %4523
        %4525 = vrot.lane.b32.xlu0 %v4492, 16
        %v4526 = vpop.permute.xlu0 %4525
        %4527 = vrot.lane.b32.xlu0 %v4495, 16
        %v4528 = vpop.permute.xlu0 %4527
        %4529 = vrot.lane.b32.xlu0 %v4498, 16
        %v4530 = vpop.permute.xlu0 %4529
        %v4563 = vunpack.c.l.b16 %v4002
        %v4564 = vunpack.c.l.b16 %v4003
        %v4565 = vunpack.c.l.b16 %v4005
        %v4566 = vunpack.c.l.b16 %v4006
        %v4567 = vunpack.c.l.b16 %v4008
        %v4568 = vunpack.c.l.b16 %v4009
        %v4569 = vunpack.c.l.b16 %v4011
        %v4570 = vunpack.c.l.b16 %v4012
        %v4571 = vunpack.c.l.b16 %v4014
        %v4572 = vunpack.c.l.b16 %v4015
        %v4573 = vunpack.c.l.b16 %v4017
        %v4574 = vunpack.c.l.b16 %v4018
        %v4575 = vunpack.c.l.b16 %v4020
        %v4576 = vunpack.c.l.b16 %v4021
        %v4577 = vunpack.c.l.b16 %v4023
        %v4578 = vunpack.c.l.b16 %v4024
        %v4579 = vunpack.c.l.b16 %v4026
        %v4580 = vunpack.c.l.b16 %v4027
        %v4581 = vunpack.c.l.b16 %v4029
        %v4582 = vunpack.c.l.b16 %v4030
        %v4583 = vunpack.c.l.b16 %v4032
        %v4584 = vunpack.c.l.b16 %v4033
        %v4585 = vunpack.c.l.b16 %v4035
        %v4586 = vunpack.c.l.b16 %v4036
        %v4587 = vunpack.c.l.b16 %v4038
        %v4588 = vunpack.c.l.b16 %v4039
        %v4589 = vunpack.c.l.b16 %v4041
        %v4590 = vunpack.c.l.b16 %v4042
        %v4591 = vunpack.c.l.b16 %v4044
        %v4592 = vunpack.c.l.b16 %v4045
        %v4593 = vunpack.c.l.b16 %v4047
        %v4594 = vunpack.c.l.b16 %v4048
        %v4595 = vpack.c.b16 %v4564, %v4563
        %v4596 = vpack.c.b16 %v4566, %v4565
        %v4597 = vpack.c.b16 %v4568, %v4567
        %v4598 = vpack.c.b16 %v4570, %v4569
        %v4599 = vpack.c.b16 %v4572, %v4571
        %v4600 = vpack.c.b16 %v4574, %v4573
        %v4601 = vpack.c.b16 %v4576, %v4575
        %v4602 = vpack.c.b16 %v4578, %v4577
        %v4603 = vpack.c.b16 %v4580, %v4579
        %v4604 = vpack.c.b16 %v4582, %v4581
        %v4605 = vpack.c.b16 %v4584, %v4583
        %v4606 = vpack.c.b16 %v4586, %v4585
        %v4607 = vpack.c.b16 %v4588, %v4587
        %v4608 = vpack.c.b16 %v4590, %v4589
        %v4609 = vpack.c.b16 %v4592, %v4591
        %v4610 = vpack.c.b16 %v4594, %v4593
        %4611 = vrot.lane.b32.xlu0 %v4595, 24
        %v4612 = vpop.permute.xlu0 %4611
        %4613 = vrot.lane.b32.xlu0 %v4596, 24
        %v4614 = vpop.permute.xlu0 %4613
        %4615 = vrot.lane.b32.xlu0 %v4597, 24
        %v4616 = vpop.permute.xlu0 %4615
        %4617 = vrot.lane.b32.xlu0 %v4598, 24
        %v4618 = vpop.permute.xlu0 %4617
        %4619 = vrot.lane.b32.xlu0 %v4599, 24
        %v4620 = vpop.permute.xlu0 %4619
        %4621 = vrot.lane.b32.xlu0 %v4600, 24
        %v4622 = vpop.permute.xlu0 %4621
        %4623 = vrot.lane.b32.xlu0 %v4601, 24
        %v4624 = vpop.permute.xlu0 %4623
        %4625 = vrot.lane.b32.xlu0 %v4602, 24
        %v4626 = vpop.permute.xlu0 %4625
        %4627 = vrot.lane.b32.xlu0 %v4603, 24
        %v4628 = vpop.permute.xlu0 %4627
        %4629 = vrot.lane.b32.xlu0 %v4604, 24
        %v4630 = vpop.permute.xlu0 %4629
        %4631 = vrot.lane.b32.xlu0 %v4605, 24
        %v4632 = vpop.permute.xlu0 %4631
        %4633 = vrot.lane.b32.xlu0 %v4606, 24
        %v4634 = vpop.permute.xlu0 %4633
        %4635 = vrot.lane.b32.xlu0 %v4607, 24
        %v4636 = vpop.permute.xlu0 %4635
        %4637 = vrot.lane.b32.xlu0 %v4608, 24
        %v4638 = vpop.permute.xlu0 %4637
        %4639 = vrot.lane.b32.xlu0 %v4609, 24
        %v4640 = vpop.permute.xlu0 %4639
        %4641 = vrot.lane.b32.xlu0 %v4610, 24
        %v4642 = vpop.permute.xlu0 %4641
        %v4659 = vunpack.c.l.b16 %v4004
        %v4660 = vunpack.c.l.b16 %v4007
        %v4661 = vunpack.c.l.b16 %v4010
        %v4662 = vunpack.c.l.b16 %v4013
        %v4663 = vunpack.c.l.b16 %v4016
        %v4664 = vunpack.c.l.b16 %v4019
        %v4665 = vunpack.c.l.b16 %v4022
        %v4666 = vunpack.c.l.b16 %v4025
        %v4667 = vunpack.c.l.b16 %v4028
        %v4668 = vunpack.c.l.b16 %v4031
        %v4669 = vunpack.c.l.b16 %v4034
        %v4670 = vunpack.c.l.b16 %v4037
        %v4671 = vunpack.c.l.b16 %v4040
        %v4672 = vunpack.c.l.b16 %v4043
        %v4673 = vunpack.c.l.b16 %v4046
        %v4674 = vunpack.c.l.b16 %v4049
        %v4675 = vpack.c.b16 %v4659, %v4659
        %v4676 = vpack.c.b16 %v4660, %v4660
        %v4677 = vpack.c.b16 %v4661, %v4661
        %v4678 = vpack.c.b16 %v4662, %v4662
        %v4679 = vpack.c.b16 %v4663, %v4663
        %v4680 = vpack.c.b16 %v4664, %v4664
        %v4681 = vpack.c.b16 %v4665, %v4665
        %v4682 = vpack.c.b16 %v4666, %v4666
        %v4683 = vpack.c.b16 %v4667, %v4667
        %v4684 = vpack.c.b16 %v4668, %v4668
        %v4685 = vpack.c.b16 %v4669, %v4669
        %v4686 = vpack.c.b16 %v4670, %v4670
        %v4687 = vpack.c.b16 %v4671, %v4671
        %v4688 = vpack.c.b16 %v4672, %v4672
        %v4689 = vpack.c.b16 %v4673, %v4673
        %v4690 = vpack.c.b16 %v4674, %v4674
        %v4692 = vshrl.u32 %v4595, 16
        %v4694 = vshll.u32 %v4595, 16
        %v4696 = vrot.slane %v4694, 1
        %v4697 = vor.u32 %v4692, %v4696
        %v4699 = vshll.u32 %v4675, 16
        %v4701 = vrot.slane %v4699, 1
        %v4702 = vsel %vm1591, %v4697, %v4701
        %v4704 = vshrl.u32 %v4596, 16
        %v4706 = vshll.u32 %v4596, 16
        %v4708 = vrot.slane %v4706, 1
        %v4709 = vor.u32 %v4704, %v4708
        %v4711 = vshll.u32 %v4676, 16
        %v4713 = vrot.slane %v4711, 1
        %v4714 = vsel %vm1591, %v4709, %v4713
        %v4716 = vshrl.u32 %v4597, 16
        %v4718 = vshll.u32 %v4597, 16
        %v4720 = vrot.slane %v4718, 1
        %v4721 = vor.u32 %v4716, %v4720
        %v4723 = vshll.u32 %v4677, 16
        %v4725 = vrot.slane %v4723, 1
        %v4726 = vsel %vm1591, %v4721, %v4725
        %v4728 = vshrl.u32 %v4598, 16
        %v4730 = vshll.u32 %v4598, 16
        %v4732 = vrot.slane %v4730, 1
        %v4733 = vor.u32 %v4728, %v4732
        %v4735 = vshll.u32 %v4678, 16
        %v4737 = vrot.slane %v4735, 1
        %v4738 = vsel %vm1591, %v4733, %v4737
        %v4740 = vshrl.u32 %v4599, 16
        %v4742 = vshll.u32 %v4599, 16
        %v4744 = vrot.slane %v4742, 1
        %v4745 = vor.u32 %v4740, %v4744
        %v4747 = vshll.u32 %v4679, 16
        %v4749 = vrot.slane %v4747, 1
        %v4750 = vsel %vm1591, %v4745, %v4749
        %v4752 = vshrl.u32 %v4600, 16
        %v4754 = vshll.u32 %v4600, 16
        %v4756 = vrot.slane %v4754, 1
        %v4757 = vor.u32 %v4752, %v4756
        %v4759 = vshll.u32 %v4680, 16
        %v4761 = vrot.slane %v4759, 1
        %v4762 = vsel %vm1591, %v4757, %v4761
        %v4764 = vshrl.u32 %v4601, 16
        %v4766 = vshll.u32 %v4601, 16
        %v4768 = vrot.slane %v4766, 1
        %v4769 = vor.u32 %v4764, %v4768
        %v4771 = vshll.u32 %v4681, 16
        %v4773 = vrot.slane %v4771, 1
        %v4774 = vsel %vm1591, %v4769, %v4773
        %v4776 = vshrl.u32 %v4602, 16
        %v4778 = vshll.u32 %v4602, 16
        %v4780 = vrot.slane %v4778, 1
        %v4781 = vor.u32 %v4776, %v4780
        %v4783 = vshll.u32 %v4682, 16
        %v4785 = vrot.slane %v4783, 1
        %v4786 = vsel %vm1591, %v4781, %v4785
        %v4788 = vshrl.u32 %v4603, 16
        %v4790 = vshll.u32 %v4603, 16
        %v4792 = vrot.slane %v4790, 1
        %v4793 = vor.u32 %v4788, %v4792
        %v4795 = vshll.u32 %v4683, 16
        %v4797 = vrot.slane %v4795, 1
        %v4798 = vsel %vm1591, %v4793, %v4797
        %v4800 = vshrl.u32 %v4604, 16
        %v4802 = vshll.u32 %v4604, 16
        %v4804 = vrot.slane %v4802, 1
        %v4805 = vor.u32 %v4800, %v4804
        %v4807 = vshll.u32 %v4684, 16
        %v4809 = vrot.slane %v4807, 1
        %v4810 = vsel %vm1591, %v4805, %v4809
        %v4812 = vshrl.u32 %v4605, 16
        %v4814 = vshll.u32 %v4605, 16
        %v4816 = vrot.slane %v4814, 1
        %v4817 = vor.u32 %v4812, %v4816
        %v4819 = vshll.u32 %v4685, 16
        %v4821 = vrot.slane %v4819, 1
        %v4822 = vsel %vm1591, %v4817, %v4821
        %v4824 = vshrl.u32 %v4606, 16
        %v4826 = vshll.u32 %v4606, 16
        %v4828 = vrot.slane %v4826, 1
        %v4829 = vor.u32 %v4824, %v4828
        %v4831 = vshll.u32 %v4686, 16
        %v4833 = vrot.slane %v4831, 1
        %v4834 = vsel %vm1591, %v4829, %v4833
        %v4836 = vshrl.u32 %v4607, 16
        %v4838 = vshll.u32 %v4607, 16
        %v4840 = vrot.slane %v4838, 1
        %v4841 = vor.u32 %v4836, %v4840
        %v4843 = vshll.u32 %v4687, 16
        %v4845 = vrot.slane %v4843, 1
        %v4846 = vsel %vm1591, %v4841, %v4845
        %v4848 = vshrl.u32 %v4608, 16
        %v4850 = vshll.u32 %v4608, 16
        %v4852 = vrot.slane %v4850, 1
        %v4853 = vor.u32 %v4848, %v4852
        %v4855 = vshll.u32 %v4688, 16
        %v4857 = vrot.slane %v4855, 1
        %v4858 = vsel %vm1591, %v4853, %v4857
        %v4860 = vshrl.u32 %v4609, 16
        %v4862 = vshll.u32 %v4609, 16
        %v4864 = vrot.slane %v4862, 1
        %v4865 = vor.u32 %v4860, %v4864
        %v4867 = vshll.u32 %v4689, 16
        %v4869 = vrot.slane %v4867, 1
        %v4870 = vsel %vm1591, %v4865, %v4869
        %v4872 = vshrl.u32 %v4610, 16
        %v4874 = vshll.u32 %v4610, 16
        %v4876 = vrot.slane %v4874, 1
        %v4877 = vor.u32 %v4872, %v4876
        %v4879 = vshll.u32 %v4690, 16
        %v4881 = vrot.slane %v4879, 1
        %v4882 = vsel %vm1591, %v4877, %v4881
        %4883 = vrot.lane.b32.xlu0 %v4702, 32
        %v4884 = vpop.permute.xlu0 %4883
        %4885 = vrot.lane.b32.xlu0 %v4714, 32
        %v4886 = vpop.permute.xlu0 %4885
        %4887 = vrot.lane.b32.xlu0 %v4726, 32
        %v4888 = vpop.permute.xlu0 %4887
        %4889 = vrot.lane.b32.xlu0 %v4738, 32
        %v4890 = vpop.permute.xlu0 %4889
        %4891 = vrot.lane.b32.xlu0 %v4750, 32
        %v4892 = vpop.permute.xlu0 %4891
        %4893 = vrot.lane.b32.xlu0 %v4762, 32
        %v4894 = vpop.permute.xlu0 %4893
        %4895 = vrot.lane.b32.xlu0 %v4774, 32
        %v4896 = vpop.permute.xlu0 %4895
        %4897 = vrot.lane.b32.xlu0 %v4786, 32
        %v4898 = vpop.permute.xlu0 %4897
        %4899 = vrot.lane.b32.xlu0 %v4798, 32
        %v4900 = vpop.permute.xlu0 %4899
        %4901 = vrot.lane.b32.xlu0 %v4810, 32
        %v4902 = vpop.permute.xlu0 %4901
        %4903 = vrot.lane.b32.xlu0 %v4822, 32
        %v4904 = vpop.permute.xlu0 %4903
        %4905 = vrot.lane.b32.xlu0 %v4834, 32
        %v4906 = vpop.permute.xlu0 %4905
        %4907 = vrot.lane.b32.xlu0 %v4846, 32
        %v4908 = vpop.permute.xlu0 %4907
        %4909 = vrot.lane.b32.xlu0 %v4858, 32
        %v4910 = vpop.permute.xlu0 %4909
        %4911 = vrot.lane.b32.xlu0 %v4870, 32
        %v4912 = vpop.permute.xlu0 %4911
        %4913 = vrot.lane.b32.xlu0 %v4882, 32
        %v4914 = vpop.permute.xlu0 %4913
        %v4915 = vrot.slane %v4595, 1
        %v4916 = vrot.slane %v4675, 1
        %v4917 = vsel %vm1816, %v4915, %v4916
        %v4918 = vrot.slane %v4596, 1
        %v4919 = vrot.slane %v4676, 1
        %v4920 = vsel %vm1816, %v4918, %v4919
        %v4921 = vrot.slane %v4597, 1
        %v4922 = vrot.slane %v4677, 1
        %v4923 = vsel %vm1816, %v4921, %v4922
        %v4924 = vrot.slane %v4598, 1
        %v4925 = vrot.slane %v4678, 1
        %v4926 = vsel %vm1816, %v4924, %v4925
        %v4927 = vrot.slane %v4599, 1
        %v4928 = vrot.slane %v4679, 1
        %v4929 = vsel %vm1816, %v4927, %v4928
        %v4930 = vrot.slane %v4600, 1
        %v4931 = vrot.slane %v4680, 1
        %v4932 = vsel %vm1816, %v4930, %v4931
        %v4933 = vrot.slane %v4601, 1
        %v4934 = vrot.slane %v4681, 1
        %v4935 = vsel %vm1816, %v4933, %v4934
        %v4936 = vrot.slane %v4602, 1
        %v4937 = vrot.slane %v4682, 1
        %v4938 = vsel %vm1816, %v4936, %v4937
        %v4939 = vrot.slane %v4603, 1
        %v4940 = vrot.slane %v4683, 1
        %v4941 = vsel %vm1816, %v4939, %v4940
        %v4942 = vrot.slane %v4604, 1
        %v4943 = vrot.slane %v4684, 1
        %v4944 = vsel %vm1816, %v4942, %v4943
        %v4945 = vrot.slane %v4605, 1
        %v4946 = vrot.slane %v4685, 1
        %v4947 = vsel %vm1816, %v4945, %v4946
        %v4948 = vrot.slane %v4606, 1
        %v4949 = vrot.slane %v4686, 1
        %v4950 = vsel %vm1816, %v4948, %v4949
        %v4951 = vrot.slane %v4607, 1
        %v4952 = vrot.slane %v4687, 1
        %v4953 = vsel %vm1816, %v4951, %v4952
        %v4954 = vrot.slane %v4608, 1
        %v4955 = vrot.slane %v4688, 1
        %v4956 = vsel %vm1816, %v4954, %v4955
        %v4957 = vrot.slane %v4609, 1
        %v4958 = vrot.slane %v4689, 1
        %v4959 = vsel %vm1816, %v4957, %v4958
        %v4960 = vrot.slane %v4610, 1
        %v4961 = vrot.slane %v4690, 1
        %v4962 = vsel %vm1816, %v4960, %v4961
        %4963 = vrot.lane.b32.xlu0 %v4917, 40
        %v4964 = vpop.permute.xlu0 %4963
        %4965 = vrot.lane.b32.xlu0 %v4920, 40
        %v4966 = vpop.permute.xlu0 %4965
        %4967 = vrot.lane.b32.xlu0 %v4923, 40
        %v4968 = vpop.permute.xlu0 %4967
        %4969 = vrot.lane.b32.xlu0 %v4926, 40
        %v4970 = vpop.permute.xlu0 %4969
        %4971 = vrot.lane.b32.xlu0 %v4929, 40
        %v4972 = vpop.permute.xlu0 %4971
        %4973 = vrot.lane.b32.xlu0 %v4932, 40
        %v4974 = vpop.permute.xlu0 %4973
        %4975 = vrot.lane.b32.xlu0 %v4935, 40
        %v4976 = vpop.permute.xlu0 %4975
        %4977 = vrot.lane.b32.xlu0 %v4938, 40
        %v4978 = vpop.permute.xlu0 %4977
        %4979 = vrot.lane.b32.xlu0 %v4941, 40
        %v4980 = vpop.permute.xlu0 %4979
        %4981 = vrot.lane.b32.xlu0 %v4944, 40
        %v4982 = vpop.permute.xlu0 %4981
        %4983 = vrot.lane.b32.xlu0 %v4947, 40
        %v4984 = vpop.permute.xlu0 %4983
        %4985 = vrot.lane.b32.xlu0 %v4950, 40
        %v4986 = vpop.permute.xlu0 %4985
        %4987 = vrot.lane.b32.xlu0 %v4953, 40
        %v4988 = vpop.permute.xlu0 %4987
        %4989 = vrot.lane.b32.xlu0 %v4956, 40
        %v4990 = vpop.permute.xlu0 %4989
        %4991 = vrot.lane.b32.xlu0 %v4959, 40
        %v4992 = vpop.permute.xlu0 %4991
        %4993 = vrot.lane.b32.xlu0 %v4962, 40
        %v4994 = vpop.permute.xlu0 %4993
        %v5027 = vunpack.c.l.b16 %v4051
        %v5028 = vunpack.c.l.b16 %v4052
        %v5029 = vunpack.c.l.b16 %v4054
        %v5030 = vunpack.c.l.b16 %v4055
        %v5031 = vunpack.c.l.b16 %v4057
        %v5032 = vunpack.c.l.b16 %v4058
        %v5033 = vunpack.c.l.b16 %v4060
        %v5034 = vunpack.c.l.b16 %v4061
        %v5035 = vunpack.c.l.b16 %v4063
        %v5036 = vunpack.c.l.b16 %v4064
        %v5037 = vunpack.c.l.b16 %v4066
        %v5038 = vunpack.c.l.b16 %v4067
        %v5039 = vunpack.c.l.b16 %v4069
        %v5040 = vunpack.c.l.b16 %v4070
        %v5041 = vunpack.c.l.b16 %v4072
        %v5042 = vunpack.c.l.b16 %v4073
        %v5043 = vunpack.c.l.b16 %v4075
        %v5044 = vunpack.c.l.b16 %v4076
        %v5045 = vunpack.c.l.b16 %v4078
        %v5046 = vunpack.c.l.b16 %v4079
        %v5047 = vunpack.c.l.b16 %v4081
        %v5048 = vunpack.c.l.b16 %v4082
        %v5049 = vunpack.c.l.b16 %v4084
        %v5050 = vunpack.c.l.b16 %v4085
        %v5051 = vunpack.c.l.b16 %v4087
        %v5052 = vunpack.c.l.b16 %v4088
        %v5053 = vunpack.c.l.b16 %v4090
        %v5054 = vunpack.c.l.b16 %v4091
        %v5055 = vunpack.c.l.b16 %v4093
        %v5056 = vunpack.c.l.b16 %v4094
        %v5057 = vunpack.c.l.b16 %v4096
        %v5058 = vunpack.c.l.b16 %v4097
        %v5059 = vpack.c.b16 %v5028, %v5027
        %v5060 = vpack.c.b16 %v5030, %v5029
        %v5061 = vpack.c.b16 %v5032, %v5031
        %v5062 = vpack.c.b16 %v5034, %v5033
        %v5063 = vpack.c.b16 %v5036, %v5035
        %v5064 = vpack.c.b16 %v5038, %v5037
        %v5065 = vpack.c.b16 %v5040, %v5039
        %v5066 = vpack.c.b16 %v5042, %v5041
        %v5067 = vpack.c.b16 %v5044, %v5043
        %v5068 = vpack.c.b16 %v5046, %v5045
        %v5069 = vpack.c.b16 %v5048, %v5047
        %v5070 = vpack.c.b16 %v5050, %v5049
        %v5071 = vpack.c.b16 %v5052, %v5051
        %v5072 = vpack.c.b16 %v5054, %v5053
        %v5073 = vpack.c.b16 %v5056, %v5055
        %v5074 = vpack.c.b16 %v5058, %v5057
        %5075 = vrot.lane.b32.xlu0 %v5059, 48
        %v5076 = vpop.permute.xlu0 %5075
        %5077 = vrot.lane.b32.xlu0 %v5060, 48
        %v5078 = vpop.permute.xlu0 %5077
        %5079 = vrot.lane.b32.xlu0 %v5061, 48
        %v5080 = vpop.permute.xlu0 %5079
        %5081 = vrot.lane.b32.xlu0 %v5062, 48
        %v5082 = vpop.permute.xlu0 %5081
        %5083 = vrot.lane.b32.xlu0 %v5063, 48
        %v5084 = vpop.permute.xlu0 %5083
        %5085 = vrot.lane.b32.xlu0 %v5064, 48
        %v5086 = vpop.permute.xlu0 %5085
        %5087 = vrot.lane.b32.xlu0 %v5065, 48
        %v5088 = vpop.permute.xlu0 %5087
        %5089 = vrot.lane.b32.xlu0 %v5066, 48
        %v5090 = vpop.permute.xlu0 %5089
        %5091 = vrot.lane.b32.xlu0 %v5067, 48
        %v5092 = vpop.permute.xlu0 %5091
        %5093 = vrot.lane.b32.xlu0 %v5068, 48
        %v5094 = vpop.permute.xlu0 %5093
        %5095 = vrot.lane.b32.xlu0 %v5069, 48
        %v5096 = vpop.permute.xlu0 %5095
        %5097 = vrot.lane.b32.xlu0 %v5070, 48
        %v5098 = vpop.permute.xlu0 %5097
        %5099 = vrot.lane.b32.xlu0 %v5071, 48
        %v5100 = vpop.permute.xlu0 %5099
        %5101 = vrot.lane.b32.xlu0 %v5072, 48
        %v5102 = vpop.permute.xlu0 %5101
        %5103 = vrot.lane.b32.xlu0 %v5073, 48
        %v5104 = vpop.permute.xlu0 %5103
        %5105 = vrot.lane.b32.xlu0 %v5074, 48
        %v5106 = vpop.permute.xlu0 %5105
        %v5123 = vunpack.c.l.b16 %v4053
        %v5124 = vunpack.c.l.b16 %v4056
        %v5125 = vunpack.c.l.b16 %v4059
        %v5126 = vunpack.c.l.b16 %v4062
        %v5127 = vunpack.c.l.b16 %v4065
        %v5128 = vunpack.c.l.b16 %v4068
        %v5129 = vunpack.c.l.b16 %v4071
        %v5130 = vunpack.c.l.b16 %v4074
        %v5131 = vunpack.c.l.b16 %v4077
        %v5132 = vunpack.c.l.b16 %v4080
        %v5133 = vunpack.c.l.b16 %v4083
        %v5134 = vunpack.c.l.b16 %v4086
        %v5135 = vunpack.c.l.b16 %v4089
        %v5136 = vunpack.c.l.b16 %v4092
        %v5137 = vunpack.c.l.b16 %v4095
        %v5138 = vunpack.c.l.b16 %v4098
        %v5139 = vpack.c.b16 %v5123, %v5123
        %v5140 = vpack.c.b16 %v5124, %v5124
        %v5141 = vpack.c.b16 %v5125, %v5125
        %v5142 = vpack.c.b16 %v5126, %v5126
        %v5143 = vpack.c.b16 %v5127, %v5127
        %v5144 = vpack.c.b16 %v5128, %v5128
        %v5145 = vpack.c.b16 %v5129, %v5129
        %v5146 = vpack.c.b16 %v5130, %v5130
        %v5147 = vpack.c.b16 %v5131, %v5131
        %v5148 = vpack.c.b16 %v5132, %v5132
        %v5149 = vpack.c.b16 %v5133, %v5133
        %v5150 = vpack.c.b16 %v5134, %v5134
        %v5151 = vpack.c.b16 %v5135, %v5135
        %v5152 = vpack.c.b16 %v5136, %v5136
        %v5153 = vpack.c.b16 %v5137, %v5137
        %v5154 = vpack.c.b16 %v5138, %v5138
        %v5156 = vshrl.u32 %v5059, 16
        %v5158 = vshll.u32 %v5059, 16
        %v5160 = vrot.slane %v5158, 1
        %v5161 = vor.u32 %v5156, %v5160
        %v5163 = vshll.u32 %v5139, 16
        %v5165 = vrot.slane %v5163, 1
        %v5166 = vsel %vm1591, %v5161, %v5165
        %v5168 = vshrl.u32 %v5060, 16
        %v5170 = vshll.u32 %v5060, 16
        %v5172 = vrot.slane %v5170, 1
        %v5173 = vor.u32 %v5168, %v5172
        %v5175 = vshll.u32 %v5140, 16
        %v5177 = vrot.slane %v5175, 1
        %v5178 = vsel %vm1591, %v5173, %v5177
        %v5180 = vshrl.u32 %v5061, 16
        %v5182 = vshll.u32 %v5061, 16
        %v5184 = vrot.slane %v5182, 1
        %v5185 = vor.u32 %v5180, %v5184
        %v5187 = vshll.u32 %v5141, 16
        %v5189 = vrot.slane %v5187, 1
        %v5190 = vsel %vm1591, %v5185, %v5189
        %v5192 = vshrl.u32 %v5062, 16
        %v5194 = vshll.u32 %v5062, 16
        %v5196 = vrot.slane %v5194, 1
        %v5197 = vor.u32 %v5192, %v5196
        %v5199 = vshll.u32 %v5142, 16
        %v5201 = vrot.slane %v5199, 1
        %v5202 = vsel %vm1591, %v5197, %v5201
        %v5204 = vshrl.u32 %v5063, 16
        %v5206 = vshll.u32 %v5063, 16
        %v5208 = vrot.slane %v5206, 1
        %v5209 = vor.u32 %v5204, %v5208
        %v5211 = vshll.u32 %v5143, 16
        %v5213 = vrot.slane %v5211, 1
        %v5214 = vsel %vm1591, %v5209, %v5213
        %v5216 = vshrl.u32 %v5064, 16
        %v5218 = vshll.u32 %v5064, 16
        %v5220 = vrot.slane %v5218, 1
        %v5221 = vor.u32 %v5216, %v5220
        %v5223 = vshll.u32 %v5144, 16
        %v5225 = vrot.slane %v5223, 1
        %v5226 = vsel %vm1591, %v5221, %v5225
        %v5228 = vshrl.u32 %v5065, 16
        %v5230 = vshll.u32 %v5065, 16
        %v5232 = vrot.slane %v5230, 1
        %v5233 = vor.u32 %v5228, %v5232
        %v5235 = vshll.u32 %v5145, 16
        %v5237 = vrot.slane %v5235, 1
        %v5238 = vsel %vm1591, %v5233, %v5237
        %v5240 = vshrl.u32 %v5066, 16
        %v5242 = vshll.u32 %v5066, 16
        %v5244 = vrot.slane %v5242, 1
        %v5245 = vor.u32 %v5240, %v5244
        %v5247 = vshll.u32 %v5146, 16
        %v5249 = vrot.slane %v5247, 1
        %v5250 = vsel %vm1591, %v5245, %v5249
        %v5252 = vshrl.u32 %v5067, 16
        %v5254 = vshll.u32 %v5067, 16
        %v5256 = vrot.slane %v5254, 1
        %v5257 = vor.u32 %v5252, %v5256
        %v5259 = vshll.u32 %v5147, 16
        %v5261 = vrot.slane %v5259, 1
        %v5262 = vsel %vm1591, %v5257, %v5261
        %v5264 = vshrl.u32 %v5068, 16
        %v5266 = vshll.u32 %v5068, 16
        %v5268 = vrot.slane %v5266, 1
        %v5269 = vor.u32 %v5264, %v5268
        %v5271 = vshll.u32 %v5148, 16
        %v5273 = vrot.slane %v5271, 1
        %v5274 = vsel %vm1591, %v5269, %v5273
        %v5276 = vshrl.u32 %v5069, 16
        %v5278 = vshll.u32 %v5069, 16
        %v5280 = vrot.slane %v5278, 1
        %v5281 = vor.u32 %v5276, %v5280
        %v5283 = vshll.u32 %v5149, 16
        %v5285 = vrot.slane %v5283, 1
        %v5286 = vsel %vm1591, %v5281, %v5285
        %v5288 = vshrl.u32 %v5070, 16
        %v5290 = vshll.u32 %v5070, 16
        %v5292 = vrot.slane %v5290, 1
        %v5293 = vor.u32 %v5288, %v5292
        %v5295 = vshll.u32 %v5150, 16
        %v5297 = vrot.slane %v5295, 1
        %v5298 = vsel %vm1591, %v5293, %v5297
        %v5300 = vshrl.u32 %v5071, 16
        %v5302 = vshll.u32 %v5071, 16
        %v5304 = vrot.slane %v5302, 1
        %v5305 = vor.u32 %v5300, %v5304
        %v5307 = vshll.u32 %v5151, 16
        %v5309 = vrot.slane %v5307, 1
        %v5310 = vsel %vm1591, %v5305, %v5309
        %v5312 = vshrl.u32 %v5072, 16
        %v5314 = vshll.u32 %v5072, 16
        %v5316 = vrot.slane %v5314, 1
        %v5317 = vor.u32 %v5312, %v5316
        %v5319 = vshll.u32 %v5152, 16
        %v5321 = vrot.slane %v5319, 1
        %v5322 = vsel %vm1591, %v5317, %v5321
        %v5324 = vshrl.u32 %v5073, 16
        %v5326 = vshll.u32 %v5073, 16
        %v5328 = vrot.slane %v5326, 1
        %v5329 = vor.u32 %v5324, %v5328
        %v5331 = vshll.u32 %v5153, 16
        %v5333 = vrot.slane %v5331, 1
        %v5334 = vsel %vm1591, %v5329, %v5333
        %v5336 = vshrl.u32 %v5074, 16
        %v5338 = vshll.u32 %v5074, 16
        %v5340 = vrot.slane %v5338, 1
        %v5341 = vor.u32 %v5336, %v5340
        %v5343 = vshll.u32 %v5154, 16
        %v5345 = vrot.slane %v5343, 1
        %v5346 = vsel %vm1591, %v5341, %v5345
        %5347 = vrot.lane.b32.xlu0 %v5166, 56
        %v5348 = vpop.permute.xlu0 %5347
        %5349 = vrot.lane.b32.xlu0 %v5178, 56
        %v5350 = vpop.permute.xlu0 %5349
        %5351 = vrot.lane.b32.xlu0 %v5190, 56
        %v5352 = vpop.permute.xlu0 %5351
        %5353 = vrot.lane.b32.xlu0 %v5202, 56
        %v5354 = vpop.permute.xlu0 %5353
        %5355 = vrot.lane.b32.xlu0 %v5214, 56
        %v5356 = vpop.permute.xlu0 %5355
        %5357 = vrot.lane.b32.xlu0 %v5226, 56
        %v5358 = vpop.permute.xlu0 %5357
        %5359 = vrot.lane.b32.xlu0 %v5238, 56
        %v5360 = vpop.permute.xlu0 %5359
        %5361 = vrot.lane.b32.xlu0 %v5250, 56
        %v5362 = vpop.permute.xlu0 %5361
        %5363 = vrot.lane.b32.xlu0 %v5262, 56
        %v5364 = vpop.permute.xlu0 %5363
        %5365 = vrot.lane.b32.xlu0 %v5274, 56
        %v5366 = vpop.permute.xlu0 %5365
        %5367 = vrot.lane.b32.xlu0 %v5286, 56
        %v5368 = vpop.permute.xlu0 %5367
        %5369 = vrot.lane.b32.xlu0 %v5298, 56
        %v5370 = vpop.permute.xlu0 %5369
        %5371 = vrot.lane.b32.xlu0 %v5310, 56
        %v5372 = vpop.permute.xlu0 %5371
        %5373 = vrot.lane.b32.xlu0 %v5322, 56
        %v5374 = vpop.permute.xlu0 %5373
        %5375 = vrot.lane.b32.xlu0 %v5334, 56
        %v5376 = vpop.permute.xlu0 %5375
        %5377 = vrot.lane.b32.xlu0 %v5346, 56
        %v5378 = vpop.permute.xlu0 %5377
        %v5379 = vrot.slane %v5059, 1
        %v5380 = vrot.slane %v5139, 1
        %v5381 = vsel %vm1816, %v5379, %v5380
        %v5382 = vrot.slane %v5060, 1
        %v5383 = vrot.slane %v5140, 1
        %v5384 = vsel %vm1816, %v5382, %v5383
        %v5385 = vrot.slane %v5061, 1
        %v5386 = vrot.slane %v5141, 1
        %v5387 = vsel %vm1816, %v5385, %v5386
        %v5388 = vrot.slane %v5062, 1
        %v5389 = vrot.slane %v5142, 1
        %v5390 = vsel %vm1816, %v5388, %v5389
        %v5391 = vrot.slane %v5063, 1
        %v5392 = vrot.slane %v5143, 1
        %v5393 = vsel %vm1816, %v5391, %v5392
        %v5394 = vrot.slane %v5064, 1
        %v5395 = vrot.slane %v5144, 1
        %v5396 = vsel %vm1816, %v5394, %v5395
        %v5397 = vrot.slane %v5065, 1
        %v5398 = vrot.slane %v5145, 1
        %v5399 = vsel %vm1816, %v5397, %v5398
        %v5400 = vrot.slane %v5066, 1
        %v5401 = vrot.slane %v5146, 1
        %v5402 = vsel %vm1816, %v5400, %v5401
        %v5403 = vrot.slane %v5067, 1
        %v5404 = vrot.slane %v5147, 1
        %v5405 = vsel %vm1816, %v5403, %v5404
        %v5406 = vrot.slane %v5068, 1
        %v5407 = vrot.slane %v5148, 1
        %v5408 = vsel %vm1816, %v5406, %v5407
        %v5409 = vrot.slane %v5069, 1
        %v5410 = vrot.slane %v5149, 1
        %v5411 = vsel %vm1816, %v5409, %v5410
        %v5412 = vrot.slane %v5070, 1
        %v5413 = vrot.slane %v5150, 1
        %v5414 = vsel %vm1816, %v5412, %v5413
        %v5415 = vrot.slane %v5071, 1
        %v5416 = vrot.slane %v5151, 1
        %v5417 = vsel %vm1816, %v5415, %v5416
        %v5418 = vrot.slane %v5072, 1
        %v5419 = vrot.slane %v5152, 1
        %v5420 = vsel %vm1816, %v5418, %v5419
        %v5421 = vrot.slane %v5073, 1
        %v5422 = vrot.slane %v5153, 1
        %v5423 = vsel %vm1816, %v5421, %v5422
        %v5424 = vrot.slane %v5074, 1
        %v5425 = vrot.slane %v5154, 1
        %v5426 = vsel %vm1816, %v5424, %v5425
        %5427 = vrot.lane.b32.xlu0 %v5381, 64
        %v5428 = vpop.permute.xlu0 %5427
        %5429 = vrot.lane.b32.xlu0 %v5384, 64
        %v5430 = vpop.permute.xlu0 %5429
        %5431 = vrot.lane.b32.xlu0 %v5387, 64
        %v5432 = vpop.permute.xlu0 %5431
        %5433 = vrot.lane.b32.xlu0 %v5390, 64
        %v5434 = vpop.permute.xlu0 %5433
        %5435 = vrot.lane.b32.xlu0 %v5393, 64
        %v5436 = vpop.permute.xlu0 %5435
        %5437 = vrot.lane.b32.xlu0 %v5396, 64
        %v5438 = vpop.permute.xlu0 %5437
        %5439 = vrot.lane.b32.xlu0 %v5399, 64
        %v5440 = vpop.permute.xlu0 %5439
        %5441 = vrot.lane.b32.xlu0 %v5402, 64
        %v5442 = vpop.permute.xlu0 %5441
        %5443 = vrot.lane.b32.xlu0 %v5405, 64
        %v5444 = vpop.permute.xlu0 %5443
        %5445 = vrot.lane.b32.xlu0 %v5408, 64
        %v5446 = vpop.permute.xlu0 %5445
        %5447 = vrot.lane.b32.xlu0 %v5411, 64
        %v5448 = vpop.permute.xlu0 %5447
        %5449 = vrot.lane.b32.xlu0 %v5414, 64
        %v5450 = vpop.permute.xlu0 %5449
        %5451 = vrot.lane.b32.xlu0 %v5417, 64
        %v5452 = vpop.permute.xlu0 %5451
        %5453 = vrot.lane.b32.xlu0 %v5420, 64
        %v5454 = vpop.permute.xlu0 %5453
        %5455 = vrot.lane.b32.xlu0 %v5423, 64
        %v5456 = vpop.permute.xlu0 %5455
        %5457 = vrot.lane.b32.xlu0 %v5426, 64
        %v5458 = vpop.permute.xlu0 %5457
        %v5460 = vsel %vm753, %v4163, %v4420
        %v5462 = vsel %vm753, %v4164, %v4422
        %v5464 = vsel %vm753, %v4165, %v4424
        %v5466 = vsel %vm753, %v4166, %v4426
        %v5468 = vsel %vm753, %v4167, %v4428
        %v5470 = vsel %vm753, %v4168, %v4430
        %v5472 = vsel %vm753, %v4169, %v4432
        %v5474 = vsel %vm753, %v4170, %v4434
        %v5476 = vsel %vm753, %v4171, %v4436
        %v5478 = vsel %vm753, %v4172, %v4438
        %v5480 = vsel %vm753, %v4173, %v4440
        %v5482 = vsel %vm753, %v4174, %v4442
        %v5484 = vsel %vm753, %v4175, %v4444
        %v5486 = vsel %vm753, %v4176, %v4446
        %v5488 = vsel %vm753, %v4177, %v4448
        %v5490 = vsel %vm753, %v4178, %v4450
        %v5492 = vsel %vm2793, %v5460, %v4500
        %v5494 = vsel %vm2793, %v5462, %v4502
        %v5496 = vsel %vm2793, %v5464, %v4504
        %v5498 = vsel %vm2793, %v5466, %v4506
        %v5500 = vsel %vm2793, %v5468, %v4508
        %v5502 = vsel %vm2793, %v5470, %v4510
        %v5504 = vsel %vm2793, %v5472, %v4512
        %v5506 = vsel %vm2793, %v5474, %v4514
        %v5508 = vsel %vm2793, %v5476, %v4516
        %v5510 = vsel %vm2793, %v5478, %v4518
        %v5512 = vsel %vm2793, %v5480, %v4520
        %v5514 = vsel %vm2793, %v5482, %v4522
        %v5516 = vsel %vm2793, %v5484, %v4524
        %v5518 = vsel %vm2793, %v5486, %v4526
        %v5520 = vsel %vm2793, %v5488, %v4528
        %v5522 = vsel %vm2793, %v5490, %v4530
        %vm5523 = vcmask 195584
        %v5525 = vsel %vm5523, %v5492, %v4612
        %v5527 = vsel %vm5523, %v5494, %v4614
        %v5529 = vsel %vm5523, %v5496, %v4616
        %v5531 = vsel %vm5523, %v5498, %v4618
        %v5533 = vsel %vm5523, %v5500, %v4620
        %v5535 = vsel %vm5523, %v5502, %v4622
        %v5537 = vsel %vm5523, %v5504, %v4624
        %v5539 = vsel %vm5523, %v5506, %v4626
        %v5541 = vsel %vm5523, %v5508, %v4628
        %v5543 = vsel %vm5523, %v5510, %v4630
        %v5545 = vsel %vm5523, %v5512, %v4632
        %v5547 = vsel %vm5523, %v5514, %v4634
        %v5549 = vsel %vm5523, %v5516, %v4636
        %v5551 = vsel %vm5523, %v5518, %v4638
        %v5553 = vsel %vm5523, %v5520, %v4640
        %v5555 = vsel %vm5523, %v5522, %v4642
        %v5557 = vsel %vm2826, %v5525, %v4884
        %v5559 = vsel %vm2826, %v5527, %v4886
        %v5561 = vsel %vm2826, %v5529, %v4888
        %v5563 = vsel %vm2826, %v5531, %v4890
        %v5565 = vsel %vm2826, %v5533, %v4892
        %v5567 = vsel %vm2826, %v5535, %v4894
        %v5569 = vsel %vm2826, %v5537, %v4896
        %v5571 = vsel %vm2826, %v5539, %v4898
        %v5573 = vsel %vm2826, %v5541, %v4900
        %v5575 = vsel %vm2826, %v5543, %v4902
        %v5577 = vsel %vm2826, %v5545, %v4904
        %v5579 = vsel %vm2826, %v5547, %v4906
        %v5581 = vsel %vm2826, %v5549, %v4908
        %v5583 = vsel %vm2826, %v5551, %v4910
        %v5585 = vsel %vm2826, %v5553, %v4912
        %v5587 = vsel %vm2826, %v5555, %v4914
        %vm5588 = vcmask 326656
        %v5590 = vsel %vm5588, %v5557, %v4964
        %v5592 = vsel %vm5588, %v5559, %v4966
        %v5594 = vsel %vm5588, %v5561, %v4968
        %v5596 = vsel %vm5588, %v5563, %v4970
        %v5598 = vsel %vm5588, %v5565, %v4972
        %v5600 = vsel %vm5588, %v5567, %v4974
        %v5602 = vsel %vm5588, %v5569, %v4976
        %v5604 = vsel %vm5588, %v5571, %v4978
        %v5606 = vsel %vm5588, %v5573, %v4980
        %v5608 = vsel %vm5588, %v5575, %v4982
        %v5610 = vsel %vm5588, %v5577, %v4984
        %v5612 = vsel %vm5588, %v5579, %v4986
        %v5614 = vsel %vm5588, %v5581, %v4988
        %v5616 = vsel %vm5588, %v5583, %v4990
        %v5618 = vsel %vm5588, %v5585, %v4992
        %v5620 = vsel %vm5588, %v5587, %v4994
        %v5622 = vsel %vm2859, %v5590, %v5076
        %v5624 = vsel %vm2859, %v5592, %v5078
        %v5626 = vsel %vm2859, %v5594, %v5080
        %v5628 = vsel %vm2859, %v5596, %v5082
        %v5630 = vsel %vm2859, %v5598, %v5084
        %v5632 = vsel %vm2859, %v5600, %v5086
        %v5634 = vsel %vm2859, %v5602, %v5088
        %v5636 = vsel %vm2859, %v5604, %v5090
        %v5638 = vsel %vm2859, %v5606, %v5092
        %v5640 = vsel %vm2859, %v5608, %v5094
        %v5642 = vsel %vm2859, %v5610, %v5096
        %v5644 = vsel %vm2859, %v5612, %v5098
        %v5646 = vsel %vm2859, %v5614, %v5100
        %v5648 = vsel %vm2859, %v5616, %v5102
        %v5650 = vsel %vm2859, %v5618, %v5104
        %v5652 = vsel %vm2859, %v5620, %v5106
        %vm5653 = vcmask 457728
        %v5655 = vsel %vm5653, %v5622, %v5348
        %v5657 = vsel %vm5653, %v5624, %v5350
        %v5659 = vsel %vm5653, %v5626, %v5352
        %v5661 = vsel %vm5653, %v5628, %v5354
        %v5663 = vsel %vm5653, %v5630, %v5356
        %v5665 = vsel %vm5653, %v5632, %v5358
        %v5667 = vsel %vm5653, %v5634, %v5360
        %v5669 = vsel %vm5653, %v5636, %v5362
        %v5671 = vsel %vm5653, %v5638, %v5364
        %v5673 = vsel %vm5653, %v5640, %v5366
        %v5675 = vsel %vm5653, %v5642, %v5368
        %v5677 = vsel %vm5653, %v5644, %v5370
        %v5679 = vsel %vm5653, %v5646, %v5372
        %v5681 = vsel %vm5653, %v5648, %v5374
        %v5683 = vsel %vm5653, %v5650, %v5376
        %v5685 = vsel %vm5653, %v5652, %v5378
        %v5687 = vsel %vm2892, %v5655, %v5428
        %v5689 = vsel %vm2892, %v5657, %v5430
        %v5691 = vsel %vm2892, %v5659, %v5432
        %v5693 = vsel %vm2892, %v5661, %v5434
        %v5695 = vsel %vm2892, %v5663, %v5436
        %v5697 = vsel %vm2892, %v5665, %v5438
        %v5699 = vsel %vm2892, %v5667, %v5440
        %v5701 = vsel %vm2892, %v5669, %v5442
        %v5703 = vsel %vm2892, %v5671, %v5444
        %v5705 = vsel %vm2892, %v5673, %v5446
        %v5707 = vsel %vm2892, %v5675, %v5448
        %v5709 = vsel %vm2892, %v5677, %v5450
        %v5711 = vsel %vm2892, %v5679, %v5452
        %v5713 = vsel %vm2892, %v5681, %v5454
        %v5715 = vsel %vm2892, %v5683, %v5456
        %v5717 = vsel %vm2892, %v5685, %v5458
        %v5718 = vld [vmem:[%s4] sm:$0xf]
        %v5719 = vld [vmem:[%s4 + $0x4] sm:$0xf]
        %v5720 = vld [vmem:[%s4 + $0x8] sm:$0xf]
        %v5721 = vld [vmem:[%s4 + $0xc] sm:$0xf]
        %v5722 = vld [vmem:[%s4 + $0x10] sm:$0xf]
        %v5723 = vld [vmem:[%s4 + $0x14] sm:$0xf]
        %v5724 = vld [vmem:[%s4 + $0x18] sm:$0xf]
        %v5725 = vld [vmem:[%s4 + $0x1c] sm:$0xf]
        %v5726 = vld [vmem:[%s4 + $0x20] sm:$0xf]
        %v5727 = vld [vmem:[%s5] sm:$0x1]
        %v5729 = vlaneseq
        %v5730 = vshrl.u32 %v5729, 7
        %v5731 = vsub.s32 0, %v5730
        %v5732 = vrot.slane %v5727, %v5731
        %v5743 = vunpack.c.l.b16 %v5718
        %v5744 = vunpack.c.l.b16 %v5719
        %v5745 = vunpack.c.l.b16 %v5720
        %v5746 = vunpack.c.l.b16 %v5721
        %v5747 = vunpack.c.l.b16 %v5722
        %v5748 = vunpack.c.l.b16 %v5723
        %v5749 = vunpack.c.l.b16 %v5724
        %v5750 = vunpack.c.l.b16 %v5725
        %v5751 = vunpack.c.l.b16 %v5726
        %v5752 = vpack.c.b16 %v5744, %v5743
        %v5753 = vpack.c.b16 %v5746, %v5745
        %v5754 = vpack.c.b16 %v5748, %v5747
        %v5755 = vpack.c.b16 %v5750, %v5749
        %v5756 = vpack.c.b16 %v5751, %v5751
        %vm5761 = vcmask 588800
        %v5762 = vsel %vm5761, %v5687, 0
        %v5764 = vsel %vm5761, %v5689, 0
        %v5766 = vsel %vm5761, %v5691, 0
        %v5768 = vsel %vm5761, %v5693, 0
        %v5770 = vsel %vm5761, %v5695, 0
        %v5772 = vsel %vm5761, %v5697, 0
        %v5774 = vsel %vm5761, %v5699, 0
        %v5776 = vsel %vm5761, %v5701, 0
        %v5778 = vsel %vm5761, %v5703, 0
        %v5780 = vsel %vm5761, %v5705, 0
        %v5782 = vsel %vm5761, %v5707, 0
        %v5784 = vsel %vm5761, %v5709, 0
        %v5786 = vsel %vm5761, %v5711, 0
        %v5788 = vsel %vm5761, %v5713, 0
        %v5790 = vsel %vm5761, %v5715, 0
        %v5792 = vsel %vm5761, %v5717, 0
        %vm5794 = vcmask 1043456
        %v5796 = vsel %vm5794, %v5756, 0
        %5798 = vmatprep.subr.bf16.mxu0 0
        %5799 = vmatpush1.bf16.msra.mxu0 %v5752
        %5800 = vmatprep.subr.bf16.mxu0 0
        %5801 = vmatpush1.bf16.msra.mxu0 %v5753
        %5802 = vmatprep.subr.bf16.mxu0 0
        %5803 = vmatpush1.bf16.msra.mxu0 %v5754
        %5804 = vmatprep.subr.bf16.mxu0 0
        %5805 = vmatpush1.bf16.msra.mxu0 %v5755
        %5806 = vmatprep.subr.bf16.mxu0 0
        %5807 = vmatpush1.bf16.msra.mxu0 %v5796
        %5808 = vmatprep.subr.bf16.mxu0 0
        %5809 = vmatpush1.bf16.msra.mxu0 0
        %5810 = vmatprep.subr.bf16.mxu0 0
        %5811 = vmatpush1.bf16.msra.mxu0 0
        %5812 = vmatprep.subr.bf16.mxu0 0
        %5813 = vmatpush1.bf16.msra.mxu0 0
        %5814 = vmatprep.subr.bf16.mxu0 0
        %5815 = vmatpush1.bf16.msra.mxu0 0
        %5816 = vmatprep.subr.bf16.mxu0 0
        %5817 = vmatpush1.bf16.msra.mxu0 0
        %5818 = vmatprep.subr.bf16.mxu0 0
        %5819 = vmatpush1.bf16.msra.mxu0 0
        %5820 = vmatprep.subr.bf16.mxu0 0
        %5821 = vmatpush1.bf16.msra.mxu0 0
        %5822 = vmatprep.subr.bf16.mxu0 0
        %5823 = vmatpush1.bf16.msra.mxu0 0
        %5824 = vmatprep.subr.bf16.mxu0 0
        %5825 = vmatpush1.bf16.msra.mxu0 0
        %5826 = vmatprep.subr.bf16.mxu0 0
        %5827 = vmatpush1.bf16.msra.mxu0 0
        %5828 = vmatprep.subr.bf16.mxu0 0
        %5829 = vmatpush1.bf16.msra.mxu0 0
        %5830 = vmatprep.mubr.bf16.mxu0 0
        %5831 = vmatmul.mubr.bf16.gmra.mrb[0].mxu0 %v5762
        %v5832 = vpop.f32.mrb[0].mxu0
        %v5833 = vadd.f32 %v5732, %v5832
        %v5834 = vpop.f32.mrb[0].mxu0
        %v5835 = vpop.f32.mrb[0].mxu0
        %v5836 = vadd.f32 %v5732, %v5835
        %v5837 = vpop.f32.mrb[0].mxu0
        %5838 = vmatprep.mubr.bf16.mxu0 0
        %5839 = vmatmul.mubr.bf16.gmra.mrb[0].mxu0 %v5764
        %v5840 = vpop.f32.mrb[0].mxu0
        %v5841 = vadd.f32 %v5732, %v5840
        %v5842 = vpop.f32.mrb[0].mxu0
        %v5843 = vpop.f32.mrb[0].mxu0
        %v5844 = vadd.f32 %v5732, %v5843
        %v5845 = vpop.f32.mrb[0].mxu0
        %5846 = vmatprep.mubr.bf16.mxu0 0
        %5847 = vmatmul.mubr.bf16.gmra.mrb[0].mxu0 %v5766
        %v5848 = vpop.f32.mrb[0].mxu0
        %v5849 = vadd.f32 %v5732, %v5848
        %v5850 = vpop.f32.mrb[0].mxu0
        %v5851 = vpop.f32.mrb[0].mxu0
        %v5852 = vadd.f32 %v5732, %v5851
        %v5853 = vpop.f32.mrb[0].mxu0
        %5854 = vmatprep.mubr.bf16.mxu0 0
        %5855 = vmatmul.mubr.bf16.gmra.mrb[0].mxu0 %v5768
        %v5856 = vpop.f32.mrb[0].mxu0
        %v5857 = vadd.f32 %v5732, %v5856
        %v5858 = vpop.f32.mrb[0].mxu0
        %v5859 = vpop.f32.mrb[0].mxu0
        %v5860 = vadd.f32 %v5732, %v5859
        %v5861 = vpop.f32.mrb[0].mxu0
        %5862 = vmatprep.mubr.bf16.mxu0 0
        %5863 = vmatmul.mubr.bf16.gmra.mrb[0].mxu0 %v5770
        %v5864 = vpop.f32.mrb[0].mxu0
        %v5865 = vadd.f32 %v5732, %v5864
        %v5866 = vpop.f32.mrb[0].mxu0
        %v5867 = vpop.f32.mrb[0].mxu0
        %v5868 = vadd.f32 %v5732, %v5867
        %v5869 = vpop.f32.mrb[0].mxu0
        %5870 = vmatprep.mubr.bf16.mxu0 0
        %5871 = vmatmul.mubr.bf16.gmra.mrb[0].mxu0 %v5772
        %v5872 = vpop.f32.mrb[0].mxu0
        %v5873 = vadd.f32 %v5732, %v5872
        %v5874 = vpop.f32.mrb[0].mxu0
        %v5875 = vpop.f32.mrb[0].mxu0
        %v5876 = vadd.f32 %v5732, %v5875
        %v5877 = vpop.f32.mrb[0].mxu0
        %5878 = vmatprep.mubr.bf16.mxu0 0
        %5879 = vmatmul.mubr.bf16.gmra.mrb[0].mxu0 %v5774
        %v5880 = vpop.f32.mrb[0].mxu0
        %v5881 = vadd.f32 %v5732, %v5880
        %v5882 = vpop.f32.mrb[0].mxu0
        %v5883 = vpop.f32.mrb[0].mxu0
        %v5884 = vadd.f32 %v5732, %v5883
        %v5885 = vpop.f32.mrb[0].mxu0
        %5886 = vmatprep.mubr.bf16.mxu0 0
        %5887 = vmatmul.mubr.bf16.gmra.mrb[0].mxu0 %v5776
        %v5888 = vpop.f32.mrb[0].mxu0
        %v5889 = vadd.f32 %v5732, %v5888
        %v5890 = vpop.f32.mrb[0].mxu0
        %v5891 = vpop.f32.mrb[0].mxu0
        %v5892 = vadd.f32 %v5732, %v5891
        %v5893 = vpop.f32.mrb[0].mxu0
        %5894 = vmatprep.mubr.bf16.mxu0 0
        %5895 = vmatmul.mubr.bf16.gmra.mrb[0].mxu0 %v5778
        %v5896 = vpop.f32.mrb[0].mxu0
        %v5897 = vadd.f32 %v5732, %v5896
        %v5898 = vpop.f32.mrb[0].mxu0
        %v5899 = vpop.f32.mrb[0].mxu0
        %v5900 = vadd.f32 %v5732, %v5899
        %v5901 = vpop.f32.mrb[0].mxu0
        %5902 = vmatprep.mubr.bf16.mxu0 0
        %5903 = vmatmul.mubr.bf16.gmra.mrb[0].mxu0 %v5780
        %v5904 = vpop.f32.mrb[0].mxu0
        %v5905 = vadd.f32 %v5732, %v5904
        %v5906 = vpop.f32.mrb[0].mxu0
        %v5907 = vpop.f32.mrb[0].mxu0
        %v5908 = vadd.f32 %v5732, %v5907
        %v5909 = vpop.f32.mrb[0].mxu0
        %5910 = vmatprep.mubr.bf16.mxu0 0
        %5911 = vmatmul.mubr.bf16.gmra.mrb[0].mxu0 %v5782
        %v5912 = vpop.f32.mrb[0].mxu0
        %v5913 = vadd.f32 %v5732, %v5912
        %v5914 = vpop.f32.mrb[0].mxu0
        %v5915 = vpop.f32.mrb[0].mxu0
        %v5916 = vadd.f32 %v5732, %v5915
        %v5917 = vpop.f32.mrb[0].mxu0
        %5918 = vmatprep.mubr.bf16.mxu0 0
        %5919 = vmatmul.mubr.bf16.gmra.mrb[0].mxu0 %v5784
        %v5920 = vpop.f32.mrb[0].mxu0
        %v5921 = vadd.f32 %v5732, %v5920
        %v5922 = vpop.f32.mrb[0].mxu0
        %v5923 = vpop.f32.mrb[0].mxu0
        %v5924 = vadd.f32 %v5732, %v5923
        %v5925 = vpop.f32.mrb[0].mxu0
        %5926 = vmatprep.mubr.bf16.mxu0 0
        %5927 = vmatmul.mubr.bf16.gmra.mrb[0].mxu0 %v5786
        %v5928 = vpop.f32.mrb[0].mxu0
        %v5929 = vadd.f32 %v5732, %v5928
        %v5930 = vpop.f32.mrb[0].mxu0
        %v5931 = vpop.f32.mrb[0].mxu0
        %v5932 = vadd.f32 %v5732, %v5931
        %v5933 = vpop.f32.mrb[0].mxu0
        %5934 = vmatprep.mubr.bf16.mxu0 0
        %5935 = vmatmul.mubr.bf16.gmra.mrb[0].mxu0 %v5788
        %v5936 = vpop.f32.mrb[0].mxu0
        %v5937 = vadd.f32 %v5732, %v5936
        %v5938 = vpop.f32.mrb[0].mxu0
        %v5939 = vpop.f32.mrb[0].mxu0
        %v5940 = vadd.f32 %v5732, %v5939
        %v5941 = vpop.f32.mrb[0].mxu0
        %5942 = vmatprep.mubr.bf16.mxu0 0
        %5943 = vmatmul.mubr.bf16.gmra.mrb[0].mxu0 %v5790
        %v5944 = vpop.f32.mrb[0].mxu0
        %v5945 = vadd.f32 %v5732, %v5944
        %v5946 = vpop.f32.mrb[0].mxu0
        %v5947 = vpop.f32.mrb[0].mxu0
        %v5948 = vadd.f32 %v5732, %v5947
        %v5949 = vpop.f32.mrb[0].mxu0
        %5950 = vmatprep.mubr.bf16.mxu0 0
        %5951 = vmatmul.mubr.bf16.gmra.mrb[0].mxu0 %v5792
        %v5952 = vpop.f32.mrb[0].mxu0
        %v5953 = vadd.f32 %v5732, %v5952
        %v5954 = vpop.f32.mrb[0].mxu0
        %v5955 = vpop.f32.mrb[0].mxu0
        %v5956 = vadd.f32 %v5732, %v5955
        %v5957 = vpop.f32.mrb[0].mxu0
        %5958 = vdwg.mxu0
        %vm5959 = vcmp.gt.f32.partialorder %v5833, 0.0
        %vm5960 = vcmp.gt.f32.partialorder %v5836, 0.0
        %vm5961 = vcmp.gt.f32.partialorder %v5841, 0.0
        %vm5962 = vcmp.gt.f32.partialorder %v5844, 0.0
        %vm5963 = vcmp.gt.f32.partialorder %v5849, 0.0
        %vm5964 = vcmp.gt.f32.partialorder %v5852, 0.0
        %vm5965 = vcmp.gt.f32.partialorder %v5857, 0.0
        %vm5966 = vcmp.gt.f32.partialorder %v5860, 0.0
        %vm5967 = vcmp.gt.f32.partialorder %v5865, 0.0
        %vm5968 = vcmp.gt.f32.partialorder %v5868, 0.0
        %vm5969 = vcmp.gt.f32.partialorder %v5873, 0.0
        %vm5970 = vcmp.gt.f32.partialorder %v5876, 0.0
        %vm5971 = vcmp.gt.f32.partialorder %v5881, 0.0
        %vm5972 = vcmp.gt.f32.partialorder %v5884, 0.0
        %vm5973 = vcmp.gt.f32.partialorder %v5889, 0.0
        %vm5974 = vcmp.gt.f32.partialorder %v5892, 0.0
        %vm5975 = vcmp.gt.f32.partialorder %v5897, 0.0
        %vm5976 = vcmp.gt.f32.partialorder %v5900, 0.0
        %vm5977 = vcmp.gt.f32.partialorder %v5905, 0.0
        %vm5978 = vcmp.gt.f32.partialorder %v5908, 0.0
        %vm5979 = vcmp.gt.f32.partialorder %v5913, 0.0
        %vm5980 = vcmp.gt.f32.partialorder %v5916, 0.0
        %vm5981 = vcmp.gt.f32.partialorder %v5921, 0.0
        %vm5982 = vcmp.gt.f32.partialorder %v5924, 0.0
        %vm5983 = vcmp.gt.f32.partialorder %v5929, 0.0
        %vm5984 = vcmp.gt.f32.partialorder %v5932, 0.0
        %vm5985 = vcmp.gt.f32.partialorder %v5937, 0.0
        %vm5986 = vcmp.gt.f32.partialorder %v5940, 0.0
        %vm5987 = vcmp.gt.f32.partialorder %v5945, 0.0
        %vm5988 = vcmp.gt.f32.partialorder %v5948, 0.0
        %vm5989 = vcmp.gt.f32.partialorder %v5953, 0.0
        %vm5990 = vcmp.gt.f32.partialorder %v5956, 0.0
        %v5991 = vmul.f32 %v5833, 0.2
        %v5992 = vmul.f32 %v5836, 0.2
        %v5993 = vmul.f32 %v5841, 0.2
        %v5994 = vmul.f32 %v5844, 0.2
        %v5995 = vmul.f32 %v5849, 0.2
        %v5996 = vmul.f32 %v5852, 0.2
        %v5997 = vmul.f32 %v5857, 0.2
        %v5998 = vmul.f32 %v5860, 0.2
        %v5999 = vmul.f32 %v5865, 0.2
        %v6000 = vmul.f32 %v5868, 0.2
        %v6001 = vmul.f32 %v5873, 0.2
        %v6002 = vmul.f32 %v5876, 0.2
        %v6003 = vmul.f32 %v5881, 0.2
        %v6004 = vmul.f32 %v5884, 0.2
        %v6005 = vmul.f32 %v5889, 0.2
        %v6006 = vmul.f32 %v5892, 0.2
        %v6007 = vmul.f32 %v5897, 0.2
        %v6008 = vmul.f32 %v5900, 0.2
        %v6009 = vmul.f32 %v5905, 0.2
        %v6010 = vmul.f32 %v5908, 0.2
        %v6011 = vmul.f32 %v5913, 0.2
        %v6012 = vmul.f32 %v5916, 0.2
        %v6013 = vmul.f32 %v5921, 0.2
        %v6014 = vmul.f32 %v5924, 0.2
        %v6015 = vmul.f32 %v5929, 0.2
        %v6016 = vmul.f32 %v5932, 0.2
        %v6017 = vmul.f32 %v5937, 0.2
        %v6018 = vmul.f32 %v5940, 0.2
        %v6019 = vmul.f32 %v5945, 0.2
        %v6020 = vmul.f32 %v5948, 0.2
        %v6021 = vmul.f32 %v5953, 0.2
        %v6022 = vmul.f32 %v5956, 0.2
        %v6023 = vsel %vm5959, %v5833, %v5991
        %v6024 = vsel %vm5960, %v5836, %v5992
        %v6025 = vsel %vm5961, %v5841, %v5993
        %v6026 = vsel %vm5962, %v5844, %v5994
        %v6027 = vsel %vm5963, %v5849, %v5995
        %v6028 = vsel %vm5964, %v5852, %v5996
        %v6029 = vsel %vm5965, %v5857, %v5997
        %v6030 = vsel %vm5966, %v5860, %v5998
        %v6031 = vsel %vm5967, %v5865, %v5999
        %v6032 = vsel %vm5968, %v5868, %v6000
        %v6033 = vsel %vm5969, %v5873, %v6001
        %v6034 = vsel %vm5970, %v5876, %v6002
        %v6035 = vsel %vm5971, %v5881, %v6003
        %v6036 = vsel %vm5972, %v5884, %v6004
        %v6037 = vsel %vm5973, %v5889, %v6005
        %v6038 = vsel %vm5974, %v5892, %v6006
        %v6039 = vsel %vm5975, %v5897, %v6007
        %v6040 = vsel %vm5976, %v5900, %v6008
        %v6041 = vsel %vm5977, %v5905, %v6009
        %v6042 = vsel %vm5978, %v5908, %v6010
        %v6043 = vsel %vm5979, %v5913, %v6011
        %v6044 = vsel %vm5980, %v5916, %v6012
        %v6045 = vsel %vm5981, %v5921, %v6013
        %v6046 = vsel %vm5982, %v5924, %v6014
        %v6047 = vsel %vm5983, %v5929, %v6015
        %v6048 = vsel %vm5984, %v5932, %v6016
        %v6049 = vsel %vm5985, %v5937, %v6017
        %v6050 = vsel %vm5986, %v5940, %v6018
        %v6051 = vsel %vm5987, %v5945, %v6019
        %v6052 = vsel %vm5988, %v5948, %v6020
        %v6053 = vsel %vm5989, %v5953, %v6021
        %v6054 = vsel %vm5990, %v5956, %v6022
        %6055 = vxpose.xlu0.b32.start [1/16] %v6023, 128
        %6056 = vxpose.xlu0.b32.cont [2/16] %v6024, 128
        %6057 = vxpose.xlu0.b32.cont [3/16] %v6025, 128
        %6058 = vxpose.xlu0.b32.cont [4/16] %v6026, 128
        %6059 = vxpose.xlu0.b32.cont [5/16] %v6027, 128
        %6060 = vxpose.xlu0.b32.cont [6/16] %v6028, 128
        %6061 = vxpose.xlu0.b32.cont [7/16] %v6029, 128
        %6062 = vxpose.xlu0.b32.cont [8/16] %v6030, 128
        %6063 = vxpose.xlu0.b32.cont [9/16] %v6031, 128
        %6064 = vxpose.xlu0.b32.cont [10/16] %v6032, 128
        %6065 = vxpose.xlu0.b32.cont [11/16] %v6033, 128
        %6066 = vxpose.xlu0.b32.cont [12/16] %v6034, 128
        %6067 = vxpose.xlu0.b32.cont [13/16] %v6035, 128
        %6068 = vxpose.xlu0.b32.cont [14/16] %v6036, 128
        %6069 = vxpose.xlu0.b32.cont [15/16] %v6037, 128
        %6070 = vxpose.xlu0.b32.end [16/16] %v6038, 128
        %v6071 = vpop.trf.xlu0
        %v6072 = vpop.trf.xlu0
        %v6073 = vpop.trf.xlu0
        %v6074 = vpop.trf.xlu0
        %v6075 = vpop.trf.xlu0
        %v6076 = vpop.trf.xlu0
        %v6077 = vpop.trf.xlu0
        %v6078 = vpop.trf.xlu0
        %v6079 = vpop.trf.xlu0
        %v6080 = vpop.trf.xlu0
        %v6081 = vpop.trf.xlu0
        %v6082 = vpop.trf.xlu0
        %v6083 = vpop.trf.xlu0
        %v6084 = vpop.trf.xlu0
        %v6085 = vpop.trf.xlu0
        %v6086 = vpop.trf.xlu0
        %6087 = vxpose.xlu0.b32.start [1/16] %v6039, 128
        %6088 = vxpose.xlu0.b32.cont [2/16] %v6040, 128
        %6089 = vxpose.xlu0.b32.cont [3/16] %v6041, 128
        %6090 = vxpose.xlu0.b32.cont [4/16] %v6042, 128
        %6091 = vxpose.xlu0.b32.cont [5/16] %v6043, 128
        %6092 = vxpose.xlu0.b32.cont [6/16] %v6044, 128
        %6093 = vxpose.xlu0.b32.cont [7/16] %v6045, 128
        %6094 = vxpose.xlu0.b32.cont [8/16] %v6046, 128
        %6095 = vxpose.xlu0.b32.cont [9/16] %v6047, 128
        %6096 = vxpose.xlu0.b32.cont [10/16] %v6048, 128
        %6097 = vxpose.xlu0.b32.cont [11/16] %v6049, 128
        %6098 = vxpose.xlu0.b32.cont [12/16] %v6050, 128
        %6099 = vxpose.xlu0.b32.cont [13/16] %v6051, 128
        %6100 = vxpose.xlu0.b32.cont [14/16] %v6052, 128
        %6101 = vxpose.xlu0.b32.cont [15/16] %v6053, 128
        %6102 = vxpose.xlu0.b32.end [16/16] %v6054, 128
        %v6103 = vpop.trf.xlu0
        %v6104 = vpop.trf.xlu0
        %v6105 = vpop.trf.xlu0
        %v6106 = vpop.trf.xlu0
        %v6107 = vpop.trf.xlu0
        %v6108 = vpop.trf.xlu0
        %v6109 = vpop.trf.xlu0
        %v6110 = vpop.trf.xlu0
        %v6111 = vpop.trf.xlu0
        %v6112 = vpop.trf.xlu0
        %v6113 = vpop.trf.xlu0
        %v6114 = vpop.trf.xlu0
        %v6115 = vpop.trf.xlu0
        %v6116 = vpop.trf.xlu0
        %v6117 = vpop.trf.xlu0
        %v6118 = vpop.trf.xlu0
        %6119 = vst [vmem:[%s259] sm:$0xff] %v6071
        %6120 = vst [vmem:[%s259 + $0x8] sm:$0xff] %v6103
        %s6121 = sand.u32 %s164, 1
        %s6122 = scalar_lea.sflag [#allocation5], %s6121
        %s6123 = sand.u32 %s164, 1
        %s6124 = smul.addr %s6123, 16
        %s6125 = scalar_lea.vmem [#allocation4], %s6124
        // Predicated region
        $region45: #{tpu_custom_call.1} parent=43 // pred_check
          %p6126 = pneg %p174
        $region46: #{tpu_custom_call.1} parent=43 // pred_check_branch
          %6128 = sbr.rel (%p6126) target = $region48
        $region47: #{tpu_custom_call.1} parent=43 // pred_region
          %s6130 = ssub.s32 256, 256
          %6131 = vsyncadd %s6122, %s6130
          %s6132 = smul.addr %s20, 2
          %s6133 = smul.addr %s6132, 128
          %s6134 = scalar_lea.hbm %s6, %s6133
          %s6136 = sshll.u32 %s6125, 4
          %s6137 = int_to_ptr.vmem [resolvable:$true] %s6136
          %6139 = dma.vmem_to_hbm [thread:$0]  %s6137, 256, %s6134, %s6122
        $region48: #{tpu_custom_call.1} parent=43 // pred_fallthru
          _
      $region44: #{tpu_custom_call.1} parent=5 // pred_fallthru
        _
      %p6140 = scmp.le.s32.totalorder 2, %s15
      // Predicated region
      $region49: #{tpu_custom_call.1} parent=5 // pred_check
        %p6141 = pneg %p6140
      $region50: #{tpu_custom_call.1} parent=5 // pred_check_branch
        %6143 = sbr.rel (%p6141) target = $region52
      $region51: #{tpu_custom_call.1} parent=5 // pred_region
        %s6144 = ssub.s32 %s15, 2
        // Predicated region
        $region53: #{tpu_custom_call.1} parent=51 // pred_check
          %p6145 = pneg %p180
        $region54: #{tpu_custom_call.1} parent=51 // pred_check_branch
          %6147 = sbr.rel (%p6145) target = $region56
        $region55: #{tpu_custom_call.1} parent=51 // pred_region
          %s6148 = sand.u32 %s165, 1
          %s6149 = scalar_lea.sflag [#allocation5], %s6148
          %s6150 = sand.u32 %s165, 1
          %s6151 = smul.addr %s6150, 16
          %s6152 = scalar_lea.vmem [#allocation4], %s6151
          %6153 = dma.done %s6149, 256
        $region56: #{tpu_custom_call.1} parent=51 // pred_fallthru
          _
      $region52: #{tpu_custom_call.1} parent=5 // pred_fallthru
        _
    $region6: #{tpu_custom_call.1} parent=1 // loop_footer
      %s19 = sadd.s32 1, %s15
    $region7: #{tpu_custom_call.1} parent=1 // loop_footer_branch
      %14 = sbr.rel target = $region3
    $region8: #{tpu_custom_call.1} parent=1 // loop_exit
      _
    %6154 = vsyncpa [#allocation5], 1
    %s6155 = scalar_lea.sflag [#allocation5], 1
    %6156 = vsyncpa %s6155, 1

</llo_original>
